<compile_context>
chip_gen: v5e
topology: v5e:2x2
jax: 0.10.0
libtpu: 0.0.40
codegen_flags: <defaults>
</compile_context>

<pallas_src>
import functools

import jax
import jax.numpy as jnp
from jax.experimental import pallas as pl
from jax.experimental.pallas import tpu as pltpu


EPS = 1e-5


# ----------------------------- tiling helpers -------------------------------

def _round_up(x, m):
    return (x + m - 1) // m * m


def _row_tiles(m, max_tile):
    """Pad rows to an 8-aligned size and pick a row tile that divides it."""
    if m <= max_tile:
        mp = _round_up(m, 8)
        return mp, mp
    mp = _round_up(m, max_tile)
    return mp, max_tile


def _k_tiles(k):
    """Pad K to a multiple of 128 and pick a K tile that divides it."""
    kp = _round_up(k, 128)
    if kp <= 512:
        return kp, kp
    for tk in (512, 384, 256):
        if kp % tk == 0:
            return kp, tk
    return kp, 128


# ----------------------------- Pallas kernels -------------------------------

def _make_gemm_kernel(fuse_prelu: bool, emit_stats: bool):
    """Tiled GEMM with fused epilogue (bias [+PReLU] [+BN partial stats])."""

    def kernel(*refs):
        a_ref, w_ref, b_ref = refs[0], refs[1], refs[2]
        idx = 3
        alpha_ref = None
        if fuse_prelu:
            alpha_ref = refs[idx]
            idx += 1
        o_ref = refs[idx]
        stats_ref = refs[idx + 1] if emit_stats else None
        acc_ref = refs[-1]

        k = pl.program_id(2)

        @pl.when(k == 0)
        def _():
            acc_ref[...] = jnp.zeros_like(acc_ref)

        acc_ref[...] += jnp.dot(a_ref[...], w_ref[...],
                                preferred_element_type=jnp.float32)

        @pl.when(k == pl.num_programs(2) - 1)
        def _():
            acc = acc_ref[...]
            if emit_stats:
                # Pre-bias stats: zero-padded rows contribute exactly zero, so
                # the wrapper can divide by the true row count M.
                s = jnp.sum(acc, axis=0, keepdims=True)          # (1, tn)
                ss = jnp.sum(acc * acc, axis=0, keepdims=True)   # (1, tn)
                stats_ref[0] = jnp.concatenate([s, ss], axis=0)  # (2, tn)
            y = acc + b_ref[...]
            if fuse_prelu:
                y = jnp.where(y >= 0.0, y, y * alpha_ref[...])
            o_ref[...] = y.astype(o_ref.dtype)

    return kernel


def _affine_add_kernel(y_ref, scale_ref, shift_ref, skip_ref, o_ref):
    # BatchNorm affine (precomputed per-channel scale/shift) + residual add.
    y = y_ref[...].astype(jnp.float32)
    skip = skip_ref[...].astype(jnp.float32)
    o_ref[...] = (y * scale_ref[...] + shift_ref[...] + skip).astype(o_ref.dtype)


# ----------------------------- GEMM wrapper ----------------------------------

def matmul_fused(a, w, bias, *, alpha=None, want_stats=False,
                 out_dtype=jnp.bfloat16):
    """(M,K) @ (K,N) + bias, tiled & pipelined, optional fused PReLU / BN stats.

    Returns y[:M,:N] (out_dtype) and, if want_stats, (2,N) f32 [sum, sumsq] of
    the *pre-bias* accumulator over the M valid rows.
    """
    M, K = a.shape
    _, N = w.shape

    Mp, tm = _row_tiles(M, 256)
    Kp, tk = _k_tiles(K)
    if N <= 256:
        Np, tn = N, N
    else:
        Np, tn = _round_up(N, 256), 256

    a_p = jnp.pad(a.astype(jnp.bfloat16), ((0, Mp - M), (0, Kp - K)))
    w_p = jnp.pad(w.astype(jnp.bfloat16), ((0, Kp - K), (0, Np - N)))
    b_p = jnp.pad(bias.astype(jnp.float32).reshape(1, N), ((0, 0), (0, Np - N)))

    gm, gn, gk = Mp // tm, Np // tn, Kp // tk
    grid = (gm, gn, gk)

    in_specs = [pl.BlockSpec((tm, tk), lambda i, j, k: (i, k)),
                pl.BlockSpec((tk, tn), lambda i, j, k: (k, j)),
                pl.BlockSpec((1, tn), lambda i, j, k: (0, j))]
    inputs = [a_p, w_p, b_p]

    fuse_prelu = alpha is not None
    if fuse_prelu:
        al_p = jnp.pad(alpha.astype(jnp.float32).reshape(1, N),
                       ((0, 0), (0, Np - N)))
        in_specs.append(pl.BlockSpec((1, tn), lambda i, j, k: (0, j)))
        inputs.append(al_p)

    out_shape = [jax.ShapeDtypeStruct((Mp, Np), out_dtype)]
    out_specs = [pl.BlockSpec((tm, tn), lambda i, j, k: (i, j))]
    if want_stats:
        out_shape.append(jax.ShapeDtypeStruct((gm, 2, Np), jnp.float32))
        out_specs.append(pl.BlockSpec((1, 2, tn), lambda i, j, k: (i, 0, j)))

    elt_out = jnp.dtype(out_dtype).itemsize
    vmem_need = (2 * (tm * tk * 2 + tk * tn * 2 + 2 * tn * 4
                      + tm * tn * elt_out + 2 * tn * 4)
                 + tm * tn * 4)
    vmem_limit = int(min(max(4 * vmem_need, 16 * 1024 * 1024), 48 * 1024 * 1024))

    flops = 2 * Mp * Np * Kp
    bytes_accessed = int(Mp * Kp * 2 + Kp * Np * 2 + Mp * Np * elt_out)

    outs = pl.pallas_call(
        _make_gemm_kernel(fuse_prelu, want_stats),
        grid=grid,
        in_specs=in_specs,
        out_specs=out_specs if want_stats else out_specs[0],
        out_shape=out_shape if want_stats else out_shape[0],
        scratch_shapes=[pltpu.VMEM((tm, tn), jnp.float32)],
        compiler_params=pltpu.CompilerParams(
            dimension_semantics=("parallel", "parallel", "arbitrary"),
            vmem_limit_bytes=vmem_limit),
        cost_estimate=pl.CostEstimate(flops=flops, transcendentals=0,
                                      bytes_accessed=bytes_accessed),
    )(*inputs)

    if want_stats:
        y_p, stats_p = outs
        stats = jnp.sum(stats_p, axis=0)[:, :N]     # (2, N): [sum, sumsq]
        return y_p[:M, :N], stats
    return outs[:M, :N]


# ----------------------------- BN + residual ---------------------------------

def bn_affine_add(y, scale, shift, skip, out_dtype=jnp.bfloat16):
    """out = y*scale + shift + skip, tiled over rows, lane-dense when C<128."""
    M, C = y.shape
    r = 1
    if C < 128 and 128 % C == 0 and M % (128 // C) == 0:
        r = 128 // C                      # view (M,C) as (M/r, C*r): full-lane stores
    Mv, Cv = M // r, C * r

    yv = y.reshape(Mv, Cv)
    sv = skip.reshape(Mv, Cv)
    scale_v = jnp.tile(scale.astype(jnp.float32).reshape(1, C), (1, r))
    shift_v = jnp.tile(shift.astype(jnp.float32).reshape(1, C), (1, r))

    Mp, tm = _row_tiles(Mv, 512)
    yv = jnp.pad(yv, ((0, Mp - Mv), (0, 0)))
    sv = jnp.pad(sv, ((0, Mp - Mv), (0, 0)))

    elt = jnp.dtype(out_dtype).itemsize
    vmem_need = 2 * (tm * Cv * 2 * 2 + 2 * Cv * 4 + tm * Cv * elt)
    vmem_limit = int(min(max(4 * vmem_need, 16 * 1024 * 1024), 48 * 1024 * 1024))

    out = pl.pallas_call(
        _affine_add_kernel,
        grid=(Mp // tm,),
        in_specs=[pl.BlockSpec((tm, Cv), lambda i: (i, 0)),
                  pl.BlockSpec((1, Cv), lambda i: (0, 0)),
                  pl.BlockSpec((1, Cv), lambda i: (0, 0)),
                  pl.BlockSpec((tm, Cv), lambda i: (i, 0))],
        out_specs=pl.BlockSpec((tm, Cv), lambda i: (i, 0)),
        out_shape=jax.ShapeDtypeStruct((Mp, Cv), out_dtype),
        compiler_params=pltpu.CompilerParams(
            dimension_semantics=("parallel",),
            vmem_limit_bytes=vmem_limit),
        cost_estimate=pl.CostEstimate(
            flops=2 * Mp * Cv, transcendentals=0,
            bytes_accessed=int(Mp * Cv * (2 * 2 + elt))),
    )(yv, scale_v, shift_v, sv)
    return out[:Mv].reshape(M, C)


# ----------------------------- conv glue --------------------------------------

def im2col(x, kh, kw, pad):
    # TODO(synk): stream kh*kw taps as a reduction grid axis with manual DMAs of
    # shifted windows instead of materializing patches in HBM (matters for large
    # images; at these shapes the blowup is tiny).
    N, H, W, C = x.shape
    xp = jnp.pad(x, ((0, 0), (pad, pad), (pad, pad), (0, 0)))
    Ho = H + 2 * pad - kh + 1
    Wo = W + 2 * pad - kw + 1
    cols = []
    for i in range(kh):
        for j in range(kw):
            cols.append(xp[:, i:i + Ho, j:j + Wo, :])
    patches = jnp.concatenate(cols, axis=-1)            # (N, Ho, Wo, kh*kw*C)
    return patches.reshape(N * Ho * Wo, kh * kw * C), (N, Ho, Wo)


def conv2d_fused(x, w, b, pad, *, alpha=None):
    """Conv (im2col GEMM) with fused bias (+PReLU). Returns NHWC bf16."""
    kh, kw, cin, cout = w.shape
    patches, (n, ho, wo) = im2col(x, kh, kw, pad)
    y = matmul_fused(patches, w.reshape(kh * kw * cin, cout), b, alpha=alpha)
    return y.reshape(n, ho, wo, cout)


def conv_bn_add(x, w, b, gamma, beta, skip):
    """BN(Conv(x)) + skip with batch stats fused into the GEMM epilogue."""
    kh, kw, cin, cout = w.shape
    patches, (n, ho, wo) = im2col(x, kh, kw, pad=1)
    M = n * ho * wo
    y, stats = matmul_fused(patches, w.reshape(kh * kw * cin, cout), b,
                            want_stats=True)
    s, ss = stats[0], stats[1]                       # pre-bias sum / sumsq
    mean_acc = s / M
    var = jnp.maximum(ss / M - mean_acc * mean_acc, 0.0)   # bias shift cancels
    mean_y = mean_acc + b.reshape(-1)
    inv = jax.lax.rsqrt(var + EPS)
    scale = gamma.reshape(-1) * inv
    shift = beta.reshape(-1) - mean_y * scale
    out = bn_affine_add(y, scale, shift, skip.reshape(M, cout))
    return out.reshape(n, ho, wo, cout)


def upsample_to(x, out_h, out_w):
    # nn.Upsample(size=2), mode='nearest'.
    N, H, W, C = x.shape
    hi = jnp.arange(out_h) * H // out_h
    wi = jnp.arange(out_w) * W // out_w
    return x[:, hi][:, :, wi]


# ----------------------------- parameters -------------------------------------

def _conv_params(key, kh, kw, cin, cout):
    k1, k2 = jax.random.split(key)
    w = jax.random.normal(k1, (kh, kw, cin, cout), jnp.float32) * 0.05
    b = jax.random.normal(k2, (1, cout), jnp.float32) * 0.05
    return w, b


def make_params(key, cin, res_layers, up_layers):
    keys = jax.random.split(key, 2 + res_layers + up_layers)
    p = {}
    p["head"] = _conv_params(keys[0], 9, 9, cin, 64)
    p["res"] = []
    for i in range(res_layers):
        w, b = _conv_params(keys[1 + i], 3, 3, 64, 64)
        gamma = jnp.ones((1, 64), jnp.float32)     # BatchNorm2d default init
        beta = jnp.zeros((1, 64), jnp.float32)
        p["res"].append((w, b, gamma, beta))
    wm, bm = _conv_params(keys[1 + res_layers], 3, 3, 64, 64)
    p["mid"] = (wm, bm, jnp.ones((1, 64), jnp.float32),
                jnp.zeros((1, 64), jnp.float32))
    p["up"] = []
    c = 64
    for i in range(up_layers):
        w, b = _conv_params(keys[2 + res_layers + i], 3, 3, c, 256)
        a = jnp.full((1, 256), 0.25, jnp.float32)  # PReLU default a=0.25
        p["up"].append((w, b, a))
        c = 256
    return p


# ----------------------------- forward -----------------------------------------

def generator_forward(x_nchw, params, res_layers, up_layers):
    x = jnp.transpose(x_nchw, (0, 2, 3, 1)).astype(jnp.bfloat16)   # NCHW -> NHWC
    # Conv2d(Cin, 64, kernel=9, stride=1, padding=1): spatial shrinks by 6.
    wh, bh = params["head"]
    x = conv2d_fused(x, wh, bh, pad=1)
    temp = x
    for i in range(res_layers):
        # Reference residual_block's first Conv+BN is dead code; effective path
        # is x + BN(Conv(x)).
        w, b, gamma, beta = params["res"][i]
        x = conv_bn_add(x, w, b, gamma, beta, skip=x)
    wm, bm, gm, bem = params["mid"]
    x = conv_bn_add(x, wm, bm, gm, bem, skip=temp)
    for i in range(up_layers):
        w, b, a = params["up"][i]
        # PReLU commutes with nearest upsampling, so it is fused into the GEMM
        # epilogue; the gather-only upsample follows.
        x = conv2d_fused(x, w, b, pad=1, alpha=a)    # -> 256 channels, PReLU'd
        x = upsample_to(x, 2, 2)                     # nn.Upsample(size=2), nearest
    return jnp.transpose(x, (0, 3, 1, 2)).astype(jnp.float32)      # NHWC -> NCHW


# ----------------------------- main ---------------------------------------------

if __name__ == "__main__":
    res_layers, up_layers = 2, 2
    key = jax.random.PRNGKey(0)
    kx, kp = jax.random.split(key)
    x = jax.random.normal(kx, (2, 4, 16, 16), jnp.float32)   # NCHW like PyTorch
    params = make_params(kp, cin=4, res_layers=res_layers, up_layers=up_layers)

    fwd = jax.jit(functools.partial(generator_forward,
                                    res_layers=res_layers, up_layers=up_layers))
    out = jax.block_until_ready(fwd(x, params))
    assert out.shape == (2, 256, 2, 2), out.shape
    assert jnp.all(jnp.isfinite(out))
    print("KERNEL_OK")
</pallas_src>

<mosaic_0001>
module attributes {stable_mosaic.version = 11 : i64} {
  func.func @kernel(%arg0: i32, %arg1: i32, %arg2: i32, %arg3: memref<200x384xbf16, #tpu.memory_space<vmem>>, %arg4: memref<384x64xbf16, #tpu.memory_space<vmem>>, %arg5: memref<1x64xf32, #tpu.memory_space<vmem>>, %arg6: memref<200x64xbf16, #tpu.memory_space<vmem>>, %arg7: memref<200x64xf32, #tpu.memory_space<vmem>>) attributes {dimension_semantics = [#tpu.dimension_semantics<parallel>, #tpu.dimension_semantics<parallel>, #tpu.dimension_semantics<arbitrary>], iteration_bounds = array<i64: 1, 1, 1>, scalar_prefetch = 0 : i64, scratch_operands = 1 : i64, tpu.core_type = #tpu.core_type<tc>, window_params = [{transform_indices = @transform_0, window_bounds = array<i64: 200, 384>}, {transform_indices = @transform_1, window_bounds = array<i64: 384, 64>}, {transform_indices = @transform_2, window_bounds = array<i64: 1, 64>}, {transform_indices = @transform_3, window_bounds = array<i64: 200, 64>}]} {
    %c0_i32 = arith.constant 0 : i32
    %0 = arith.cmpi eq, %arg2, %c0_i32 : i32
    %1 = arith.extui %0 : i1 to i32
    %c0_i32_0 = arith.constant 0 : i32
    %2 = arith.cmpi ne, %1, %c0_i32_0 : i32
    scf.if %2 {
      %cst_10 = arith.constant 0.000000e+00 : f32
      %12 = vector.broadcast %cst_10 : f32 to vector<200x64xf32>
      %c0_11 = arith.constant 0 : index
      %c0_12 = arith.constant 0 : index
      %13 = vector.load %arg7[%c0_11, %c0_12] : memref<200x64xf32, #tpu.memory_space<vmem>>, vector<200x64xf32>
      tpu.vector_store %arg7[%c0_11, %c0_12], %12 {strides = array<i32>} : memref<200x64xf32, #tpu.memory_space<vmem>>, vector<200x64xf32>,
    } else {
    }
    %c0 = arith.constant 0 : index
    %c0_1 = arith.constant 0 : index
    %3 = vector.load %arg7[%c0, %c0_1] : memref<200x64xf32, #tpu.memory_space<vmem>>, vector<200x64xf32>
    %c0_2 = arith.constant 0 : index
    %c0_3 = arith.constant 0 : index
    %4 = vector.load %arg3[%c0_2, %c0_3] : memref<200x384xbf16, #tpu.memory_space<vmem>>, vector<200x384xbf16>
    %c0_4 = arith.constant 0 : index
    %c0_5 = arith.constant 0 : index
    %5 = vector.load %arg4[%c0_4, %c0_5] : memref<384x64xbf16, #tpu.memory_space<vmem>>, vector<384x64xbf16>
    %cst = arith.constant dense<0.000000e+00> : vector<200x64xf32>
    %6 = tpu.matmul %4, %5, %cst {dimension_numbers = #tpu.dot_dimension_numbers<[1], [0], [0], [1], [0, 0, 1, 1], [], []>} : vector<200x384xbf16>, vector<384x64xbf16>, vector<200x64xf32> -> vector<200x64xf32>
    %7 = arith.addf %3, %6 : vector<200x64xf32>
    %c0_6 = arith.constant 0 : index
    %c0_7 = arith.constant 0 : index
    %8 = vector.load %arg7[%c0_6, %c0_7] : memref<200x64xf32, #tpu.memory_space<vmem>>, vector<200x64xf32>
    tpu.vector_store %arg7[%c0_6, %c0_7], %7 {strides = array<i32>} : memref<200x64xf32, #tpu.memory_space<vmem>>, vector<200x64xf32>,
    %c0_i32_8 = arith.constant 0 : i32
    %9 = arith.cmpi eq, %arg2, %c0_i32_8 : i32
    %10 = arith.extui %9 : i1 to i32
    %c0_i32_9 = arith.constant 0 : i32
    %11 = arith.cmpi ne, %10, %c0_i32_9 : i32
    scf.if %11 {
      %c0_10 = arith.constant 0 : index
      %c0_11 = arith.constant 0 : index
      %12 = vector.load %arg7[%c0_10, %c0_11] : memref<200x64xf32, #tpu.memory_space<vmem>>, vector<200x64xf32>
      %c0_12 = arith.constant 0 : index
      %c0_13 = arith.constant 0 : index
      %13 = vector.load %arg5[%c0_12, %c0_13] : memref<1x64xf32, #tpu.memory_space<vmem>>, vector<1x64xf32>
      %14 = vector.broadcast %13 : vector<1x64xf32> to vector<200x64xf32>
      %15 = arith.addf %12, %14 : vector<200x64xf32>
      %16 = arith.truncf %15 : vector<200x64xf32> to vector<200x64xbf16>
      %c0_14 = arith.constant 0 : index
      %c0_15 = arith.constant 0 : index
      %17 = vector.load %arg6[%c0_14, %c0_15] : memref<200x64xbf16, #tpu.memory_space<vmem>>, vector<200x64xbf16>
      tpu.vector_store %arg6[%c0_14, %c0_15], %16 {strides = array<i32>} : memref<200x64xbf16, #tpu.memory_space<vmem>>, vector<200x64xbf16>,
    } else {
    }
    return
  }
  func.func @transform_0(%arg0: i32, %arg1: i32, %arg2: i32) -> (i32, i32) {
    %c0_i32 = arith.constant 0 : i32
    return %arg0, %arg2 : i32, i32
  }
  func.func @transform_1(%arg0: i32, %arg1: i32, %arg2: i32) -> (i32, i32) {
    %c0_i32 = arith.constant 0 : i32
    return %arg2, %arg1 : i32, i32
  }
  func.func @transform_2(%arg0: i32, %arg1: i32, %arg2: i32) -> (i32, i32) {
    %c0_i32 = arith.constant 0 : i32
    %c0_i32_0 = arith.constant 0 : i32
    return %c0_i32, %arg1 : i32, i32
  }
  func.func @transform_3(%arg0: i32, %arg1: i32, %arg2: i32) -> (i32, i32) {
    %c0_i32 = arith.constant 0 : i32
    return %arg0, %arg1 : i32, i32
  }
}

module attributes {stable_mosaic.version = 11 : i64} {
  func.func @kernel(%arg0: i32, %arg1: i32, %arg2: i32, %arg3: memref<200x128xbf16, #tpu.memory_space<vmem>>, %arg4: memref<128x64xbf16, #tpu.memory_space<vmem>>, %arg5: memref<1x64xf32, #tpu.memory_space<vmem>>, %arg6: memref<200x64xbf16, #tpu.memory_space<vmem>>, %arg7: memref<1x2x64xf32, #tpu.memory_space<vmem>>, %arg8: memref<200x64xf32, #tpu.memory_space<vmem>>) attributes {dimension_semantics = [#tpu.dimension_semantics<parallel>, #tpu.dimension_semantics<parallel>, #tpu.dimension_semantics<arbitrary>], iteration_bounds = array<i64: 1, 1, 5>, scalar_prefetch = 0 : i64, scratch_operands = 1 : i64, tpu.core_type = #tpu.core_type<tc>, window_params = [{transform_indices = @transform_0, window_bounds = array<i64: 200, 128>}, {transform_indices = @transform_1, window_bounds = array<i64: 128, 64>}, {transform_indices = @transform_2, window_bounds = array<i64: 1, 64>}, {transform_indices = @transform_3, window_bounds = array<i64: 200, 64>}, {transform_indices = @transform_4, window_bounds = array<i64: 1, 2, 64>}]} {
    %c0_i32 = arith.constant 0 : i32
    %0 = arith.cmpi eq, %arg2, %c0_i32 : i32
    %1 = arith.extui %0 : i1 to i32
    %c0_i32_0 = arith.constant 0 : i32
    %2 = arith.cmpi ne, %1, %c0_i32_0 : i32
    scf.if %2 {
      %cst_9 = arith.constant 0.000000e+00 : f32
      %12 = vector.broadcast %cst_9 : f32 to vector<200x64xf32>
      %c0_10 = arith.constant 0 : index
      %c0_11 = arith.constant 0 : index
      %13 = vector.load %arg8[%c0_10, %c0_11] : memref<200x64xf32, #tpu.memory_space<vmem>>, vector<200x64xf32>
      tpu.vector_store %arg8[%c0_10, %c0_11], %12 {strides = array<i32>} : memref<200x64xf32, #tpu.memory_space<vmem>>, vector<200x64xf32>,
    } else {
    }
    %c0 = arith.constant 0 : index
    %c0_1 = arith.constant 0 : index
    %3 = vector.load %arg8[%c0, %c0_1] : memref<200x64xf32, #tpu.memory_space<vmem>>, vector<200x64xf32>
    %c0_2 = arith.constant 0 : index
    %c0_3 = arith.constant 0 : index
    %4 = vector.load %arg3[%c0_2, %c0_3] : memref<200x128xbf16, #tpu.memory_space<vmem>>, vector<200x128xbf16>
    %c0_4 = arith.constant 0 : index
    %c0_5 = arith.constant 0 : index
    %5 = vector.load %arg4[%c0_4, %c0_5] : memref<128x64xbf16, #tpu.memory_space<vmem>>, vector<128x64xbf16>
    %cst = arith.constant dense<0.000000e+00> : vector<200x64xf32>
    %6 = tpu.matmul %4, %5, %cst {dimension_numbers = #tpu.dot_dimension_numbers<[1], [0], [0], [1], [0, 0, 1, 1], [], []>} : vector<200x128xbf16>, vector<128x64xbf16>, vector<200x64xf32> -> vector<200x64xf32>
    %7 = arith.addf %3, %6 : vector<200x64xf32>
    %c0_6 = arith.constant 0 : index
    %c0_7 = arith.constant 0 : index
    %8 = vector.load %arg8[%c0_6, %c0_7] : memref<200x64xf32, #tpu.memory_space<vmem>>, vector<200x64xf32>
    tpu.vector_store %arg8[%c0_6, %c0_7], %7 {strides = array<i32>} : memref<200x64xf32, #tpu.memory_space<vmem>>, vector<200x64xf32>,
    %c4_i32 = arith.constant 4 : i32
    %9 = arith.cmpi eq, %arg2, %c4_i32 : i32
    %10 = arith.extui %9 : i1 to i32
    %c0_i32_8 = arith.constant 0 : i32
    %11 = arith.cmpi ne, %10, %c0_i32_8 : i32
    scf.if %11 {
      %c0_9 = arith.constant 0 : index
      %c0_10 = arith.constant 0 : index
      %12 = vector.load %arg8[%c0_9, %c0_10] : memref<200x64xf32, #tpu.memory_space<vmem>>, vector<200x64xf32>
      %cst_11 = arith.constant dense<0.000000e+00> : vector<64xf32>
      %13 = vector.multi_reduction <add>, %12, %cst_11 [0] : vector<200x64xf32> to vector<64xf32>
      %14 = vector.shape_cast %13 : vector<64xf32> to vector<1x64xf32>
      %15 = arith.mulf %12, %12 : vector<200x64xf32>
      %cst_12 = arith.constant dense<0.000000e+00> : vector<64xf32>
      %16 = vector.multi_reduction <add>, %15, %cst_12 [0] : vector<200x64xf32> to vector<64xf32>
      %17 = vector.shape_cast %16 : vector<64xf32> to vector<1x64xf32>
      %18 = tpu.concatenate %14, %17 in 0 : vector<1x64xf32>, vector<1x64xf32> -> vector<2x64xf32>
      %c0_13 = arith.constant 0 : index
      %c0_14 = arith.constant 0 : index
      %c0_15 = arith.constant 0 : index
      %19 = vector.load %arg7[%c0_13, %c0_14, %c0_15] : memref<1x2x64xf32, #tpu.memory_space<vmem>>, vector<1x2x64xf32>
      %20 = vector.shape_cast %19 : vector<1x2x64xf32> to vector<2x64xf32>
      %21 = vector.shape_cast %18 : vector<2x64xf32> to vector<1x2x64xf32>
      tpu.vector_store %arg7[%c0_13, %c0_14, %c0_15], %21 {strides = array<i32>} : memref<1x2x64xf32, #tpu.memory_space<vmem>>, vector<1x2x64xf32>,
      %c0_16 = arith.constant 0 : index
      %c0_17 = arith.constant 0 : index
      %22 = vector.load %arg5[%c0_16, %c0_17] : memref<1x64xf32, #tpu.memory_space<vmem>>, vector<1x64xf32>
      %23 = vector.broadcast %22 : vector<1x64xf32> to vector<200x64xf32>
      %24 = arith.addf %12, %23 : vector<200x64xf32>
      %25 = arith.truncf %24 : vector<200x64xf32> to vector<200x64xbf16>
      %c0_18 = arith.constant 0 : index
      %c0_19 = arith.constant 0 : index
      %26 = vector.load %arg6[%c0_18, %c0_19] : memref<200x64xbf16, #tpu.memory_space<vmem>>, vector<200x64xbf16>
      tpu.vector_store %arg6[%c0_18, %c0_19], %25 {strides = array<i32>} : memref<200x64xbf16, #tpu.memory_space<vmem>>, vector<200x64xbf16>,
    } else {
    }
    return
  }
  func.func @transform_0(%arg0: i32, %arg1: i32, %arg2: i32) -> (i32, i32) {
    %c0_i32 = arith.constant 0 : i32
    return %arg0, %arg2 : i32, i32
  }
  func.func @transform_1(%arg0: i32, %arg1: i32, %arg2: i32) -> (i32, i32) {
    %c0_i32 = arith.constant 0 : i32
    return %arg2, %arg1 : i32, i32
  }
  func.func @transform_2(%arg0: i32, %arg1: i32, %arg2: i32) -> (i32, i32) {
    %c0_i32 = arith.constant 0 : i32
    %c0_i32_0 = arith.constant 0 : i32
    return %c0_i32, %arg1 : i32, i32
  }
  func.func @transform_3(%arg0: i32, %arg1: i32, %arg2: i32) -> (i32, i32) {
    %c0_i32 = arith.constant 0 : i32
    return %arg0, %arg1 : i32, i32
  }
  func.func @transform_4(%arg0: i32, %arg1: i32, %arg2: i32) -> (i32, i32, i32) {
    %c0_i32 = arith.constant 0 : i32
    %c0_i32_0 = arith.constant 0 : i32
    return %arg0, %c0_i32, %arg1 : i32, i32, i32
  }
}

module attributes {stable_mosaic.version = 11 : i64} {
  func.func @_affine_add_kernel(%arg0: i32, %arg1: memref<104x128xbf16, #tpu.memory_space<vmem>>, %arg2: memref<1x128xf32, #tpu.memory_space<vmem>>, %arg3: memref<1x128xf32, #tpu.memory_space<vmem>>, %arg4: memref<104x128xbf16, #tpu.memory_space<vmem>>, %arg5: memref<104x128xbf16, #tpu.memory_space<vmem>>) attributes {dimension_semantics = [#tpu.dimension_semantics<parallel>], iteration_bounds = array<i64: 1>, scalar_prefetch = 0 : i64, scratch_operands = 0 : i64, tpu.core_type = #tpu.core_type<tc>, window_params = [{transform_indices = @transform_0, window_bounds = array<i64: 104, 128>}, {pipeline_mode = #tpu.pipeline_mode<synchronous>, transform_indices = @transform_1, window_bounds = array<i64: 1, 128>}, {pipeline_mode = #tpu.pipeline_mode<synchronous>, transform_indices = @transform_2, window_bounds = array<i64: 1, 128>}, {transform_indices = @transform_3, window_bounds = array<i64: 104, 128>}, {transform_indices = @transform_4, window_bounds = array<i64: 104, 128>}]} {
    %c0 = arith.constant 0 : index
    %c0_0 = arith.constant 0 : index
    %0 = vector.load %arg1[%c0, %c0_0] : memref<104x128xbf16, #tpu.memory_space<vmem>>, vector<104x128xbf16>
    %1 = arith.extf %0 : vector<104x128xbf16> to vector<104x128xf32>
    %c0_1 = arith.constant 0 : index
    %c0_2 = arith.constant 0 : index
    %2 = vector.load %arg4[%c0_1, %c0_2] : memref<104x128xbf16, #tpu.memory_space<vmem>>, vector<104x128xbf16>
    %3 = arith.extf %2 : vector<104x128xbf16> to vector<104x128xf32>
    %c0_3 = arith.constant 0 : index
    %c0_4 = arith.constant 0 : index
    %4 = vector.load %arg2[%c0_3, %c0_4] : memref<1x128xf32, #tpu.memory_space<vmem>>, vector<1x128xf32>
    %5 = vector.broadcast %4 : vector<1x128xf32> to vector<104x128xf32>
    %6 = arith.mulf %1, %5 : vector<104x128xf32>
    %c0_5 = arith.constant 0 : index
    %c0_6 = arith.constant 0 : index
    %7 = vector.load %arg3[%c0_5, %c0_6] : memref<1x128xf32, #tpu.memory_space<vmem>>, vector<1x128xf32>
    %8 = vector.broadcast %7 : vector<1x128xf32> to vector<104x128xf32>
    %9 = arith.addf %6, %8 : vector<104x128xf32>
    %10 = arith.addf %9, %3 : vector<104x128xf32>
    %11 = arith.truncf %10 : vector<104x128xf32> to vector<104x128xbf16>
    %c0_7 = arith.constant 0 : index
    %c0_8 = arith.constant 0 : index
    %12 = vector.load %arg5[%c0_7, %c0_8] : memref<104x128xbf16, #tpu.memory_space<vmem>>, vector<104x128xbf16>
    tpu.vector_store %arg5[%c0_7, %c0_8], %11 {strides = array<i32>} : memref<104x128xbf16, #tpu.memory_space<vmem>>, vector<104x128xbf16>,
    return
  }
  func.func @transform_0(%arg0: i32) -> (i32, i32) {
    %c0_i32 = arith.constant 0 : i32
    %c0_i32_0 = arith.constant 0 : i32
    return %arg0, %c0_i32 : i32, i32
  }
  func.func @transform_1(%arg0: i32) -> (i32, i32) {
    %c0_i32 = arith.constant 0 : i32
    %c0_i32_0 = arith.constant 0 : i32
    %c0_i32_1 = arith.constant 0 : i32
    return %c0_i32, %c0_i32_0 : i32, i32
  }
  func.func @transform_2(%arg0: i32) -> (i32, i32) {
    %c0_i32 = arith.constant 0 : i32
    %c0_i32_0 = arith.constant 0 : i32
    %c0_i32_1 = arith.constant 0 : i32
    return %c0_i32, %c0_i32_0 : i32, i32
  }
  func.func @transform_3(%arg0: i32) -> (i32, i32) {
    %c0_i32 = arith.constant 0 : i32
    %c0_i32_0 = arith.constant 0 : i32
    return %arg0, %c0_i32 : i32, i32
  }
  func.func @transform_4(%arg0: i32) -> (i32, i32) {
    %c0_i32 = arith.constant 0 : i32
    %c0_i32_0 = arith.constant 0 : i32
    return %arg0, %c0_i32 : i32, i32
  }
}

module attributes {stable_mosaic.version = 11 : i64} {
  func.func @kernel(%arg0: i32, %arg1: i32, %arg2: i32, %arg3: memref<200x128xbf16, #tpu.memory_space<vmem>>, %arg4: memref<128x256xbf16, #tpu.memory_space<vmem>>, %arg5: memref<1x256xf32, #tpu.memory_space<vmem>>, %arg6: memref<1x256xf32, #tpu.memory_space<vmem>>, %arg7: memref<200x256xbf16, #tpu.memory_space<vmem>>, %arg8: memref<200x256xf32, #tpu.memory_space<vmem>>) attributes {dimension_semantics = [#tpu.dimension_semantics<parallel>, #tpu.dimension_semantics<parallel>, #tpu.dimension_semantics<arbitrary>], iteration_bounds = array<i64: 1, 1, 5>, scalar_prefetch = 0 : i64, scratch_operands = 1 : i64, tpu.core_type = #tpu.core_type<tc>, window_params = [{transform_indices = @transform_0, window_bounds = array<i64: 200, 128>}, {transform_indices = @transform_1, window_bounds = array<i64: 128, 256>}, {transform_indices = @transform_2, window_bounds = array<i64: 1, 256>}, {transform_indices = @transform_3, window_bounds = array<i64: 1, 256>}, {transform_indices = @transform_4, window_bounds = array<i64: 200, 256>}]} {
    %c0_i32 = arith.constant 0 : i32
    %0 = arith.cmpi eq, %arg2, %c0_i32 : i32
    %1 = arith.extui %0 : i1 to i32
    %c0_i32_0 = arith.constant 0 : i32
    %2 = arith.cmpi ne, %1, %c0_i32_0 : i32
    scf.if %2 {
      %cst_9 = arith.constant 0.000000e+00 : f32
      %12 = vector.broadcast %cst_9 : f32 to vector<200x256xf32>
      %c0_10 = arith.constant 0 : index
      %c0_11 = arith.constant 0 : index
      %13 = vector.load %arg8[%c0_10, %c0_11] : memref<200x256xf32, #tpu.memory_space<vmem>>, vector<200x256xf32>
      tpu.vector_store %arg8[%c0_10, %c0_11], %12 {strides = array<i32>} : memref<200x256xf32, #tpu.memory_space<vmem>>, vector<200x256xf32>,
    } else {
    }
    %c0 = arith.constant 0 : index
    %c0_1 = arith.constant 0 : index
    %3 = vector.load %arg8[%c0, %c0_1] : memref<200x256xf32, #tpu.memory_space<vmem>>, vector<200x256xf32>
    %c0_2 = arith.constant 0 : index
    %c0_3 = arith.constant 0 : index
    %4 = vector.load %arg3[%c0_2, %c0_3] : memref<200x128xbf16, #tpu.memory_space<vmem>>, vector<200x128xbf16>
    %c0_4 = arith.constant 0 : index
    %c0_5 = arith.constant 0 : index
    %5 = vector.load %arg4[%c0_4, %c0_5] : memref<128x256xbf16, #tpu.memory_space<vmem>>, vector<128x256xbf16>
    %cst = arith.constant dense<0.000000e+00> : vector<200x256xf32>
    %6 = tpu.matmul %4, %5, %cst {dimension_numbers = #tpu.dot_dimension_numbers<[1], [0], [0], [1], [0, 0, 1, 1], [], []>} : vector<200x128xbf16>, vector<128x256xbf16>, vector<200x256xf32> -> vector<200x256xf32>
    %7 = arith.addf %3, %6 : vector<200x256xf32>
    %c0_6 = arith.constant 0 : index
    %c0_7 = arith.constant 0 : index
    %8 = vector.load %arg8[%c0_6, %c0_7] : memref<200x256xf32, #tpu.memory_space<vmem>>, vector<200x256xf32>
    tpu.vector_store %arg8[%c0_6, %c0_7], %7 {strides = array<i32>} : memref<200x256xf32, #tpu.memory_space<vmem>>, vector<200x256xf32>,
    %c4_i32 = arith.constant 4 : i32
    %9 = arith.cmpi eq, %arg2, %c4_i32 : i32
    %10 = arith.extui %9 : i1 to i32
    %c0_i32_8 = arith.constant 0 : i32
    %11 = arith.cmpi ne, %10, %c0_i32_8 : i32
    scf.if %11 {
      %c0_9 = arith.constant 0 : index
      %c0_10 = arith.constant 0 : index
      %12 = vector.load %arg8[%c0_9, %c0_10] : memref<200x256xf32, #tpu.memory_space<vmem>>, vector<200x256xf32>
      %c0_11 = arith.constant 0 : index
      %c0_12 = arith.constant 0 : index
      %13 = vector.load %arg5[%c0_11, %c0_12] : memref<1x256xf32, #tpu.memory_space<vmem>>, vector<1x256xf32>
      %14 = vector.broadcast %13 : vector<1x256xf32> to vector<200x256xf32>
      %15 = arith.addf %12, %14 : vector<200x256xf32>
      %cst_13 = arith.constant 0.000000e+00 : f32
      %16 = vector.broadcast %cst_13 : f32 to vector<200x256xf32>
      %17 = arith.cmpf oge, %15, %16 : vector<200x256xf32>
      %c0_14 = arith.constant 0 : index
      %c0_15 = arith.constant 0 : index
      %18 = vector.load %arg6[%c0_14, %c0_15] : memref<1x256xf32, #tpu.memory_space<vmem>>, vector<1x256xf32>
      %19 = vector.broadcast %18 : vector<1x256xf32> to vector<200x256xf32>
      %20 = arith.mulf %15, %19 : vector<200x256xf32>
      %21 = arith.select %17, %15, %20 : vector<200x256xi1>, vector<200x256xf32>
      %22 = arith.truncf %21 : vector<200x256xf32> to vector<200x256xbf16>
      %c0_16 = arith.constant 0 : index
      %c0_17 = arith.constant 0 : index
      %23 = vector.load %arg7[%c0_16, %c0_17] : memref<200x256xbf16, #tpu.memory_space<vmem>>, vector<200x256xbf16>
      tpu.vector_store %arg7[%c0_16, %c0_17], %22 {strides = array<i32>} : memref<200x256xbf16, #tpu.memory_space<vmem>>, vector<200x256xbf16>,
    } else {
    }
    return
  }
  func.func @transform_0(%arg0: i32, %arg1: i32, %arg2: i32) -> (i32, i32) {
    %c0_i32 = arith.constant 0 : i32
    return %arg0, %arg2 : i32, i32
  }
  func.func @transform_1(%arg0: i32, %arg1: i32, %arg2: i32) -> (i32, i32) {
    %c0_i32 = arith.constant 0 : i32
    return %arg2, %arg1 : i32, i32
  }
  func.func @transform_2(%arg0: i32, %arg1: i32, %arg2: i32) -> (i32, i32) {
    %c0_i32 = arith.constant 0 : i32
    %c0_i32_0 = arith.constant 0 : i32
    return %c0_i32, %arg1 : i32, i32
  }
  func.func @transform_3(%arg0: i32, %arg1: i32, %arg2: i32) -> (i32, i32) {
    %c0_i32 = arith.constant 0 : i32
    %c0_i32_0 = arith.constant 0 : i32
    return %c0_i32, %arg1 : i32, i32
  }
  func.func @transform_4(%arg0: i32, %arg1: i32, %arg2: i32) -> (i32, i32) {
    %c0_i32 = arith.constant 0 : i32
    return %arg0, %arg1 : i32, i32
  }
}

module attributes {stable_mosaic.version = 11 : i64} {
  func.func @kernel(%arg0: i32, %arg1: i32, %arg2: i32, %arg3: memref<8x384xbf16, #tpu.memory_space<vmem>>, %arg4: memref<384x256xbf16, #tpu.memory_space<vmem>>, %arg5: memref<1x256xf32, #tpu.memory_space<vmem>>, %arg6: memref<1x256xf32, #tpu.memory_space<vmem>>, %arg7: memref<8x256xbf16, #tpu.memory_space<vmem>>, %arg8: memref<8x256xf32, #tpu.memory_space<vmem>>) attributes {dimension_semantics = [#tpu.dimension_semantics<parallel>, #tpu.dimension_semantics<parallel>, #tpu.dimension_semantics<arbitrary>], iteration_bounds = array<i64: 1, 1, 6>, scalar_prefetch = 0 : i64, scratch_operands = 1 : i64, tpu.core_type = #tpu.core_type<tc>, window_params = [{transform_indices = @transform_0, window_bounds = array<i64: 8, 384>}, {transform_indices = @transform_1, window_bounds = array<i64: 384, 256>}, {transform_indices = @transform_2, window_bounds = array<i64: 1, 256>}, {transform_indices = @transform_3, window_bounds = array<i64: 1, 256>}, {transform_indices = @transform_4, window_bounds = array<i64: 8, 256>}]} {
    %c0_i32 = arith.constant 0 : i32
    %0 = arith.cmpi eq, %arg2, %c0_i32 : i32
    %1 = arith.extui %0 : i1 to i32
    %c0_i32_0 = arith.constant 0 : i32
    %2 = arith.cmpi ne, %1, %c0_i32_0 : i32
    scf.if %2 {
      %cst_9 = arith.constant 0.000000e+00 : f32
      %12 = vector.broadcast %cst_9 : f32 to vector<8x256xf32>
      %c0_10 = arith.constant 0 : index
      %c0_11 = arith.constant 0 : index
      %13 = vector.load %arg8[%c0_10, %c0_11] : memref<8x256xf32, #tpu.memory_space<vmem>>, vector<8x256xf32>
      tpu.vector_store %arg8[%c0_10, %c0_11], %12 {strides = array<i32>} : memref<8x256xf32, #tpu.memory_space<vmem>>, vector<8x256xf32>,
    } else {
    }
    %c0 = arith.constant 0 : index
    %c0_1 = arith.constant 0 : index
    %3 = vector.load %arg8[%c0, %c0_1] : memref<8x256xf32, #tpu.memory_space<vmem>>, vector<8x256xf32>
    %c0_2 = arith.constant 0 : index
    %c0_3 = arith.constant 0 : index
    %4 = vector.load %arg3[%c0_2, %c0_3] : memref<8x384xbf16, #tpu.memory_space<vmem>>, vector<8x384xbf16>
    %c0_4 = arith.constant 0 : index
    %c0_5 = arith.constant 0 : index
    %5 = vector.load %arg4[%c0_4, %c0_5] : memref<384x256xbf16, #tpu.memory_space<vmem>>, vector<384x256xbf16>
    %cst = arith.constant dense<0.000000e+00> : vector<8x256xf32>
    %6 = tpu.matmul %4, %5, %cst {dimension_numbers = #tpu.dot_dimension_numbers<[1], [0], [0], [1], [0, 0, 1, 1], [], []>} : vector<8x384xbf16>, vector<384x256xbf16>, vector<8x256xf32> -> vector<8x256xf32>
    %7 = arith.addf %3, %6 : vector<8x256xf32>
    %c0_6 = arith.constant 0 : index
    %c0_7 = arith.constant 0 : index
    %8 = vector.load %arg8[%c0_6, %c0_7] : memref<8x256xf32, #tpu.memory_space<vmem>>, vector<8x256xf32>
    tpu.vector_store %arg8[%c0_6, %c0_7], %7 {strides = array<i32>} : memref<8x256xf32, #tpu.memory_space<vmem>>, vector<8x256xf32>,
    %c5_i32 = arith.constant 5 : i32
    %9 = arith.cmpi eq, %arg2, %c5_i32 : i32
    %10 = arith.extui %9 : i1 to i32
    %c0_i32_8 = arith.constant 0 : i32
    %11 = arith.cmpi ne, %10, %c0_i32_8 : i32
    scf.if %11 {
      %c0_9 = arith.constant 0 : index
      %c0_10 = arith.constant 0 : index
      %12 = vector.load %arg8[%c0_9, %c0_10] : memref<8x256xf32, #tpu.memory_space<vmem>>, vector<8x256xf32>
      %c0_11 = arith.constant 0 : index
      %c0_12 = arith.constant 0 : index
      %13 = vector.load %arg5[%c0_11, %c0_12] : memref<1x256xf32, #tpu.memory_space<vmem>>, vector<1x256xf32>
      %14 = vector.broadcast %13 : vector<1x256xf32> to vector<8x256xf32>
      %15 = arith.addf %12, %14 : vector<8x256xf32>
      %cst_13 = arith.constant 0.000000e+00 : f32
      %16 = vector.broadcast %cst_13 : f32 to vector<8x256xf32>
      %17 = arith.cmpf oge, %15, %16 : vector<8x256xf32>
      %c0_14 = arith.constant 0 : index
      %c0_15 = arith.constant 0 : index
      %18 = vector.load %arg6[%c0_14, %c0_15] : memref<1x256xf32, #tpu.memory_space<vmem>>, vector<1x256xf32>
      %19 = vector.broadcast %18 : vector<1x256xf32> to vector<8x256xf32>
      %20 = arith.mulf %15, %19 : vector<8x256xf32>
      %21 = arith.select %17, %15, %20 : vector<8x256xi1>, vector<8x256xf32>
      %22 = arith.truncf %21 : vector<8x256xf32> to vector<8x256xbf16>
      %c0_16 = arith.constant 0 : index
      %c0_17 = arith.constant 0 : index
      %23 = vector.load %arg7[%c0_16, %c0_17] : memref<8x256xbf16, #tpu.memory_space<vmem>>, vector<8x256xbf16>
      tpu.vector_store %arg7[%c0_16, %c0_17], %22 {strides = array<i32>} : memref<8x256xbf16, #tpu.memory_space<vmem>>, vector<8x256xbf16>,
    } else {
    }
    return
  }
  func.func @transform_0(%arg0: i32, %arg1: i32, %arg2: i32) -> (i32, i32) {
    %c0_i32 = arith.constant 0 : i32
    return %arg0, %arg2 : i32, i32
  }
  func.func @transform_1(%arg0: i32, %arg1: i32, %arg2: i32) -> (i32, i32) {
    %c0_i32 = arith.constant 0 : i32
    return %arg2, %arg1 : i32, i32
  }
  func.func @transform_2(%arg0: i32, %arg1: i32, %arg2: i32) -> (i32, i32) {
    %c0_i32 = arith.constant 0 : i32
    %c0_i32_0 = arith.constant 0 : i32
    return %c0_i32, %arg1 : i32, i32
  }
  func.func @transform_3(%arg0: i32, %arg1: i32, %arg2: i32) -> (i32, i32) {
    %c0_i32 = arith.constant 0 : i32
    %c0_i32_0 = arith.constant 0 : i32
    return %c0_i32, %arg1 : i32, i32
  }
  func.func @transform_4(%arg0: i32, %arg1: i32, %arg2: i32) -> (i32, i32) {
    %c0_i32 = arith.constant 0 : i32
    return %arg0, %arg1 : i32, i32
  }
}

</mosaic_0001>

<llo_original>
// kernel: generator_forward.9
$region0: #{generator_forward.9}
  #allocation0 [shape = 'u32[]', space=smem, size = 0x4, offset = 0x4, fixed_abs, tag = 'smem constant byte address 0x4 - core index']
  #allocation1 [shape = 'u32[72,128]{1,0:T(1,128)}', space=vmem, size = 0x9000, scoped, tag = 'internal scratch']
  #allocation2 [shape = 'f32[200,64]{1,0:T(8,128)}', space=vmem, size = 0x19000, scoped, tag = 'scratch operand']
  %s0 = inlined_call_operand.vmem [shape: bf16[200,384], index: 0, kind: input, shape index: {}]
  %s1 = inlined_call_operand.vmem [shape: bf16[384,64], index: 1, kind: input, shape index: {}]
  %s2 = inlined_call_operand.vmem [shape: f32[1,64], index: 2, kind: input, shape index: {}]
  %s3 = inlined_call_operand.vmem [shape: bf16[200,64], index: 3, kind: output, shape index: {}]
  %s4 = sld [smem:[#allocation0]]
  $region30: #{generator_forward.9} parent=0
    _
  %s6 = ssub.s32 1, %s4
  %s7 = scalar_select 0, %s6, %s4
  // Predicated region
  $region2: #{generator_forward.9} parent=0 // pred_check
    _
  $region3: #{generator_forward.9} parent=0 // pred_check_branch
    %9 = sbr.rel (0) target = $region5
  $region4: #{generator_forward.9} parent=0 // pred_region
    _
  $region5: #{generator_forward.9} parent=0 // pred_fallthru
    _
  // Predicated region
  $region6: #{generator_forward.9} parent=0 // pred_check
    _
  $region7: #{generator_forward.9} parent=0 // pred_check_branch
    %11 = sbr.rel (0) target = $region9
  $region8: #{generator_forward.9} parent=0 // pred_region
    _
  $region9: #{generator_forward.9} parent=0 // pred_fallthru
    _
  // Predicated region
  $region10: #{generator_forward.9} parent=0 // pred_check
    _
  $region11: #{generator_forward.9} parent=0 // pred_check_branch
    %13 = sbr.rel (0) target = $region13
  $region12: #{generator_forward.9} parent=0 // pred_region
    _
  $region13: #{generator_forward.9} parent=0 // pred_fallthru
    _
  %p14 = scmp.eq.s32.totalorder 0, 0
  // Predicated region
  $region14: #{generator_forward.9} parent=0 // pred_check
    %p15 = pneg %p14
  $region15: #{generator_forward.9} parent=0 // pred_check_branch
    %17 = sbr.rel (%p15) target = $region17
  $region16: #{generator_forward.9} parent=0 // pred_region
    %vm18 = vcmask 523264
    %19 = vst.msk [vmem:[#allocation2] sm:$0xff] %vm18, 0.0
    %20 = vst.msk [vmem:[#allocation2 + $0x8] sm:$0xff] %vm18, 0.0
    %21 = vst.msk [vmem:[#allocation2 + $0x10] sm:$0xff] %vm18, 0.0
    %22 = vst.msk [vmem:[#allocation2 + $0x18] sm:$0xff] %vm18, 0.0
    %23 = vst.msk [vmem:[#allocation2 + $0x20] sm:$0xff] %vm18, 0.0
    %24 = vst.msk [vmem:[#allocation2 + $0x28] sm:$0xff] %vm18, 0.0
    %25 = vst.msk [vmem:[#allocation2 + $0x30] sm:$0xff] %vm18, 0.0
    %26 = vst.msk [vmem:[#allocation2 + $0x38] sm:$0xff] %vm18, 0.0
    %27 = vst.msk [vmem:[#allocation2 + $0x40] sm:$0xff] %vm18, 0.0
    %28 = vst.msk [vmem:[#allocation2 + $0x48] sm:$0xff] %vm18, 0.0
    %29 = vst.msk [vmem:[#allocation2 + $0x50] sm:$0xff] %vm18, 0.0
    %30 = vst.msk [vmem:[#allocation2 + $0x58] sm:$0xff] %vm18, 0.0
    %31 = vst.msk [vmem:[#allocation2 + $0x60] sm:$0xff] %vm18, 0.0
    %32 = vst.msk [vmem:[#allocation2 + $0x68] sm:$0xff] %vm18, 0.0
    %33 = vst.msk [vmem:[#allocation2 + $0x70] sm:$0xff] %vm18, 0.0
    %34 = vst.msk [vmem:[#allocation2 + $0x78] sm:$0xff] %vm18, 0.0
    %35 = vst.msk [vmem:[#allocation2 + $0x80] sm:$0xff] %vm18, 0.0
    %36 = vst.msk [vmem:[#allocation2 + $0x88] sm:$0xff] %vm18, 0.0
    %37 = vst.msk [vmem:[#allocation2 + $0x90] sm:$0xff] %vm18, 0.0
    %38 = vst.msk [vmem:[#allocation2 + $0x98] sm:$0xff] %vm18, 0.0
    %39 = vst.msk [vmem:[#allocation2 + $0xa0] sm:$0xff] %vm18, 0.0
    %40 = vst.msk [vmem:[#allocation2 + $0xa8] sm:$0xff] %vm18, 0.0
    %41 = vst.msk [vmem:[#allocation2 + $0xb0] sm:$0xff] %vm18, 0.0
    %42 = vst.msk [vmem:[#allocation2 + $0xb8] sm:$0xff] %vm18, 0.0
    %43 = vst.msk [vmem:[#allocation2 + $0xc0] sm:$0xff] %vm18, 0.0
  $region17: #{generator_forward.9} parent=0 // pred_fallthru
    _
  %v44 = vld [vmem:[#allocation2] sm:$0xff]
  %v45 = vld [vmem:[#allocation2 + $0x8] sm:$0xff]
  %v46 = vld [vmem:[#allocation2 + $0x10] sm:$0xff]
  %v47 = vld [vmem:[#allocation2 + $0x18] sm:$0xff]
  %v48 = vld [vmem:[#allocation2 + $0x20] sm:$0xff]
  %v49 = vld [vmem:[#allocation2 + $0x28] sm:$0xff]
  %v50 = vld [vmem:[#allocation2 + $0x30] sm:$0xff]
  %v51 = vld [vmem:[#allocation2 + $0x38] sm:$0xff]
  %v52 = vld [vmem:[#allocation2 + $0x40] sm:$0xff]
  %v53 = vld [vmem:[#allocation2 + $0x48] sm:$0xff]
  %v54 = vld [vmem:[#allocation2 + $0x50] sm:$0xff]
  %v55 = vld [vmem:[#allocation2 + $0x58] sm:$0xff]
  %v56 = vld [vmem:[#allocation2 + $0x60] sm:$0xff]
  %v57 = vld [vmem:[#allocation2 + $0x68] sm:$0xff]
  %v58 = vld [vmem:[#allocation2 + $0x70] sm:$0xff]
  %v59 = vld [vmem:[#allocation2 + $0x78] sm:$0xff]
  %v60 = vld [vmem:[#allocation2 + $0x80] sm:$0xff]
  %v61 = vld [vmem:[#allocation2 + $0x88] sm:$0xff]
  %v62 = vld [vmem:[#allocation2 + $0x90] sm:$0xff]
  %v63 = vld [vmem:[#allocation2 + $0x98] sm:$0xff]
  %v64 = vld [vmem:[#allocation2 + $0xa0] sm:$0xff]
  %v65 = vld [vmem:[#allocation2 + $0xa8] sm:$0xff]
  %v66 = vld [vmem:[#allocation2 + $0xb0] sm:$0xff]
  %v67 = vld [vmem:[#allocation2 + $0xb8] sm:$0xff]
  %v68 = vld [vmem:[#allocation2 + $0xc0] sm:$0xff]
  %v69 = vld [vmem:[%s0] sm:$0xff]
  %v70 = vld [vmem:[%s0 + $0x8] sm:$0xf]
  %v71 = vld [vmem:[%s0 + $0xc] sm:$0xff]
  %v72 = vld [vmem:[%s0 + $0x14] sm:$0xf]
  %v73 = vld [vmem:[%s0 + $0x18] sm:$0xff]
  %v74 = vld [vmem:[%s0 + $0x20] sm:$0xf]
  %v75 = vld [vmem:[%s0 + $0x24] sm:$0xff]
  %v76 = vld [vmem:[%s0 + $0x2c] sm:$0xf]
  %v77 = vld [vmem:[%s0 + $0x30] sm:$0xff]
  %v78 = vld [vmem:[%s0 + $0x38] sm:$0xf]
  %v79 = vld [vmem:[%s0 + $0x3c] sm:$0xff]
  %v80 = vld [vmem:[%s0 + $0x44] sm:$0xf]
  %v81 = vld [vmem:[%s0 + $0x48] sm:$0xff]
  %v82 = vld [vmem:[%s0 + $0x50] sm:$0xf]
  %v83 = vld [vmem:[%s0 + $0x54] sm:$0xff]
  %v84 = vld [vmem:[%s0 + $0x5c] sm:$0xf]
  %v85 = vld [vmem:[%s0 + $0x60] sm:$0xff]
  %v86 = vld [vmem:[%s0 + $0x68] sm:$0xf]
  %v87 = vld [vmem:[%s0 + $0x6c] sm:$0xff]
  %v88 = vld [vmem:[%s0 + $0x74] sm:$0xf]
  %v89 = vld [vmem:[%s0 + $0x78] sm:$0xff]
  %v90 = vld [vmem:[%s0 + $0x80] sm:$0xf]
  %v91 = vld [vmem:[%s0 + $0x84] sm:$0xff]
  %v92 = vld [vmem:[%s0 + $0x8c] sm:$0xf]
  %v93 = vld [vmem:[%s0 + $0x90] sm:$0xff]
  %v94 = vld [vmem:[%s0 + $0x98] sm:$0xf]
  %v95 = vld [vmem:[%s0 + $0x9c] sm:$0xff]
  %v96 = vld [vmem:[%s0 + $0xa4] sm:$0xf]
  %v97 = vld [vmem:[%s0 + $0xa8] sm:$0xff]
  %v98 = vld [vmem:[%s0 + $0xb0] sm:$0xf]
  %v99 = vld [vmem:[%s0 + $0xb4] sm:$0xff]
  %v100 = vld [vmem:[%s0 + $0xbc] sm:$0xf]
  %v101 = vld [vmem:[%s0 + $0xc0] sm:$0xff]
  %v102 = vld [vmem:[%s0 + $0xc8] sm:$0xf]
  %v103 = vld [vmem:[%s0 + $0xcc] sm:$0xff]
  %v104 = vld [vmem:[%s0 + $0xd4] sm:$0xf]
  %v105 = vld [vmem:[%s0 + $0xd8] sm:$0xff]
  %v106 = vld [vmem:[%s0 + $0xe0] sm:$0xf]
  %v107 = vld [vmem:[%s0 + $0xe4] sm:$0xff]
  %v108 = vld [vmem:[%s0 + $0xec] sm:$0xf]
  %v109 = vld [vmem:[%s0 + $0xf0] sm:$0xff]
  %v110 = vld [vmem:[%s0 + $0xf8] sm:$0xf]
  %v111 = vld [vmem:[%s0 + $0xfc] sm:$0xff]
  %v112 = vld [vmem:[%s0 + $0x104] sm:$0xf]
  %v113 = vld [vmem:[%s0 + $0x108] sm:$0xff]
  %v114 = vld [vmem:[%s0 + $0x110] sm:$0xf]
  %v115 = vld [vmem:[%s0 + $0x114] sm:$0xff]
  %v116 = vld [vmem:[%s0 + $0x11c] sm:$0xf]
  %v117 = vld [vmem:[%s0 + $0x120] sm:$0xff]
  %v118 = vld [vmem:[%s0 + $0x128] sm:$0xf]
  %v119 = vld [vmem:[%s1] sm:$0xf]
  %v120 = vld [vmem:[%s1 + $0x4] sm:$0xf]
  %v121 = vld [vmem:[%s1 + $0x8] sm:$0xf]
  %v122 = vld [vmem:[%s1 + $0xc] sm:$0xf]
  %v123 = vld [vmem:[%s1 + $0x10] sm:$0xf]
  %v124 = vld [vmem:[%s1 + $0x14] sm:$0xf]
  %v125 = vld [vmem:[%s1 + $0x18] sm:$0xf]
  %v126 = vld [vmem:[%s1 + $0x1c] sm:$0xf]
  %v127 = vld [vmem:[%s1 + $0x20] sm:$0xf]
  %v128 = vld [vmem:[%s1 + $0x24] sm:$0xf]
  %v129 = vld [vmem:[%s1 + $0x28] sm:$0xf]
  %v130 = vld [vmem:[%s1 + $0x2c] sm:$0xf]
  %v131 = vld [vmem:[%s1 + $0x30] sm:$0xf]
  %v132 = vld [vmem:[%s1 + $0x34] sm:$0xf]
  %v133 = vld [vmem:[%s1 + $0x38] sm:$0xf]
  %v134 = vld [vmem:[%s1 + $0x3c] sm:$0xf]
  %v135 = vld [vmem:[%s1 + $0x40] sm:$0xf]
  %v136 = vld [vmem:[%s1 + $0x44] sm:$0xf]
  %v137 = vld [vmem:[%s1 + $0x48] sm:$0xf]
  %v138 = vld [vmem:[%s1 + $0x4c] sm:$0xf]
  %v139 = vld [vmem:[%s1 + $0x50] sm:$0xf]
  %v140 = vld [vmem:[%s1 + $0x54] sm:$0xf]
  %v141 = vld [vmem:[%s1 + $0x58] sm:$0xf]
  %v142 = vld [vmem:[%s1 + $0x5c] sm:$0xf]
  %v143 = vld [vmem:[%s1 + $0x60] sm:$0xf]
  %v144 = vld [vmem:[%s1 + $0x64] sm:$0xf]
  %v145 = vld [vmem:[%s1 + $0x68] sm:$0xf]
  %v146 = vld [vmem:[%s1 + $0x6c] sm:$0xf]
  %v147 = vld [vmem:[%s1 + $0x70] sm:$0xf]
  %v148 = vld [vmem:[%s1 + $0x74] sm:$0xf]
  %v149 = vld [vmem:[%s1 + $0x78] sm:$0xf]
  %v150 = vld [vmem:[%s1 + $0x7c] sm:$0xf]
  %v151 = vld [vmem:[%s1 + $0x80] sm:$0xf]
  %v152 = vld [vmem:[%s1 + $0x84] sm:$0xf]
  %v153 = vld [vmem:[%s1 + $0x88] sm:$0xf]
  %v154 = vld [vmem:[%s1 + $0x8c] sm:$0xf]
  %v155 = vld [vmem:[%s1 + $0x90] sm:$0xf]
  %v156 = vld [vmem:[%s1 + $0x94] sm:$0xf]
  %v157 = vld [vmem:[%s1 + $0x98] sm:$0xf]
  %v158 = vld [vmem:[%s1 + $0x9c] sm:$0xf]
  %v159 = vld [vmem:[%s1 + $0xa0] sm:$0xf]
  %v160 = vld [vmem:[%s1 + $0xa4] sm:$0xf]
  %v161 = vld [vmem:[%s1 + $0xa8] sm:$0xf]
  %v162 = vld [vmem:[%s1 + $0xac] sm:$0xf]
  %v163 = vld [vmem:[%s1 + $0xb0] sm:$0xf]
  %v164 = vld [vmem:[%s1 + $0xb4] sm:$0xf]
  %v165 = vld [vmem:[%s1 + $0xb8] sm:$0xf]
  %v166 = vld [vmem:[%s1 + $0xbc] sm:$0xf]
  %v217 = vunpack.c.l.b16 %v69
  %v218 = vunpack.c.h.b16 %v69
  %v219 = vunpack.c.l.b16 %v70
  %v220 = vunpack.c.l.b16 %v71
  %v221 = vunpack.c.h.b16 %v71
  %v222 = vunpack.c.l.b16 %v72
  %v223 = vunpack.c.l.b16 %v73
  %v224 = vunpack.c.h.b16 %v73
  %v225 = vunpack.c.l.b16 %v74
  %v226 = vunpack.c.l.b16 %v75
  %v227 = vunpack.c.h.b16 %v75
  %v228 = vunpack.c.l.b16 %v76
  %v229 = vunpack.c.l.b16 %v77
  %v230 = vunpack.c.h.b16 %v77
  %v231 = vunpack.c.l.b16 %v78
  %v232 = vunpack.c.l.b16 %v79
  %v233 = vunpack.c.h.b16 %v79
  %v234 = vunpack.c.l.b16 %v80
  %v235 = vunpack.c.l.b16 %v81
  %v236 = vunpack.c.h.b16 %v81
  %v237 = vunpack.c.l.b16 %v82
  %v238 = vunpack.c.l.b16 %v83
  %v239 = vunpack.c.h.b16 %v83
  %v240 = vunpack.c.l.b16 %v84
  %v241 = vunpack.c.l.b16 %v85
  %v242 = vunpack.c.h.b16 %v85
  %v243 = vunpack.c.l.b16 %v86
  %v244 = vunpack.c.l.b16 %v87
  %v245 = vunpack.c.h.b16 %v87
  %v246 = vunpack.c.l.b16 %v88
  %v247 = vunpack.c.l.b16 %v89
  %v248 = vunpack.c.h.b16 %v89
  %v249 = vunpack.c.l.b16 %v90
  %v250 = vunpack.c.l.b16 %v91
  %v251 = vunpack.c.h.b16 %v91
  %v252 = vunpack.c.l.b16 %v92
  %v253 = vunpack.c.l.b16 %v93
  %v254 = vunpack.c.h.b16 %v93
  %v255 = vunpack.c.l.b16 %v94
  %v256 = vunpack.c.l.b16 %v95
  %v257 = vunpack.c.h.b16 %v95
  %v258 = vunpack.c.l.b16 %v96
  %v259 = vunpack.c.l.b16 %v97
  %v260 = vunpack.c.h.b16 %v97
  %v261 = vunpack.c.l.b16 %v98
  %v262 = vunpack.c.l.b16 %v99
  %v263 = vunpack.c.h.b16 %v99
  %v264 = vunpack.c.l.b16 %v100
  %v265 = vunpack.c.l.b16 %v101
  %v266 = vunpack.c.h.b16 %v101
  %v267 = vunpack.c.l.b16 %v102
  %v268 = vunpack.c.l.b16 %v103
  %v269 = vunpack.c.h.b16 %v103
  %v270 = vunpack.c.l.b16 %v104
  %v271 = vunpack.c.l.b16 %v105
  %v272 = vunpack.c.h.b16 %v105
  %v273 = vunpack.c.l.b16 %v106
  %v274 = vunpack.c.l.b16 %v107
  %v275 = vunpack.c.h.b16 %v107
  %v276 = vunpack.c.l.b16 %v108
  %v277 = vunpack.c.l.b16 %v109
  %v278 = vunpack.c.h.b16 %v109
  %v279 = vunpack.c.l.b16 %v110
  %v280 = vunpack.c.l.b16 %v111
  %v281 = vunpack.c.h.b16 %v111
  %v282 = vunpack.c.l.b16 %v112
  %v283 = vunpack.c.l.b16 %v113
  %v284 = vunpack.c.h.b16 %v113
  %v285 = vunpack.c.l.b16 %v114
  %v286 = vunpack.c.l.b16 %v115
  %v287 = vunpack.c.h.b16 %v115
  %v288 = vunpack.c.l.b16 %v116
  %v289 = vunpack.c.l.b16 %v117
  %v290 = vunpack.c.h.b16 %v117
  %v291 = vunpack.c.l.b16 %v118
  %v292 = vpack.c.b16 %v220, %v217
  %v293 = vpack.c.b16 %v221, %v218
  %v294 = vpack.c.b16 %v222, %v219
  %v295 = vpack.c.b16 %v226, %v223
  %v296 = vpack.c.b16 %v227, %v224
  %v297 = vpack.c.b16 %v228, %v225
  %v298 = vpack.c.b16 %v232, %v229
  %v299 = vpack.c.b16 %v233, %v230
  %v300 = vpack.c.b16 %v234, %v231
  %v301 = vpack.c.b16 %v238, %v235
  %v302 = vpack.c.b16 %v239, %v236
  %v303 = vpack.c.b16 %v240, %v237
  %v304 = vpack.c.b16 %v244, %v241
  %v305 = vpack.c.b16 %v245, %v242
  %v306 = vpack.c.b16 %v246, %v243
  %v307 = vpack.c.b16 %v250, %v247
  %v308 = vpack.c.b16 %v251, %v248
  %v309 = vpack.c.b16 %v252, %v249
  %v310 = vpack.c.b16 %v256, %v253
  %v311 = vpack.c.b16 %v257, %v254
  %v312 = vpack.c.b16 %v258, %v255
  %v313 = vpack.c.b16 %v262, %v259
  %v314 = vpack.c.b16 %v263, %v260
  %v315 = vpack.c.b16 %v264, %v261
  %v316 = vpack.c.b16 %v268, %v265
  %v317 = vpack.c.b16 %v269, %v266
  %v318 = vpack.c.b16 %v270, %v267
  %v319 = vpack.c.b16 %v274, %v271
  %v320 = vpack.c.b16 %v275, %v272
  %v321 = vpack.c.b16 %v276, %v273
  %v322 = vpack.c.b16 %v280, %v277
  %v323 = vpack.c.b16 %v281, %v278
  %v324 = vpack.c.b16 %v282, %v279
  %v325 = vpack.c.b16 %v286, %v283
  %v326 = vpack.c.b16 %v287, %v284
  %v327 = vpack.c.b16 %v288, %v285
  %v328 = vpack.c.b16 %v289, %v289
  %v329 = vpack.c.b16 %v290, %v290
  %v330 = vpack.c.b16 %v291, %v291
  %v418 = vunpack.c.l.b16 %v119
  %v419 = vunpack.c.l.b16 %v120
  %v420 = vunpack.c.l.b16 %v121
  %v421 = vunpack.c.l.b16 %v122
  %v422 = vunpack.c.l.b16 %v123
  %v423 = vunpack.c.l.b16 %v124
  %v424 = vunpack.c.l.b16 %v125
  %v425 = vunpack.c.l.b16 %v126
  %v426 = vunpack.c.l.b16 %v127
  %v427 = vunpack.c.l.b16 %v128
  %v428 = vunpack.c.l.b16 %v129
  %v429 = vunpack.c.l.b16 %v130
  %v430 = vunpack.c.l.b16 %v131
  %v431 = vunpack.c.l.b16 %v132
  %v432 = vunpack.c.l.b16 %v133
  %v433 = vunpack.c.l.b16 %v134
  %v434 = vunpack.c.l.b16 %v135
  %v435 = vunpack.c.l.b16 %v136
  %v436 = vunpack.c.l.b16 %v137
  %v437 = vunpack.c.l.b16 %v138
  %v438 = vunpack.c.l.b16 %v139
  %v439 = vunpack.c.l.b16 %v140
  %v440 = vunpack.c.l.b16 %v141
  %v441 = vunpack.c.l.b16 %v142
  %v442 = vunpack.c.l.b16 %v143
  %v443 = vunpack.c.l.b16 %v144
  %v444 = vunpack.c.l.b16 %v145
  %v445 = vunpack.c.l.b16 %v146
  %v446 = vunpack.c.l.b16 %v147
  %v447 = vunpack.c.l.b16 %v148
  %v448 = vunpack.c.l.b16 %v149
  %v449 = vunpack.c.l.b16 %v150
  %v450 = vunpack.c.l.b16 %v151
  %v451 = vunpack.c.l.b16 %v152
  %v452 = vunpack.c.l.b16 %v153
  %v453 = vunpack.c.l.b16 %v154
  %v454 = vunpack.c.l.b16 %v155
  %v455 = vunpack.c.l.b16 %v156
  %v456 = vunpack.c.l.b16 %v157
  %v457 = vunpack.c.l.b16 %v158
  %v458 = vunpack.c.l.b16 %v159
  %v459 = vunpack.c.l.b16 %v160
  %v460 = vunpack.c.l.b16 %v161
  %v461 = vunpack.c.l.b16 %v162
  %v462 = vunpack.c.l.b16 %v163
  %v463 = vunpack.c.l.b16 %v164
  %v464 = vunpack.c.l.b16 %v165
  %v465 = vunpack.c.l.b16 %v166
  %v466 = vpack.c.b16 %v419, %v418
  %v467 = vpack.c.b16 %v421, %v420
  %v468 = vpack.c.b16 %v423, %v422
  %v469 = vpack.c.b16 %v425, %v424
  %v470 = vpack.c.b16 %v427, %v426
  %v471 = vpack.c.b16 %v429, %v428
  %v472 = vpack.c.b16 %v431, %v430
  %v473 = vpack.c.b16 %v433, %v432
  %v474 = vpack.c.b16 %v435, %v434
  %v475 = vpack.c.b16 %v437, %v436
  %v476 = vpack.c.b16 %v439, %v438
  %v477 = vpack.c.b16 %v441, %v440
  %v478 = vpack.c.b16 %v443, %v442
  %v479 = vpack.c.b16 %v445, %v444
  %v480 = vpack.c.b16 %v447, %v446
  %v481 = vpack.c.b16 %v449, %v448
  %v482 = vpack.c.b16 %v451, %v450
  %v483 = vpack.c.b16 %v453, %v452
  %v484 = vpack.c.b16 %v455, %v454
  %v485 = vpack.c.b16 %v457, %v456
  %v486 = vpack.c.b16 %v459, %v458
  %v487 = vpack.c.b16 %v461, %v460
  %v488 = vpack.c.b16 %v463, %v462
  %v489 = vpack.c.b16 %v465, %v464
  %514 = vmatpush.bf16.msra.mxu0 %v473
  %515 = vmatpush.bf16.msra.mxu0 %v472
  %516 = vmatpush.bf16.msra.mxu0 %v471
  %517 = vmatpush.bf16.msra.mxu0 %v470
  %518 = vmatpush.bf16.msra.mxu0 %v469
  %519 = vmatpush.bf16.msra.mxu0 %v468
  %520 = vmatpush.bf16.msra.mxu0 %v467
  %521 = vmatpush.bf16.msra.mxu0 %v466
  %522 = vmatmul.bf16.gmra.mxu0 %v292
  %v523 = vpop.f32.mrf.mxu0
  %v524 = vadd.f32 0.0, %v523
  %v525 = vpop.f32.mrf.mxu0
  %v526 = vadd.f32 0.0, %v525
  %527 = vmatmul.bf16.gmra.mxu0 %v295
  %v528 = vpop.f32.mrf.mxu0
  %v529 = vadd.f32 0.0, %v528
  %v530 = vpop.f32.mrf.mxu0
  %v531 = vadd.f32 0.0, %v530
  %532 = vmatmul.bf16.gmra.mxu0 %v298
  %v533 = vpop.f32.mrf.mxu0
  %v534 = vadd.f32 0.0, %v533
  %v535 = vpop.f32.mrf.mxu0
  %v536 = vadd.f32 0.0, %v535
  %537 = vmatmul.bf16.gmra.mxu0 %v301
  %v538 = vpop.f32.mrf.mxu0
  %v539 = vadd.f32 0.0, %v538
  %v540 = vpop.f32.mrf.mxu0
  %v541 = vadd.f32 0.0, %v540
  %542 = vmatmul.bf16.gmra.mxu0 %v304
  %v543 = vpop.f32.mrf.mxu0
  %v544 = vadd.f32 0.0, %v543
  %v545 = vpop.f32.mrf.mxu0
  %v546 = vadd.f32 0.0, %v545
  %547 = vmatmul.bf16.gmra.mxu0 %v307
  %v548 = vpop.f32.mrf.mxu0
  %v549 = vadd.f32 0.0, %v548
  %v550 = vpop.f32.mrf.mxu0
  %v551 = vadd.f32 0.0, %v550
  %552 = vmatmul.bf16.gmra.mxu0 %v310
  %v553 = vpop.f32.mrf.mxu0
  %v554 = vadd.f32 0.0, %v553
  %v555 = vpop.f32.mrf.mxu0
  %v556 = vadd.f32 0.0, %v555
  %557 = vmatmul.bf16.gmra.mxu0 %v313
  %v558 = vpop.f32.mrf.mxu0
  %v559 = vadd.f32 0.0, %v558
  %v560 = vpop.f32.mrf.mxu0
  %v561 = vadd.f32 0.0, %v560
  %562 = vmatmul.bf16.gmra.mxu0 %v316
  %v563 = vpop.f32.mrf.mxu0
  %v564 = vadd.f32 0.0, %v563
  %v565 = vpop.f32.mrf.mxu0
  %v566 = vadd.f32 0.0, %v565
  %567 = vmatmul.bf16.gmra.mxu0 %v319
  %v568 = vpop.f32.mrf.mxu0
  %v569 = vadd.f32 0.0, %v568
  %v570 = vpop.f32.mrf.mxu0
  %v571 = vadd.f32 0.0, %v570
  %572 = vmatmul.bf16.gmra.mxu0 %v322
  %v573 = vpop.f32.mrf.mxu0
  %v574 = vadd.f32 0.0, %v573
  %v575 = vpop.f32.mrf.mxu0
  %v576 = vadd.f32 0.0, %v575
  %577 = vmatmul.bf16.gmra.mxu0 %v325
  %v578 = vpop.f32.mrf.mxu0
  %v579 = vadd.f32 0.0, %v578
  %v580 = vpop.f32.mrf.mxu0
  %v581 = vadd.f32 0.0, %v580
  %582 = vmatmul.bf16.gmra.mxu0 %v328
  %v583 = vpop.f32.mrf.mxu0
  %v584 = vadd.f32 0.0, %v583
  %v585 = vpop.f32.mrf.mxu0
  %586 = vdwg.mxu0
  %587 = vmatpush.bf16.msra.mxu0 %v481
  %588 = vmatpush.bf16.msra.mxu0 %v480
  %589 = vmatpush.bf16.msra.mxu0 %v479
  %590 = vmatpush.bf16.msra.mxu0 %v478
  %591 = vmatpush.bf16.msra.mxu0 %v477
  %592 = vmatpush.bf16.msra.mxu0 %v476
  %593 = vmatpush.bf16.msra.mxu0 %v475
  %594 = vmatpush.bf16.msra.mxu0 %v474
  %595 = vmatmul.bf16.gmra.mxu0 %v293
  %v596 = vpop.f32.mrf.mxu0
  %v597 = vadd.f32 %v524, %v596
  %v598 = vpop.f32.mrf.mxu0
  %v599 = vadd.f32 %v526, %v598
  %600 = vmatmul.bf16.gmra.mxu0 %v296
  %v601 = vpop.f32.mrf.mxu0
  %v602 = vadd.f32 %v529, %v601
  %v603 = vpop.f32.mrf.mxu0
  %v604 = vadd.f32 %v531, %v603
  %605 = vmatmul.bf16.gmra.mxu0 %v299
  %v606 = vpop.f32.mrf.mxu0
  %v607 = vadd.f32 %v534, %v606
  %v608 = vpop.f32.mrf.mxu0
  %v609 = vadd.f32 %v536, %v608
  %610 = vmatmul.bf16.gmra.mxu0 %v302
  %v611 = vpop.f32.mrf.mxu0
  %v612 = vadd.f32 %v539, %v611
  %v613 = vpop.f32.mrf.mxu0
  %v614 = vadd.f32 %v541, %v613
  %615 = vmatmul.bf16.gmra.mxu0 %v305
  %v616 = vpop.f32.mrf.mxu0
  %v617 = vadd.f32 %v544, %v616
  %v618 = vpop.f32.mrf.mxu0
  %v619 = vadd.f32 %v546, %v618
  %620 = vmatmul.bf16.gmra.mxu0 %v308
  %v621 = vpop.f32.mrf.mxu0
  %v622 = vadd.f32 %v549, %v621
  %v623 = vpop.f32.mrf.mxu0
  %v624 = vadd.f32 %v551, %v623
  %625 = vmatmul.bf16.gmra.mxu0 %v311
  %v626 = vpop.f32.mrf.mxu0
  %v627 = vadd.f32 %v554, %v626
  %v628 = vpop.f32.mrf.mxu0
  %v629 = vadd.f32 %v556, %v628
  %630 = vmatmul.bf16.gmra.mxu0 %v314
  %v631 = vpop.f32.mrf.mxu0
  %v632 = vadd.f32 %v559, %v631
  %v633 = vpop.f32.mrf.mxu0
  %v634 = vadd.f32 %v561, %v633
  %635 = vmatmul.bf16.gmra.mxu0 %v317
  %v636 = vpop.f32.mrf.mxu0
  %v637 = vadd.f32 %v564, %v636
  %v638 = vpop.f32.mrf.mxu0
  %v639 = vadd.f32 %v566, %v638
  %640 = vmatmul.bf16.gmra.mxu0 %v320
  %v641 = vpop.f32.mrf.mxu0
  %v642 = vadd.f32 %v569, %v641
  %v643 = vpop.f32.mrf.mxu0
  %v644 = vadd.f32 %v571, %v643
  %645 = vmatmul.bf16.gmra.mxu0 %v323
  %v646 = vpop.f32.mrf.mxu0
  %v647 = vadd.f32 %v574, %v646
  %v648 = vpop.f32.mrf.mxu0
  %v649 = vadd.f32 %v576, %v648
  %650 = vmatmul.bf16.gmra.mxu0 %v326
  %v651 = vpop.f32.mrf.mxu0
  %v652 = vadd.f32 %v579, %v651
  %v653 = vpop.f32.mrf.mxu0
  %v654 = vadd.f32 %v581, %v653
  %655 = vmatmul.bf16.gmra.mxu0 %v329
  %v656 = vpop.f32.mrf.mxu0
  %v657 = vadd.f32 %v584, %v656
  %v658 = vpop.f32.mrf.mxu0
  %659 = vdwg.mxu0
  %660 = vmatpush.bf16.msra.mxu0 %v489
  %661 = vmatpush.bf16.msra.mxu0 %v488
  %662 = vmatpush.bf16.msra.mxu0 %v487
  %663 = vmatpush.bf16.msra.mxu0 %v486
  %664 = vmatpush.bf16.msra.mxu0 %v485
  %665 = vmatpush.bf16.msra.mxu0 %v484
  %666 = vmatpush.bf16.msra.mxu0 %v483
  %667 = vmatpush.bf16.msra.mxu0 %v482
  %668 = vmatmul.bf16.gmra.mxu0 %v294
  %v669 = vpop.f32.mrf.mxu0
  %v670 = vadd.f32 %v597, %v669
  %v671 = vpop.f32.mrf.mxu0
  %v672 = vadd.f32 %v599, %v671
  %673 = vmatmul.bf16.gmra.mxu0 %v297
  %v674 = vpop.f32.mrf.mxu0
  %v675 = vadd.f32 %v602, %v674
  %v676 = vpop.f32.mrf.mxu0
  %v677 = vadd.f32 %v604, %v676
  %678 = vmatmul.bf16.gmra.mxu0 %v300
  %v679 = vpop.f32.mrf.mxu0
  %v680 = vadd.f32 %v607, %v679
  %v681 = vpop.f32.mrf.mxu0
  %v682 = vadd.f32 %v609, %v681
  %683 = vmatmul.bf16.gmra.mxu0 %v303
  %v684 = vpop.f32.mrf.mxu0
  %v685 = vadd.f32 %v612, %v684
  %v686 = vpop.f32.mrf.mxu0
  %v687 = vadd.f32 %v614, %v686
  %688 = vmatmul.bf16.gmra.mxu0 %v306
  %v689 = vpop.f32.mrf.mxu0
  %v690 = vadd.f32 %v617, %v689
  %v691 = vpop.f32.mrf.mxu0
  %v692 = vadd.f32 %v619, %v691
  %693 = vmatmul.bf16.gmra.mxu0 %v309
  %v694 = vpop.f32.mrf.mxu0
  %v695 = vadd.f32 %v622, %v694
  %v696 = vpop.f32.mrf.mxu0
  %v697 = vadd.f32 %v624, %v696
  %698 = vmatmul.bf16.gmra.mxu0 %v312
  %v699 = vpop.f32.mrf.mxu0
  %v700 = vadd.f32 %v627, %v699
  %v701 = vpop.f32.mrf.mxu0
  %v702 = vadd.f32 %v629, %v701
  %703 = vmatmul.bf16.gmra.mxu0 %v315
  %v704 = vpop.f32.mrf.mxu0
  %v705 = vadd.f32 %v632, %v704
  %v706 = vpop.f32.mrf.mxu0
  %v707 = vadd.f32 %v634, %v706
  %708 = vmatmul.bf16.gmra.mxu0 %v318
  %v709 = vpop.f32.mrf.mxu0
  %v710 = vadd.f32 %v637, %v709
  %v711 = vpop.f32.mrf.mxu0
  %v712 = vadd.f32 %v639, %v711
  %713 = vmatmul.bf16.gmra.mxu0 %v321
  %v714 = vpop.f32.mrf.mxu0
  %v715 = vadd.f32 %v642, %v714
  %v716 = vpop.f32.mrf.mxu0
  %v717 = vadd.f32 %v644, %v716
  %718 = vmatmul.bf16.gmra.mxu0 %v324
  %v719 = vpop.f32.mrf.mxu0
  %v720 = vadd.f32 %v647, %v719
  %v721 = vpop.f32.mrf.mxu0
  %v722 = vadd.f32 %v649, %v721
  %723 = vmatmul.bf16.gmra.mxu0 %v327
  %v724 = vpop.f32.mrf.mxu0
  %v725 = vadd.f32 %v652, %v724
  %v726 = vpop.f32.mrf.mxu0
  %v727 = vadd.f32 %v654, %v726
  %728 = vmatmul.bf16.gmra.mxu0 %v330
  %v729 = vpop.f32.mrf.mxu0
  %v730 = vadd.f32 %v657, %v729
  %v731 = vpop.f32.mrf.mxu0
  %732 = vdwg.mxu0
  %v733 = vadd.f32 %v44, %v670
  %v734 = vadd.f32 %v45, %v672
  %v735 = vadd.f32 %v46, %v675
  %v736 = vadd.f32 %v47, %v677
  %v737 = vadd.f32 %v48, %v680
  %v738 = vadd.f32 %v49, %v682
  %v739 = vadd.f32 %v50, %v685
  %v740 = vadd.f32 %v51, %v687
  %v741 = vadd.f32 %v52, %v690
  %v742 = vadd.f32 %v53, %v692
  %v743 = vadd.f32 %v54, %v695
  %v744 = vadd.f32 %v55, %v697
  %v745 = vadd.f32 %v56, %v700
  %v746 = vadd.f32 %v57, %v702
  %v747 = vadd.f32 %v58, %v705
  %v748 = vadd.f32 %v59, %v707
  %v749 = vadd.f32 %v60, %v710
  %v750 = vadd.f32 %v61, %v712
  %v751 = vadd.f32 %v62, %v715
  %v752 = vadd.f32 %v63, %v717
  %v753 = vadd.f32 %v64, %v720
  %v754 = vadd.f32 %v65, %v722
  %v755 = vadd.f32 %v66, %v725
  %v756 = vadd.f32 %v67, %v727
  %v757 = vadd.f32 %v68, %v730
  %vm758 = vcmask 523264
  %759 = vst.msk [vmem:[#allocation2] sm:$0xff] %vm758, %v733
  %760 = vst.msk [vmem:[#allocation2 + $0x8] sm:$0xff] %vm758, %v734
  %761 = vst.msk [vmem:[#allocation2 + $0x10] sm:$0xff] %vm758, %v735
  %762 = vst.msk [vmem:[#allocation2 + $0x18] sm:$0xff] %vm758, %v736
  %763 = vst.msk [vmem:[#allocation2 + $0x20] sm:$0xff] %vm758, %v737
  %764 = vst.msk [vmem:[#allocation2 + $0x28] sm:$0xff] %vm758, %v738
  %765 = vst.msk [vmem:[#allocation2 + $0x30] sm:$0xff] %vm758, %v739
  %766 = vst.msk [vmem:[#allocation2 + $0x38] sm:$0xff] %vm758, %v740
  %767 = vst.msk [vmem:[#allocation2 + $0x40] sm:$0xff] %vm758, %v741
  %768 = vst.msk [vmem:[#allocation2 + $0x48] sm:$0xff] %vm758, %v742
  %769 = vst.msk [vmem:[#allocation2 + $0x50] sm:$0xff] %vm758, %v743
  %770 = vst.msk [vmem:[#allocation2 + $0x58] sm:$0xff] %vm758, %v744
  %771 = vst.msk [vmem:[#allocation2 + $0x60] sm:$0xff] %vm758, %v745
  %772 = vst.msk [vmem:[#allocation2 + $0x68] sm:$0xff] %vm758, %v746
  %773 = vst.msk [vmem:[#allocation2 + $0x70] sm:$0xff] %vm758, %v747
  %774 = vst.msk [vmem:[#allocation2 + $0x78] sm:$0xff] %vm758, %v748
  %775 = vst.msk [vmem:[#allocation2 + $0x80] sm:$0xff] %vm758, %v749
  %776 = vst.msk [vmem:[#allocation2 + $0x88] sm:$0xff] %vm758, %v750
  %777 = vst.msk [vmem:[#allocation2 + $0x90] sm:$0xff] %vm758, %v751
  %778 = vst.msk [vmem:[#allocation2 + $0x98] sm:$0xff] %vm758, %v752
  %779 = vst.msk [vmem:[#allocation2 + $0xa0] sm:$0xff] %vm758, %v753
  %780 = vst.msk [vmem:[#allocation2 + $0xa8] sm:$0xff] %vm758, %v754
  %781 = vst.msk [vmem:[#allocation2 + $0xb0] sm:$0xff] %vm758, %v755
  %782 = vst.msk [vmem:[#allocation2 + $0xb8] sm:$0xff] %vm758, %v756
  %783 = vst.msk [vmem:[#allocation2 + $0xc0] sm:$0xff] %vm758, %v757
  // Predicated region
  $region18: #{generator_forward.9} parent=0 // pred_check
    %p784 = pneg %p14
  $region19: #{generator_forward.9} parent=0 // pred_check_branch
    %786 = sbr.rel (%p784) target = $region21
  $region20: #{generator_forward.9} parent=0 // pred_region
    %v787 = vld [vmem:[#allocation2] sm:$0xff]
    %v788 = vld [vmem:[#allocation2 + $0x8] sm:$0xff]
    %v789 = vld [vmem:[#allocation2 + $0x10] sm:$0xff]
    %v790 = vld [vmem:[#allocation2 + $0x18] sm:$0xff]
    %v791 = vld [vmem:[#allocation2 + $0x20] sm:$0xff]
    %v792 = vld [vmem:[#allocation2 + $0x28] sm:$0xff]
    %v793 = vld [vmem:[#allocation2 + $0x30] sm:$0xff]
    %v794 = vld [vmem:[#allocation2 + $0x38] sm:$0xff]
    %v795 = vld [vmem:[#allocation2 + $0x40] sm:$0xff]
    %v796 = vld [vmem:[#allocation2 + $0x48] sm:$0xff]
    %v797 = vld [vmem:[#allocation2 + $0x50] sm:$0xff]
    %v798 = vld [vmem:[#allocation2 + $0x58] sm:$0xff]
    %v799 = vld [vmem:[#allocation2 + $0x60] sm:$0xff]
    %v800 = vld [vmem:[#allocation2 + $0x68] sm:$0xff]
    %v801 = vld [vmem:[#allocation2 + $0x70] sm:$0xff]
    %v802 = vld [vmem:[#allocation2 + $0x78] sm:$0xff]
    %v803 = vld [vmem:[#allocation2 + $0x80] sm:$0xff]
    %v804 = vld [vmem:[#allocation2 + $0x88] sm:$0xff]
    %v805 = vld [vmem:[#allocation2 + $0x90] sm:$0xff]
    %v806 = vld [vmem:[#allocation2 + $0x98] sm:$0xff]
    %v807 = vld [vmem:[#allocation2 + $0xa0] sm:$0xff]
    %v808 = vld [vmem:[#allocation2 + $0xa8] sm:$0xff]
    %v809 = vld [vmem:[#allocation2 + $0xb0] sm:$0xff]
    %v810 = vld [vmem:[#allocation2 + $0xb8] sm:$0xff]
    %v811 = vld [vmem:[#allocation2 + $0xc0] sm:$0xff]
    %v812 = vld [vmem:[%s2] sm:$0x1]
    %v814 = vperm.slane %v812, 0
    %v816 = vadd.f32 %v787, %v814
    %v817 = vadd.f32 %v788, %v814
    %v818 = vadd.f32 %v789, %v814
    %v819 = vadd.f32 %v790, %v814
    %v820 = vadd.f32 %v791, %v814
    %v821 = vadd.f32 %v792, %v814
    %v822 = vadd.f32 %v793, %v814
    %v823 = vadd.f32 %v794, %v814
    %v824 = vadd.f32 %v795, %v814
    %v825 = vadd.f32 %v796, %v814
    %v826 = vadd.f32 %v797, %v814
    %v827 = vadd.f32 %v798, %v814
    %v828 = vadd.f32 %v799, %v814
    %v829 = vadd.f32 %v800, %v814
    %v830 = vadd.f32 %v801, %v814
    %v831 = vadd.f32 %v802, %v814
    %v832 = vadd.f32 %v803, %v814
    %v833 = vadd.f32 %v804, %v814
    %v834 = vadd.f32 %v805, %v814
    %v835 = vadd.f32 %v806, %v814
    %v836 = vadd.f32 %v807, %v814
    %v837 = vadd.f32 %v808, %v814
    %v838 = vadd.f32 %v809, %v814
    %v839 = vadd.f32 %v810, %v814
    %v840 = vadd.f32 %v811, %v814
    %v841 = vpack.c.bf16 %v816, %v816
    %v842 = vpack.c.bf16 %v817, %v817
    %v843 = vpack.c.bf16 %v818, %v818
    %v844 = vpack.c.bf16 %v819, %v819
    %v845 = vpack.c.bf16 %v820, %v820
    %v846 = vpack.c.bf16 %v821, %v821
    %v847 = vpack.c.bf16 %v822, %v822
    %v848 = vpack.c.bf16 %v823, %v823
    %v849 = vpack.c.bf16 %v824, %v824
    %v850 = vpack.c.bf16 %v825, %v825
    %v851 = vpack.c.bf16 %v826, %v826
    %v852 = vpack.c.bf16 %v827, %v827
    %v853 = vpack.c.bf16 %v828, %v828
    %v854 = vpack.c.bf16 %v829, %v829
    %v855 = vpack.c.bf16 %v830, %v830
    %v856 = vpack.c.bf16 %v831, %v831
    %v857 = vpack.c.bf16 %v832, %v832
    %v858 = vpack.c.bf16 %v833, %v833
    %v859 = vpack.c.bf16 %v834, %v834
    %v860 = vpack.c.bf16 %v835, %v835
    %v861 = vpack.c.bf16 %v836, %v836
    %v862 = vpack.c.bf16 %v837, %v837
    %v863 = vpack.c.bf16 %v838, %v838
    %v864 = vpack.c.bf16 %v839, %v839
    %v865 = vpack.c.bf16 %v840, %v840
    %vm866 = vcmask 519168
    %867 = vst.msk [vmem:[%s3] sm:$0xf] %vm866, %v841
    %868 = vst.msk [vmem:[%s3 + $0x4] sm:$0xf] %vm866, %v842
    %869 = vst.msk [vmem:[%s3 + $0x8] sm:$0xf] %vm866, %v843
    %870 = vst.msk [vmem:[%s3 + $0xc] sm:$0xf] %vm866, %v844
    %871 = vst.msk [vmem:[%s3 + $0x10] sm:$0xf] %vm866, %v845
    %872 = vst.msk [vmem:[%s3 + $0x14] sm:$0xf] %vm866, %v846
    %873 = vst.msk [vmem:[%s3 + $0x18] sm:$0xf] %vm866, %v847
    %874 = vst.msk [vmem:[%s3 + $0x1c] sm:$0xf] %vm866, %v848
    %875 = vst.msk [vmem:[%s3 + $0x20] sm:$0xf] %vm866, %v849
    %876 = vst.msk [vmem:[%s3 + $0x24] sm:$0xf] %vm866, %v850
    %877 = vst.msk [vmem:[%s3 + $0x28] sm:$0xf] %vm866, %v851
    %878 = vst.msk [vmem:[%s3 + $0x2c] sm:$0xf] %vm866, %v852
    %879 = vst.msk [vmem:[%s3 + $0x30] sm:$0xf] %vm866, %v853
    %880 = vst.msk [vmem:[%s3 + $0x34] sm:$0xf] %vm866, %v854
    %881 = vst.msk [vmem:[%s3 + $0x38] sm:$0xf] %vm866, %v855
    %882 = vst.msk [vmem:[%s3 + $0x3c] sm:$0xf] %vm866, %v856
    %883 = vst.msk [vmem:[%s3 + $0x40] sm:$0xf] %vm866, %v857
    %884 = vst.msk [vmem:[%s3 + $0x44] sm:$0xf] %vm866, %v858
    %885 = vst.msk [vmem:[%s3 + $0x48] sm:$0xf] %vm866, %v859
    %886 = vst.msk [vmem:[%s3 + $0x4c] sm:$0xf] %vm866, %v860
    %887 = vst.msk [vmem:[%s3 + $0x50] sm:$0xf] %vm866, %v861
    %888 = vst.msk [vmem:[%s3 + $0x54] sm:$0xf] %vm866, %v862
    %889 = vst.msk [vmem:[%s3 + $0x58] sm:$0xf] %vm866, %v863
    %890 = vst.msk [vmem:[%s3 + $0x5c] sm:$0xf] %vm866, %v864
    %891 = vst.msk [vmem:[%s3 + $0x60] sm:$0xf] %vm866, %v865
  $region21: #{generator_forward.9} parent=0 // pred_fallthru
    _
  // Predicated region
  $region22: #{generator_forward.9} parent=0 // pred_check
    _
  $region23: #{generator_forward.9} parent=0 // pred_check_branch
    %893 = sbr.rel (0) target = $region25
  $region24: #{generator_forward.9} parent=0 // pred_region
    _
  $region25: #{generator_forward.9} parent=0 // pred_fallthru
    _
  // Predicated region
  $region26: #{generator_forward.9} parent=0 // pred_check
    _
  $region27: #{generator_forward.9} parent=0 // pred_check_branch
    %895 = sbr.rel (0) target = $region29
  $region28: #{generator_forward.9} parent=0 // pred_region
    _
  $region29: #{generator_forward.9} parent=0 // pred_fallthru
    _

// kernel: generator_forward.11
$region0: #{generator_forward.11}
  #allocation0 [shape = 'u32[]', space=smem, size = 0x4, offset = 0x4, fixed_abs, tag = 'smem constant byte address 0x4 - core index']
  #allocation1 [shape = 'u32[72,128]{1,0:T(1,128)}', space=vmem, size = 0x9000, scoped, tag = 'internal scratch']
  %s0 = inlined_call_operand.vmem [shape: bf16[104,128], index: 0, kind: input, shape index: {}]
  %s1 = inlined_call_operand.vmem [shape: f32[1,128], index: 1, kind: input, shape index: {}]
  %s2 = inlined_call_operand.vmem [shape: f32[1,128], index: 2, kind: input, shape index: {}]
  %s3 = inlined_call_operand.vmem [shape: bf16[104,128], index: 3, kind: input, shape index: {}]
  %s4 = inlined_call_operand.vmem [shape: bf16[104,128], index: 4, kind: output, shape index: {}]
  %s5 = sld [smem:[#allocation0]]
  $region26: #{generator_forward.11} parent=0
    _
  %s7 = ssub.s32 1, %s5
  %s8 = scalar_select 0, %s7, %s5
  // Predicated region
  $region2: #{generator_forward.11} parent=0 // pred_check
    _
  $region3: #{generator_forward.11} parent=0 // pred_check_branch
    %10 = sbr.rel (0) target = $region5
  $region4: #{generator_forward.11} parent=0 // pred_region
    _
  $region5: #{generator_forward.11} parent=0 // pred_fallthru
    _
  // Predicated region
  $region6: #{generator_forward.11} parent=0 // pred_check
    _
  $region7: #{generator_forward.11} parent=0 // pred_check_branch
    %12 = sbr.rel (0) target = $region9
  $region8: #{generator_forward.11} parent=0 // pred_region
    _
  $region9: #{generator_forward.11} parent=0 // pred_fallthru
    _
  // Predicated region
  $region10: #{generator_forward.11} parent=0 // pred_check
    _
  $region11: #{generator_forward.11} parent=0 // pred_check_branch
    %14 = sbr.rel (0) target = $region13
  $region12: #{generator_forward.11} parent=0 // pred_region
    _
  $region13: #{generator_forward.11} parent=0 // pred_fallthru
    _
  // Predicated region
  $region14: #{generator_forward.11} parent=0 // pred_check
    _
  $region15: #{generator_forward.11} parent=0 // pred_check_branch
    %16 = sbr.rel (0) target = $region17
  $region16: #{generator_forward.11} parent=0 // pred_region
    _
  $region17: #{generator_forward.11} parent=0 // pred_fallthru
    _
  %v17 = vld [vmem:[%s0] sm:$0xf]
  %v18 = vld [vmem:[%s0 + $0x4] sm:$0xf]
  %v19 = vld [vmem:[%s0 + $0x8] sm:$0xf]
  %v20 = vld [vmem:[%s0 + $0xc] sm:$0xf]
  %v21 = vld [vmem:[%s0 + $0x10] sm:$0xf]
  %v22 = vld [vmem:[%s0 + $0x14] sm:$0xf]
  %v23 = vld [vmem:[%s0 + $0x18] sm:$0xf]
  %v24 = vld [vmem:[%s0 + $0x1c] sm:$0xf]
  %v25 = vld [vmem:[%s0 + $0x20] sm:$0xf]
  %v26 = vld [vmem:[%s0 + $0x24] sm:$0xf]
  %v27 = vld [vmem:[%s0 + $0x28] sm:$0xf]
  %v28 = vld [vmem:[%s0 + $0x2c] sm:$0xf]
  %v29 = vld [vmem:[%s0 + $0x30] sm:$0xf]
  %v30 = vunpack.c.l.bf16 %v17
  %v31 = vunpack.c.l.bf16 %v18
  %v32 = vunpack.c.l.bf16 %v19
  %v33 = vunpack.c.l.bf16 %v20
  %v34 = vunpack.c.l.bf16 %v21
  %v35 = vunpack.c.l.bf16 %v22
  %v36 = vunpack.c.l.bf16 %v23
  %v37 = vunpack.c.l.bf16 %v24
  %v38 = vunpack.c.l.bf16 %v25
  %v39 = vunpack.c.l.bf16 %v26
  %v40 = vunpack.c.l.bf16 %v27
  %v41 = vunpack.c.l.bf16 %v28
  %v42 = vunpack.c.l.bf16 %v29
  %v43 = vld [vmem:[%s3] sm:$0xf]
  %v44 = vld [vmem:[%s3 + $0x4] sm:$0xf]
  %v45 = vld [vmem:[%s3 + $0x8] sm:$0xf]
  %v46 = vld [vmem:[%s3 + $0xc] sm:$0xf]
  %v47 = vld [vmem:[%s3 + $0x10] sm:$0xf]
  %v48 = vld [vmem:[%s3 + $0x14] sm:$0xf]
  %v49 = vld [vmem:[%s3 + $0x18] sm:$0xf]
  %v50 = vld [vmem:[%s3 + $0x1c] sm:$0xf]
  %v51 = vld [vmem:[%s3 + $0x20] sm:$0xf]
  %v52 = vld [vmem:[%s3 + $0x24] sm:$0xf]
  %v53 = vld [vmem:[%s3 + $0x28] sm:$0xf]
  %v54 = vld [vmem:[%s3 + $0x2c] sm:$0xf]
  %v55 = vld [vmem:[%s3 + $0x30] sm:$0xf]
  %v56 = vunpack.c.l.bf16 %v43
  %v57 = vunpack.c.l.bf16 %v44
  %v58 = vunpack.c.l.bf16 %v45
  %v59 = vunpack.c.l.bf16 %v46
  %v60 = vunpack.c.l.bf16 %v47
  %v61 = vunpack.c.l.bf16 %v48
  %v62 = vunpack.c.l.bf16 %v49
  %v63 = vunpack.c.l.bf16 %v50
  %v64 = vunpack.c.l.bf16 %v51
  %v65 = vunpack.c.l.bf16 %v52
  %v66 = vunpack.c.l.bf16 %v53
  %v67 = vunpack.c.l.bf16 %v54
  %v68 = vunpack.c.l.bf16 %v55
  %v69 = vld [vmem:[%s1] sm:$0x1]
  %v71 = vperm.slane %v69, 0
  %v73 = vmul.f32 %v30, %v71
  %v74 = vmul.f32 %v31, %v71
  %v75 = vmul.f32 %v32, %v71
  %v76 = vmul.f32 %v33, %v71
  %v77 = vmul.f32 %v34, %v71
  %v78 = vmul.f32 %v35, %v71
  %v79 = vmul.f32 %v36, %v71
  %v80 = vmul.f32 %v37, %v71
  %v81 = vmul.f32 %v38, %v71
  %v82 = vmul.f32 %v39, %v71
  %v83 = vmul.f32 %v40, %v71
  %v84 = vmul.f32 %v41, %v71
  %v85 = vmul.f32 %v42, %v71
  %v86 = vld [vmem:[%s2] sm:$0x1]
  %v88 = vperm.slane %v86, 0
  %v90 = vadd.f32 %v73, %v88
  %v91 = vadd.f32 %v74, %v88
  %v92 = vadd.f32 %v75, %v88
  %v93 = vadd.f32 %v76, %v88
  %v94 = vadd.f32 %v77, %v88
  %v95 = vadd.f32 %v78, %v88
  %v96 = vadd.f32 %v79, %v88
  %v97 = vadd.f32 %v80, %v88
  %v98 = vadd.f32 %v81, %v88
  %v99 = vadd.f32 %v82, %v88
  %v100 = vadd.f32 %v83, %v88
  %v101 = vadd.f32 %v84, %v88
  %v102 = vadd.f32 %v85, %v88
  %v103 = vadd.f32 %v90, %v56
  %v104 = vadd.f32 %v91, %v57
  %v105 = vadd.f32 %v92, %v58
  %v106 = vadd.f32 %v93, %v59
  %v107 = vadd.f32 %v94, %v60
  %v108 = vadd.f32 %v95, %v61
  %v109 = vadd.f32 %v96, %v62
  %v110 = vadd.f32 %v97, %v63
  %v111 = vadd.f32 %v98, %v64
  %v112 = vadd.f32 %v99, %v65
  %v113 = vadd.f32 %v100, %v66
  %v114 = vadd.f32 %v101, %v67
  %v115 = vadd.f32 %v102, %v68
  %v116 = vpack.c.bf16 %v103, %v103
  %v117 = vpack.c.bf16 %v104, %v104
  %v118 = vpack.c.bf16 %v105, %v105
  %v119 = vpack.c.bf16 %v106, %v106
  %v120 = vpack.c.bf16 %v107, %v107
  %v121 = vpack.c.bf16 %v108, %v108
  %v122 = vpack.c.bf16 %v109, %v109
  %v123 = vpack.c.bf16 %v110, %v110
  %v124 = vpack.c.bf16 %v111, %v111
  %v125 = vpack.c.bf16 %v112, %v112
  %v126 = vpack.c.bf16 %v113, %v113
  %v127 = vpack.c.bf16 %v114, %v114
  %v128 = vpack.c.bf16 %v115, %v115
  %129 = vst [vmem:[%s4] sm:$0xf] %v116
  %130 = vst [vmem:[%s4 + $0x4] sm:$0xf] %v117
  %131 = vst [vmem:[%s4 + $0x8] sm:$0xf] %v118
  %132 = vst [vmem:[%s4 + $0xc] sm:$0xf] %v119
  %133 = vst [vmem:[%s4 + $0x10] sm:$0xf] %v120
  %134 = vst [vmem:[%s4 + $0x14] sm:$0xf] %v121
  %135 = vst [vmem:[%s4 + $0x18] sm:$0xf] %v122
  %136 = vst [vmem:[%s4 + $0x1c] sm:$0xf] %v123
  %137 = vst [vmem:[%s4 + $0x20] sm:$0xf] %v124
  %138 = vst [vmem:[%s4 + $0x24] sm:$0xf] %v125
  %139 = vst [vmem:[%s4 + $0x28] sm:$0xf] %v126
  %140 = vst [vmem:[%s4 + $0x2c] sm:$0xf] %v127
  %141 = vst [vmem:[%s4 + $0x30] sm:$0xf] %v128
  // Predicated region
  $region18: #{generator_forward.11} parent=0 // pred_check
    _
  $region19: #{generator_forward.11} parent=0 // pred_check_branch
    %143 = sbr.rel (0) target = $region21
  $region20: #{generator_forward.11} parent=0 // pred_region
    _
  $region21: #{generator_forward.11} parent=0 // pred_fallthru
    _
  // Predicated region
  $region22: #{generator_forward.11} parent=0 // pred_check
    _
  $region23: #{generator_forward.11} parent=0 // pred_check_branch
    %145 = sbr.rel (0) target = $region25
  $region24: #{generator_forward.11} parent=0 // pred_region
    _
  $region25: #{generator_forward.11} parent=0 // pred_fallthru
    _

// kernel: generator_forward.10
$region0: #{generator_forward.10}
  #allocation0 [shape = 'u32[]', space=smem, size = 0x4, offset = 0x4, fixed_abs, tag = 'smem constant byte address 0x4 - core index']
  #allocation1 [shape = 'u32[72,128]{1,0:T(1,128)}', space=vmem, size = 0x9000, scoped, tag = 'internal scratch']
  #allocation2 [shape = 'f32[200,64]{1,0:T(8,128)}', space=vmem, size = 0x19000, scoped, tag = 'scratch operand']
  %s0 = inlined_call_operand.vmem [shape: bf16[200,640], index: 0, kind: input, shape index: {}]
  %s1 = inlined_call_operand.vmem [shape: bf16[640,64], index: 1, kind: input, shape index: {}]
  %s2 = inlined_call_operand.vmem [shape: f32[1,64], index: 2, kind: input, shape index: {}]
  %s3 = inlined_call_operand.vmem [shape: bf16[200,64], index: 3, kind: output, shape index: {0}]
  %s4 = inlined_call_operand.vmem [shape: f32[1,2,64], index: 4, kind: output, shape index: {1}]
  %5 = xla_tuple %s3, %s4
  %s6 = sld [smem:[#allocation0]]
  $region102: #{generator_forward.10} parent=0
    _
  %s8 = ssub.s32 1, %s6
  %s9 = scalar_select 0, %s8, %s6
  $region1: #{generator_forward.10} parent=0
    #allocation3 [shape = 'u8[102400]{0}', space=vmem, size = 0x19000, scoped, tag = 'input window, operand 0']
    loop: start=0, step=1, limit=7
    $region2: #{generator_forward.10} parent=1 // loop_pre_header
      _
    $region3: #{generator_forward.10} parent=1 // loop_header
      %s11 = sphi 0, %s15
      %p12 = scmp.ge.s32.totalorder %s11, 7
      %s18 = sphi 0, %s37
      %s19 = sphi 0, %s33
      %s20 = sphi 0, %s29
      %s21 = sphi 0, %s18
      %s22 = sphi 0, %s19
      %s23 = sphi 0, %s20
      %s24 = sphi 0, %s21
      %s25 = sphi 0, %s22
      %s26 = sphi 0, %s23
      %s42 = sphi 0, %s44
      %s45 = sphi 0, %s42
      %s46 = sphi 0, %s45
      %s62 = sphi 0, %s46
      %s70 = sphi 0, %s72
      %s73 = sphi 0, %s70
      %s74 = sphi 0, %s73
      %s90 = sphi 0, %s74
      %s96 = sphi 0, %s98
      %s99 = sphi 0, %s96
      %s100 = sphi 0, %s99
      %s116 = sphi 0, %s100
      %s124 = sphi 0, %s126
      %s127 = sphi 0, %s124
      %s128 = sphi 0, %s127
      %s144 = sphi 0, %s128
      %s152 = sphi 0, %s154
      %s155 = sphi 0, %s152
      %s156 = sphi 0, %s155
      %s172 = sphi 0, %s156
    $region4: #{generator_forward.10} parent=1 // loop_header_branch
      %14 = sbr.rel (%p12) target = $region8
    $region5: #{generator_forward.10} parent=1 // loop_body
      %s16 = ssub.s32 %s11, 1
      %s17 = ssub.s32 %s11, 2
      %s27 = sadd.s32 1, %s20
      %p28 = scmp.ge.s32.totalorder %s27, 5
      %s29 = scalar_select %p28, 0, %s27
      %s30 = sadd.s32 1, %s19
      %s31 = scalar_select %p28, %s30, %s19
      %p32 = scmp.ge.s32.totalorder %s31, 1
      %s33 = scalar_select %p32, 0, %s31
      %s34 = sadd.s32 1, %s18
      %s35 = scalar_select %p32, %s34, %s18
      %p36 = scmp.ge.s32.totalorder %s35, 1
      %s37 = scalar_select %p36, 0, %s35
      %s38 = ssub.s32 %s18, %s37
      %s39 = ssub.s32 %s20, %s29
      %s40 = sor.u32 %s38, %s39
      %p41 = scmp.eq.s32.totalorder %s40, 0
      %s43 = sadd.s32 %s42, 1
      %s44 = scalar_select %p41, %s42, %s43
      %p47 = pneg %p41
      %p48 = scmp.eq.s32.totalorder %s11, 4
      %p49 = por %p47, %p48
      %p50 = scmp.ne.s32.totalorder %s42, %s45
      %p51 = scmp.eq.s32.totalorder %s11, 0
      %p52 = por %p50, %p51
      %p53 = scmp.ne.s32.totalorder %s42, %s45
      %p54 = scmp.eq.s32.totalorder %s16, 4
      %p55 = por %p53, %p54
      %p56 = scmp.ne.s32.totalorder %s45, %s46
      %p57 = scmp.eq.s32.totalorder %s16, 0
      %p58 = por %p56, %p57
      %p59 = scmp.ne.s32.totalorder %s45, %s46
      %p60 = scmp.eq.s32.totalorder %s17, 4
      %p61 = por %p59, %p60
      %p63 = scmp.ne.s32.totalorder %s46, %s62
      %p64 = scmp.eq.s32.totalorder %s17, 0
      %p65 = por %p63, %p64
      %s66 = ssub.s32 %s20, %s29
      %s67 = ssub.s32 %s19, %s33
      %s68 = sor.u32 %s66, %s67
      %p69 = scmp.eq.s32.totalorder %s68, 0
      %s71 = sadd.s32 %s70, 1
      %s72 = scalar_select %p69, %s70, %s71
      %p75 = pneg %p69
      %p76 = scmp.eq.s32.totalorder %s11, 4
      %p77 = por %p75, %p76
      %p78 = scmp.ne.s32.totalorder %s70, %s73
      %p79 = scmp.eq.s32.totalorder %s11, 0
      %p80 = por %p78, %p79
      %p81 = scmp.ne.s32.totalorder %s70, %s73
      %p82 = scmp.eq.s32.totalorder %s16, 4
      %p83 = por %p81, %p82
      %p84 = scmp.ne.s32.totalorder %s73, %s74
      %p85 = scmp.eq.s32.totalorder %s16, 0
      %p86 = por %p84, %p85
      %p87 = scmp.ne.s32.totalorder %s73, %s74
      %p88 = scmp.eq.s32.totalorder %s17, 4
      %p89 = por %p87, %p88
      %p91 = scmp.ne.s32.totalorder %s74, %s90
      %p92 = scmp.eq.s32.totalorder %s17, 0
      %p93 = por %p91, %p92
      %s94 = ssub.s32 %s19, %s33
      %p95 = scmp.eq.s32.totalorder %s94, 0
      %s97 = sadd.s32 %s96, 1
      %s98 = scalar_select %p95, %s96, %s97
      %p101 = pneg %p95
      %p102 = scmp.eq.s32.totalorder %s11, 4
      %p103 = por %p101, %p102
      %p104 = scmp.ne.s32.totalorder %s96, %s99
      %p105 = scmp.eq.s32.totalorder %s11, 0
      %p106 = por %p104, %p105
      %p107 = scmp.ne.s32.totalorder %s96, %s99
      %p108 = scmp.eq.s32.totalorder %s16, 4
      %p109 = por %p107, %p108
      %p110 = scmp.ne.s32.totalorder %s99, %s100
      %p111 = scmp.eq.s32.totalorder %s16, 0
      %p112 = por %p110, %p111
      %p113 = scmp.ne.s32.totalorder %s99, %s100
      %p114 = scmp.eq.s32.totalorder %s17, 4
      %p115 = por %p113, %p114
      %p117 = scmp.ne.s32.totalorder %s100, %s116
      %p118 = scmp.eq.s32.totalorder %s17, 0
      %p119 = por %p117, %p118
      %s120 = ssub.s32 %s18, %s37
      %s121 = ssub.s32 %s19, %s33
      %s122 = sor.u32 %s120, %s121
      %p123 = scmp.eq.s32.totalorder %s122, 0
      %s125 = sadd.s32 %s124, 1
      %s126 = scalar_select %p123, %s124, %s125
      %p129 = pneg %p123
      %p130 = scmp.eq.s32.totalorder %s11, 4
      %p131 = por %p129, %p130
      %p132 = scmp.ne.s32.totalorder %s124, %s127
      %p133 = scmp.eq.s32.totalorder %s11, 0
      %p134 = por %p132, %p133
      %p135 = scmp.ne.s32.totalorder %s124, %s127
      %p136 = scmp.eq.s32.totalorder %s16, 4
      %p137 = por %p135, %p136
      %p138 = scmp.ne.s32.totalorder %s127, %s128
      %p139 = scmp.eq.s32.totalorder %s16, 0
      %p140 = por %p138, %p139
      %p141 = scmp.ne.s32.totalorder %s127, %s128
      %p142 = scmp.eq.s32.totalorder %s17, 4
      %p143 = por %p141, %p142
      %p145 = scmp.ne.s32.totalorder %s128, %s144
      %p146 = scmp.eq.s32.totalorder %s17, 0
      %p147 = por %p145, %p146
      %s148 = ssub.s32 %s18, %s37
      %s149 = ssub.s32 %s19, %s33
      %s150 = sor.u32 %s148, %s149
      %p151 = scmp.eq.s32.totalorder %s150, 0
      %s153 = sadd.s32 %s152, 1
      %s154 = scalar_select %p151, %s152, %s153
      %p157 = pneg %p151
      %p158 = scmp.eq.s32.totalorder %s11, 4
      %p159 = por %p157, %p158
      %p160 = scmp.ne.s32.totalorder %s152, %s155
      %p161 = scmp.eq.s32.totalorder %s11, 0
      %p162 = por %p160, %p161
      %p163 = scmp.ne.s32.totalorder %s152, %s155
      %p164 = scmp.eq.s32.totalorder %s16, 4
      %p165 = por %p163, %p164
      %p166 = scmp.ne.s32.totalorder %s155, %s156
      %p167 = scmp.eq.s32.totalorder %s16, 0
      %p168 = por %p166, %p167
      %p169 = scmp.ne.s32.totalorder %s155, %s156
      %p170 = scmp.eq.s32.totalorder %s17, 4
      %p171 = por %p169, %p170
      %p173 = scmp.ne.s32.totalorder %s156, %s172
      %p174 = scmp.eq.s32.totalorder %s17, 0
      %p175 = por %p173, %p174
      %p176 = scmp.le.s32.totalorder 1, %s11
      %p177 = scmp.lt.s32.totalorder %s11, 6
      %p178 = pnand %p176, %p177
      %p179 = pneg %p178
      // Predicated region
      $region9: #{generator_forward.10} parent=5 // pred_check
        _
      $region10: #{generator_forward.10} parent=5 // pred_check_branch
        %181 = sbr.rel (%p178) target = $region12
      $region11: #{generator_forward.10} parent=5 // pred_region
        %s182 = ssub.s32 %s11, 1
        // Predicated region
        $region13: #{generator_forward.10} parent=11 // pred_check
          %p183 = pneg %p112
        $region14: #{generator_forward.10} parent=11 // pred_check_branch
          %185 = sbr.rel (%p183) target = $region16
        $region15: #{generator_forward.10} parent=11 // pred_region
          %p186 = scmp.lt.s32.totalorder %s22, 0
          %s187 = scalar_select %p186, %s22, 0
          %s188 = scalar_lea.vmem %s2, %s187
        $region16: #{generator_forward.10} parent=11 // pred_fallthru
          _
      $region12: #{generator_forward.10} parent=5 // pred_fallthru
        _
      %p189 = scmp.lt.s32.totalorder %s11, 5
      // Predicated region
      $region17: #{generator_forward.10} parent=5 // pred_check
        %p190 = pneg %p189
      $region18: #{generator_forward.10} parent=5 // pred_check_branch
        %192 = sbr.rel (%p190) target = $region20
      $region19: #{generator_forward.10} parent=5 // pred_region
        // Predicated region
        $region21: #{generator_forward.10} parent=19 // pred_check
          %p193 = pneg %p52
        $region22: #{generator_forward.10} parent=19 // pred_check_branch
          %195 = sbr.rel (%p193) target = $region24
        $region23: #{generator_forward.10} parent=19 // pred_region
          %s196 = sand.u32 %s42, 1
          %s197 = sand.u32 %s42, 1
          %s198 = smul.addr %s197, 100
          %s199 = scalar_lea.vmem [#allocation3], %s198
          %s200 = smul.u32 25, %s18
          %s201 = smul.addr %s200, 5
          %s202 = sadd.s32 %s20, %s201
          %s203 = smul.addr %s202, 4
          %s204 = scalar_lea.vmem %s0, %s203
          // Predicated region
          $region25: #{generator_forward.10} parent=23 // pred_check
            _
          $region26: #{generator_forward.10} parent=23 // pred_check_branch
            %206 = sbr.rel (0) target = $region28
          $region27: #{generator_forward.10} parent=23 // pred_region
            // Predicated region
            $region29: #{generator_forward.10} parent=27 // pred_check
              _
            $region30: #{generator_forward.10} parent=27 // pred_check_branch
              %208 = sbr.rel target = $region32
            $region31: #{generator_forward.10} parent=27 // pred_region
              // Predicated region
              $region44: #{generator_forward.10} parent=31 // pred_check
                _
              $region45: #{generator_forward.10} parent=31 // pred_check_branch
                %272 = sbr.rel (0) target = $region47
              $region46: #{generator_forward.10} parent=31 // pred_region
                loop: start=0, step=1, limit=1
                $region48: #{generator_forward.10} parent=46 // loop_pre_header
                  _
                $region49: #{generator_forward.10} parent=46 // loop_header
                  %s274 = sphi 0, %s278
                  %p275 = scmp.ge.s32.totalorder %s274, 1
                  %s279 = sphi %s204, %s204
                  %s280 = sphi %s199, %s199
                $region50: #{generator_forward.10} parent=46 // loop_header_branch
                  %277 = sbr.rel (%p275) target = $region54
                $region51: #{generator_forward.10} parent=46 // loop_body
                  _
                $region52: #{generator_forward.10} parent=46 // loop_footer
                  %s278 = sadd.s32 1, %s274
                $region53: #{generator_forward.10} parent=46 // loop_footer_branch
                  %273 = sbr.rel target = $region49
                $region54: #{generator_forward.10} parent=46 // loop_exit
                  _
                %s282 = ssub.s32 16, 1
                loop: start=0, step=1, limit=1
                $region55: #{generator_forward.10} parent=46 // loop_pre_header
                  _
                $region56: #{generator_forward.10} parent=46 // loop_header
                  %s284 = sphi 0, %s288
                  %p285 = scmp.ge.s32.totalorder %s284, 1
                  %s289 = sphi %s204, %s204
                  %s290 = sphi %s199, %s199
                $region57: #{generator_forward.10} parent=46 // loop_header_branch
                  %287 = sbr.rel (%p285) target = $region61
                $region58: #{generator_forward.10} parent=46 // loop_body
                  %v291 = vld [vmem:[%s289] sm:%s282]
                  %292 = vst [vmem:[%s290] sm:%s282] %v291
                  %v293 = vld [vmem:[%s289 + $0x14] sm:%s282]
                  %294 = vst [vmem:[%s290 + $0x4] sm:%s282] %v293
                  %v295 = vld [vmem:[%s289 + $0x28] sm:%s282]
                  %296 = vst [vmem:[%s290 + $0x8] sm:%s282] %v295
                  %v297 = vld [vmem:[%s289 + $0x3c] sm:%s282]
                  %298 = vst [vmem:[%s290 + $0xc] sm:%s282] %v297
                  %v299 = vld [vmem:[%s289 + $0x50] sm:%s282]
                  %300 = vst [vmem:[%s290 + $0x10] sm:%s282] %v299
                  %v301 = vld [vmem:[%s289 + $0x64] sm:%s282]
                  %302 = vst [vmem:[%s290 + $0x14] sm:%s282] %v301
                  %v303 = vld [vmem:[%s289 + $0x78] sm:%s282]
                  %304 = vst [vmem:[%s290 + $0x18] sm:%s282] %v303
                  %v305 = vld [vmem:[%s289 + $0x8c] sm:%s282]
                  %306 = vst [vmem:[%s290 + $0x1c] sm:%s282] %v305
                  %v307 = vld [vmem:[%s289 + $0xa0] sm:%s282]
                  %308 = vst [vmem:[%s290 + $0x20] sm:%s282] %v307
                  %v309 = vld [vmem:[%s289 + $0xb4] sm:%s282]
                  %310 = vst [vmem:[%s290 + $0x24] sm:%s282] %v309
                  %v311 = vld [vmem:[%s289 + $0xc8] sm:%s282]
                  %312 = vst [vmem:[%s290 + $0x28] sm:%s282] %v311
                  %v313 = vld [vmem:[%s289 + $0xdc] sm:%s282]
                  %314 = vst [vmem:[%s290 + $0x2c] sm:%s282] %v313
                  %v315 = vld [vmem:[%s289 + $0xf0] sm:%s282]
                  %316 = vst [vmem:[%s290 + $0x30] sm:%s282] %v315
                  %v317 = vld [vmem:[%s289 + $0x104] sm:%s282]
                  %318 = vst [vmem:[%s290 + $0x34] sm:%s282] %v317
                  %v319 = vld [vmem:[%s289 + $0x118] sm:%s282]
                  %320 = vst [vmem:[%s290 + $0x38] sm:%s282] %v319
                  %v321 = vld [vmem:[%s289 + $0x12c] sm:%s282]
                  %322 = vst [vmem:[%s290 + $0x3c] sm:%s282] %v321
                  %v323 = vld [vmem:[%s289 + $0x140] sm:%s282]
                  %324 = vst [vmem:[%s290 + $0x40] sm:%s282] %v323
                  %v325 = vld [vmem:[%s289 + $0x154] sm:%s282]
                  %326 = vst [vmem:[%s290 + $0x44] sm:%s282] %v325
                  %v327 = vld [vmem:[%s289 + $0x168] sm:%s282]
                  %328 = vst [vmem:[%s290 + $0x48] sm:%s282] %v327
                  %v329 = vld [vmem:[%s289 + $0x17c] sm:%s282]
                  %330 = vst [vmem:[%s290 + $0x4c] sm:%s282] %v329
                  %v331 = vld [vmem:[%s289 + $0x190] sm:%s282]
                  %332 = vst [vmem:[%s290 + $0x50] sm:%s282] %v331
                  %v333 = vld [vmem:[%s289 + $0x1a4] sm:%s282]
                  %334 = vst [vmem:[%s290 + $0x54] sm:%s282] %v333
                  %v335 = vld [vmem:[%s289 + $0x1b8] sm:%s282]
                  %336 = vst [vmem:[%s290 + $0x58] sm:%s282] %v335
                  %v337 = vld [vmem:[%s289 + $0x1cc] sm:%s282]
                  %338 = vst [vmem:[%s290 + $0x5c] sm:%s282] %v337
                  %v339 = vld [vmem:[%s289 + $0x1e0] sm:%s282]
                  %340 = vst [vmem:[%s290 + $0x60] sm:%s282] %v339
                $region59: #{generator_forward.10} parent=46 // loop_footer
                  %s288 = sadd.s32 1, %s284
                $region60: #{generator_forward.10} parent=46 // loop_footer_branch
                  %283 = sbr.rel target = $region56
                $region61: #{generator_forward.10} parent=46 // loop_exit
                  _
              $region47: #{generator_forward.10} parent=31 // pred_fallthru
                _
            $region32: #{generator_forward.10} parent=27 // pred_fallthru
              _
            // Predicated region
            $region33: #{generator_forward.10} parent=27 // pred_check
              _
            $region34: #{generator_forward.10} parent=27 // pred_check_branch
              %210 = sbr.rel (0) target = $region36
            $region35: #{generator_forward.10} parent=27 // pred_region
              %s212 = ssub.s32 16, 1
              loop: start=0, step=1, limit=1
              $region37: #{generator_forward.10} parent=35 // loop_pre_header
                _
              $region38: #{generator_forward.10} parent=35 // loop_header
                %s214 = sphi 0, %s218
                %p215 = scmp.ge.s32.totalorder %s214, 1
                %s219 = sphi %s204, %s204
                %s220 = sphi %s199, %s199
              $region39: #{generator_forward.10} parent=35 // loop_header_branch
                %217 = sbr.rel (%p215) target = $region43
              $region40: #{generator_forward.10} parent=35 // loop_body
                %v221 = vld [vmem:[%s219] sm:%s212]
                %222 = vst [vmem:[%s220] sm:%s212] %v221
                %v223 = vld [vmem:[%s219 + $0x14] sm:%s212]
                %224 = vst [vmem:[%s220 + $0x4] sm:%s212] %v223
                %v225 = vld [vmem:[%s219 + $0x28] sm:%s212]
                %226 = vst [vmem:[%s220 + $0x8] sm:%s212] %v225
                %v227 = vld [vmem:[%s219 + $0x3c] sm:%s212]
                %228 = vst [vmem:[%s220 + $0xc] sm:%s212] %v227
                %v229 = vld [vmem:[%s219 + $0x50] sm:%s212]
                %230 = vst [vmem:[%s220 + $0x10] sm:%s212] %v229
                %v231 = vld [vmem:[%s219 + $0x64] sm:%s212]
                %232 = vst [vmem:[%s220 + $0x14] sm:%s212] %v231
                %v233 = vld [vmem:[%s219 + $0x78] sm:%s212]
                %234 = vst [vmem:[%s220 + $0x18] sm:%s212] %v233
                %v235 = vld [vmem:[%s219 + $0x8c] sm:%s212]
                %236 = vst [vmem:[%s220 + $0x1c] sm:%s212] %v235
                %v237 = vld [vmem:[%s219 + $0xa0] sm:%s212]
                %238 = vst [vmem:[%s220 + $0x20] sm:%s212] %v237
                %v239 = vld [vmem:[%s219 + $0xb4] sm:%s212]
                %240 = vst [vmem:[%s220 + $0x24] sm:%s212] %v239
                %v241 = vld [vmem:[%s219 + $0xc8] sm:%s212]
                %242 = vst [vmem:[%s220 + $0x28] sm:%s212] %v241
                %v243 = vld [vmem:[%s219 + $0xdc] sm:%s212]
                %244 = vst [vmem:[%s220 + $0x2c] sm:%s212] %v243
                %v245 = vld [vmem:[%s219 + $0xf0] sm:%s212]
                %246 = vst [vmem:[%s220 + $0x30] sm:%s212] %v245
                %v247 = vld [vmem:[%s219 + $0x104] sm:%s212]
                %248 = vst [vmem:[%s220 + $0x34] sm:%s212] %v247
                %v249 = vld [vmem:[%s219 + $0x118] sm:%s212]
                %250 = vst [vmem:[%s220 + $0x38] sm:%s212] %v249
                %v251 = vld [vmem:[%s219 + $0x12c] sm:%s212]
                %252 = vst [vmem:[%s220 + $0x3c] sm:%s212] %v251
                %v253 = vld [vmem:[%s219 + $0x140] sm:%s212]
                %254 = vst [vmem:[%s220 + $0x40] sm:%s212] %v253
                %v255 = vld [vmem:[%s219 + $0x154] sm:%s212]
                %256 = vst [vmem:[%s220 + $0x44] sm:%s212] %v255
                %v257 = vld [vmem:[%s219 + $0x168] sm:%s212]
                %258 = vst [vmem:[%s220 + $0x48] sm:%s212] %v257
                %v259 = vld [vmem:[%s219 + $0x17c] sm:%s212]
                %260 = vst [vmem:[%s220 + $0x4c] sm:%s212] %v259
                %v261 = vld [vmem:[%s219 + $0x190] sm:%s212]
                %262 = vst [vmem:[%s220 + $0x50] sm:%s212] %v261
                %v263 = vld [vmem:[%s219 + $0x1a4] sm:%s212]
                %264 = vst [vmem:[%s220 + $0x54] sm:%s212] %v263
                %v265 = vld [vmem:[%s219 + $0x1b8] sm:%s212]
                %266 = vst [vmem:[%s220 + $0x58] sm:%s212] %v265
                %v267 = vld [vmem:[%s219 + $0x1cc] sm:%s212]
                %268 = vst [vmem:[%s220 + $0x5c] sm:%s212] %v267
                %v269 = vld [vmem:[%s219 + $0x1e0] sm:%s212]
                %270 = vst [vmem:[%s220 + $0x60] sm:%s212] %v269
              $region41: #{generator_forward.10} parent=35 // loop_footer
                %s218 = sadd.s32 1, %s214
              $region42: #{generator_forward.10} parent=35 // loop_footer_branch
                %213 = sbr.rel target = $region38
              $region43: #{generator_forward.10} parent=35 // loop_exit
                _
            $region36: #{generator_forward.10} parent=27 // pred_fallthru
              _
          $region28: #{generator_forward.10} parent=23 // pred_fallthru
            _
          %341 = vnop
        $region24: #{generator_forward.10} parent=19 // pred_fallthru
          _
        // Predicated region
        $region62: #{generator_forward.10} parent=19 // pred_check
          %p342 = pneg %p80
        $region63: #{generator_forward.10} parent=19 // pred_check_branch
          %344 = sbr.rel (%p342) target = $region65
        $region64: #{generator_forward.10} parent=19 // pred_region
          %s345 = smul.u32 16, %s20
          %p346 = scmp.lt.s32.totalorder %s345, 79
          %s347 = scalar_select %p346, %s345, 79
          %p348 = scmp.lt.s32.totalorder %s19, 0
          %s349 = scalar_select %p348, %s19, 0
          %s350 = sadd.s32 %s349, %s347
          %s351 = smul.addr %s350, 4
          %s352 = scalar_lea.vmem %s1, %s351
          %s353 = smul.u32 16, %s20
        $region65: #{generator_forward.10} parent=19 // pred_fallthru
          _
      $region20: #{generator_forward.10} parent=5 // pred_fallthru
        _
      %p354 = scmp.le.s32.totalorder 1, %s11
      %p355 = scmp.lt.s32.totalorder %s11, 6
      %p356 = pnand %p354, %p355
      %p357 = pneg %p356
      // Predicated region
      $region66: #{generator_forward.10} parent=5 // pred_check
        _
      $region67: #{generator_forward.10} parent=5 // pred_check_branch
        %359 = sbr.rel (%p356) target = $region69
      $region68: #{generator_forward.10} parent=5 // pred_region
        %s360 = ssub.s32 %s11, 1
        %s361 = sand.u32 %s45, 1
        %s362 = sand.u32 %s45, 1
        %s363 = smul.addr %s362, 100
        %s364 = scalar_lea.vmem [#allocation3], %s363
        // Predicated region
        $region70: #{generator_forward.10} parent=68 // pred_check
          %p365 = pneg %p58
        $region71: #{generator_forward.10} parent=68 // pred_check_branch
          %367 = sbr.rel (%p365) target = $region73
        $region72: #{generator_forward.10} parent=68 // pred_region
          _
        $region73: #{generator_forward.10} parent=68 // pred_fallthru
          _
        %s368 = sand.u32 %s45, 1
        %s369 = sand.u32 %s45, 1
        %s370 = smul.addr %s369, 100
        %s371 = scalar_lea.vmem [#allocation3], %s370
        %p372 = pneg %p58
        %p373 = pneg %p55
        %s374 = smul.u32 16, %s23
        %p375 = scmp.lt.s32.totalorder %s374, 79
        %s376 = scalar_select %p375, %s374, 79
        %p377 = scmp.lt.s32.totalorder %s22, 0
        %s378 = scalar_select %p377, %s22, 0
        %s379 = sadd.s32 %s378, %s376
        %s380 = smul.addr %s379, 4
        %s381 = scalar_lea.vmem %s1, %s380
        %p382 = pneg %p86
        %p383 = pneg %p83
        %p384 = scmp.lt.s32.totalorder %s22, 0
        %s385 = scalar_select %p384, %s22, 0
        %s386 = scalar_lea.vmem %s2, %s385
        %p387 = pneg %p112
        %p388 = pneg %p109
        %p389 = pneg %p140
        %p390 = pneg %p137
        %s391 = smul.u32 25, %s21
        %p392 = scmp.lt.s32.totalorder %s391, 24
        %s393 = scalar_select %p392, %s391, 24
        %p394 = scmp.lt.s32.totalorder %s22, 0
        %s395 = scalar_select %p394, %s22, 0
        %s396 = sadd.s32 %s395, %s393
        %s397 = smul.addr %s396, 4
        %s398 = scalar_lea.vmem %s3, %s397
        %p399 = pneg %p168
        %p400 = pneg %p165
        %p401 = scmp.lt.s32.totalorder %s21, 0
        %s402 = scalar_select %p401, %s21, 0
        %p403 = scmp.lt.s32.totalorder %s22, 0
        %s404 = scalar_select %p403, %s22, 0
        %s405 = sadd.s32 %s404, %s402
        %s406 = smul.addr %s405, 2
        %s407 = scalar_lea.vmem %s4, %s406
        %s408 = smul.u32 25, %s21
        %s409 = smul.u32 16, %s23
        %p410 = scmp.lt.s32.totalorder %s409, 79
        %s411 = scalar_select %p410, %s409, 79
        %p412 = scmp.lt.s32.totalorder %s22, 0
        %s413 = scalar_select %p412, %s22, 0
        %s414 = sadd.s32 %s413, %s411
        %s415 = smul.addr %s414, 4
        %s416 = scalar_lea.vmem %s1, %s415
        %s417 = smul.u32 16, %s23
        %p418 = scmp.lt.s32.totalorder %s22, 0
        %s419 = scalar_select %p418, %s22, 0
        %s420 = scalar_lea.vmem %s2, %s419
        %s421 = smul.u32 25, %s21
        %p422 = scmp.lt.s32.totalorder %s421, 24
        %s423 = scalar_select %p422, %s421, 24
        %p424 = scmp.lt.s32.totalorder %s22, 0
        %s425 = scalar_select %p424, %s22, 0
        %s426 = sadd.s32 %s425, %s423
        %s427 = smul.addr %s426, 4
        %s428 = scalar_lea.vmem %s3, %s427
        %s429 = smul.u32 25, %s21
        %p430 = scmp.lt.s32.totalorder %s21, 0
        %s431 = scalar_select %p430, %s21, 0
        %p432 = scmp.lt.s32.totalorder %s22, 0
        %s433 = scalar_select %p432, %s22, 0
        %s434 = sadd.s32 %s433, %s431
        %s435 = smul.addr %s434, 2
        %s436 = scalar_lea.vmem %s4, %s435
        %p437 = scmp.eq.s32.totalorder %s23, 0
        // Predicated region
        $region74: #{generator_forward.10} parent=68 // pred_check
          %p438 = pneg %p437
        $region75: #{generator_forward.10} parent=68 // pred_check_branch
          %440 = sbr.rel (%p438) target = $region77
        $region76: #{generator_forward.10} parent=68 // pred_region
          %vm441 = vcmask 523264
          %442 = vst.msk [vmem:[#allocation2] sm:$0xff] %vm441, 0.0
          %443 = vst.msk [vmem:[#allocation2 + $0x8] sm:$0xff] %vm441, 0.0
          %444 = vst.msk [vmem:[#allocation2 + $0x10] sm:$0xff] %vm441, 0.0
          %445 = vst.msk [vmem:[#allocation2 + $0x18] sm:$0xff] %vm441, 0.0
          %446 = vst.msk [vmem:[#allocation2 + $0x20] sm:$0xff] %vm441, 0.0
          %447 = vst.msk [vmem:[#allocation2 + $0x28] sm:$0xff] %vm441, 0.0
          %448 = vst.msk [vmem:[#allocation2 + $0x30] sm:$0xff] %vm441, 0.0
          %449 = vst.msk [vmem:[#allocation2 + $0x38] sm:$0xff] %vm441, 0.0
          %450 = vst.msk [vmem:[#allocation2 + $0x40] sm:$0xff] %vm441, 0.0
          %451 = vst.msk [vmem:[#allocation2 + $0x48] sm:$0xff] %vm441, 0.0
          %452 = vst.msk [vmem:[#allocation2 + $0x50] sm:$0xff] %vm441, 0.0
          %453 = vst.msk [vmem:[#allocation2 + $0x58] sm:$0xff] %vm441, 0.0
          %454 = vst.msk [vmem:[#allocation2 + $0x60] sm:$0xff] %vm441, 0.0
          %455 = vst.msk [vmem:[#allocation2 + $0x68] sm:$0xff] %vm441, 0.0
          %456 = vst.msk [vmem:[#allocation2 + $0x70] sm:$0xff] %vm441, 0.0
          %457 = vst.msk [vmem:[#allocation2 + $0x78] sm:$0xff] %vm441, 0.0
          %458 = vst.msk [vmem:[#allocation2 + $0x80] sm:$0xff] %vm441, 0.0
          %459 = vst.msk [vmem:[#allocation2 + $0x88] sm:$0xff] %vm441, 0.0
          %460 = vst.msk [vmem:[#allocation2 + $0x90] sm:$0xff] %vm441, 0.0
          %461 = vst.msk [vmem:[#allocation2 + $0x98] sm:$0xff] %vm441, 0.0
          %462 = vst.msk [vmem:[#allocation2 + $0xa0] sm:$0xff] %vm441, 0.0
          %463 = vst.msk [vmem:[#allocation2 + $0xa8] sm:$0xff] %vm441, 0.0
          %464 = vst.msk [vmem:[#allocation2 + $0xb0] sm:$0xff] %vm441, 0.0
          %465 = vst.msk [vmem:[#allocation2 + $0xb8] sm:$0xff] %vm441, 0.0
          %466 = vst.msk [vmem:[#allocation2 + $0xc0] sm:$0xff] %vm441, 0.0
        $region77: #{generator_forward.10} parent=68 // pred_fallthru
          _
        %v467 = vld [vmem:[#allocation2] sm:$0xff]
        %v468 = vld [vmem:[#allocation2 + $0x8] sm:$0xff]
        %v469 = vld [vmem:[#allocation2 + $0x10] sm:$0xff]
        %v470 = vld [vmem:[#allocation2 + $0x18] sm:$0xff]
        %v471 = vld [vmem:[#allocation2 + $0x20] sm:$0xff]
        %v472 = vld [vmem:[#allocation2 + $0x28] sm:$0xff]
        %v473 = vld [vmem:[#allocation2 + $0x30] sm:$0xff]
        %v474 = vld [vmem:[#allocation2 + $0x38] sm:$0xff]
        %v475 = vld [vmem:[#allocation2 + $0x40] sm:$0xff]
        %v476 = vld [vmem:[#allocation2 + $0x48] sm:$0xff]
        %v477 = vld [vmem:[#allocation2 + $0x50] sm:$0xff]
        %v478 = vld [vmem:[#allocation2 + $0x58] sm:$0xff]
        %v479 = vld [vmem:[#allocation2 + $0x60] sm:$0xff]
        %v480 = vld [vmem:[#allocation2 + $0x68] sm:$0xff]
        %v481 = vld [vmem:[#allocation2 + $0x70] sm:$0xff]
        %v482 = vld [vmem:[#allocation2 + $0x78] sm:$0xff]
        %v483 = vld [vmem:[#allocation2 + $0x80] sm:$0xff]
        %v484 = vld [vmem:[#allocation2 + $0x88] sm:$0xff]
        %v485 = vld [vmem:[#allocation2 + $0x90] sm:$0xff]
        %v486 = vld [vmem:[#allocation2 + $0x98] sm:$0xff]
        %v487 = vld [vmem:[#allocation2 + $0xa0] sm:$0xff]
        %v488 = vld [vmem:[#allocation2 + $0xa8] sm:$0xff]
        %v489 = vld [vmem:[#allocation2 + $0xb0] sm:$0xff]
        %v490 = vld [vmem:[#allocation2 + $0xb8] sm:$0xff]
        %v491 = vld [vmem:[#allocation2 + $0xc0] sm:$0xff]
        %v492 = vld [vmem:[%s364] sm:$0xf]
        %v493 = vld [vmem:[%s364 + $0x4] sm:$0xf]
        %v494 = vld [vmem:[%s364 + $0x8] sm:$0xf]
        %v495 = vld [vmem:[%s364 + $0xc] sm:$0xf]
        %v496 = vld [vmem:[%s364 + $0x10] sm:$0xf]
        %v497 = vld [vmem:[%s364 + $0x14] sm:$0xf]
        %v498 = vld [vmem:[%s364 + $0x18] sm:$0xf]
        %v499 = vld [vmem:[%s364 + $0x1c] sm:$0xf]
        %v500 = vld [vmem:[%s364 + $0x20] sm:$0xf]
        %v501 = vld [vmem:[%s364 + $0x24] sm:$0xf]
        %v502 = vld [vmem:[%s364 + $0x28] sm:$0xf]
        %v503 = vld [vmem:[%s364 + $0x2c] sm:$0xf]
        %v504 = vld [vmem:[%s364 + $0x30] sm:$0xf]
        %v505 = vld [vmem:[%s364 + $0x34] sm:$0xf]
        %v506 = vld [vmem:[%s364 + $0x38] sm:$0xf]
        %v507 = vld [vmem:[%s364 + $0x3c] sm:$0xf]
        %v508 = vld [vmem:[%s364 + $0x40] sm:$0xf]
        %v509 = vld [vmem:[%s364 + $0x44] sm:$0xf]
        %v510 = vld [vmem:[%s364 + $0x48] sm:$0xf]
        %v511 = vld [vmem:[%s364 + $0x4c] sm:$0xf]
        %v512 = vld [vmem:[%s364 + $0x50] sm:$0xf]
        %v513 = vld [vmem:[%s364 + $0x54] sm:$0xf]
        %v514 = vld [vmem:[%s364 + $0x58] sm:$0xf]
        %v515 = vld [vmem:[%s364 + $0x5c] sm:$0xf]
        %v516 = vld [vmem:[%s364 + $0x60] sm:$0xf]
        %v517 = vld [vmem:[%s416] sm:$0xf]
        %v518 = vld [vmem:[%s416 + $0x4] sm:$0xf]
        %v519 = vld [vmem:[%s416 + $0x8] sm:$0xf]
        %v520 = vld [vmem:[%s416 + $0xc] sm:$0xf]
        %v521 = vld [vmem:[%s416 + $0x10] sm:$0xf]
        %v522 = vld [vmem:[%s416 + $0x14] sm:$0xf]
        %v523 = vld [vmem:[%s416 + $0x18] sm:$0xf]
        %v524 = vld [vmem:[%s416 + $0x1c] sm:$0xf]
        %v525 = vld [vmem:[%s416 + $0x20] sm:$0xf]
        %v526 = vld [vmem:[%s416 + $0x24] sm:$0xf]
        %v527 = vld [vmem:[%s416 + $0x28] sm:$0xf]
        %v528 = vld [vmem:[%s416 + $0x2c] sm:$0xf]
        %v529 = vld [vmem:[%s416 + $0x30] sm:$0xf]
        %v530 = vld [vmem:[%s416 + $0x34] sm:$0xf]
        %v531 = vld [vmem:[%s416 + $0x38] sm:$0xf]
        %v532 = vld [vmem:[%s416 + $0x3c] sm:$0xf]
        %v558 = vunpack.c.l.b16 %v492
        %v559 = vunpack.c.l.b16 %v493
        %v560 = vunpack.c.l.b16 %v494
        %v561 = vunpack.c.l.b16 %v495
        %v562 = vunpack.c.l.b16 %v496
        %v563 = vunpack.c.l.b16 %v497
        %v564 = vunpack.c.l.b16 %v498
        %v565 = vunpack.c.l.b16 %v499
        %v566 = vunpack.c.l.b16 %v500
        %v567 = vunpack.c.l.b16 %v501
        %v568 = vunpack.c.l.b16 %v502
        %v569 = vunpack.c.l.b16 %v503
        %v570 = vunpack.c.l.b16 %v504
        %v571 = vunpack.c.l.b16 %v505
        %v572 = vunpack.c.l.b16 %v506
        %v573 = vunpack.c.l.b16 %v507
        %v574 = vunpack.c.l.b16 %v508
        %v575 = vunpack.c.l.b16 %v509
        %v576 = vunpack.c.l.b16 %v510
        %v577 = vunpack.c.l.b16 %v511
        %v578 = vunpack.c.l.b16 %v512
        %v579 = vunpack.c.l.b16 %v513
        %v580 = vunpack.c.l.b16 %v514
        %v581 = vunpack.c.l.b16 %v515
        %v582 = vunpack.c.l.b16 %v516
        %v583 = vpack.c.b16 %v559, %v558
        %v584 = vpack.c.b16 %v561, %v560
        %v585 = vpack.c.b16 %v563, %v562
        %v586 = vpack.c.b16 %v565, %v564
        %v587 = vpack.c.b16 %v567, %v566
        %v588 = vpack.c.b16 %v569, %v568
        %v589 = vpack.c.b16 %v571, %v570
        %v590 = vpack.c.b16 %v573, %v572
        %v591 = vpack.c.b16 %v575, %v574
        %v592 = vpack.c.b16 %v577, %v576
        %v593 = vpack.c.b16 %v579, %v578
        %v594 = vpack.c.b16 %v581, %v580
        %v595 = vpack.c.b16 %v582, %v582
        %v625 = vunpack.c.l.b16 %v517
        %v626 = vunpack.c.l.b16 %v518
        %v627 = vunpack.c.l.b16 %v519
        %v628 = vunpack.c.l.b16 %v520
        %v629 = vunpack.c.l.b16 %v521
        %v630 = vunpack.c.l.b16 %v522
        %v631 = vunpack.c.l.b16 %v523
        %v632 = vunpack.c.l.b16 %v524
        %v633 = vunpack.c.l.b16 %v525
        %v634 = vunpack.c.l.b16 %v526
        %v635 = vunpack.c.l.b16 %v527
        %v636 = vunpack.c.l.b16 %v528
        %v637 = vunpack.c.l.b16 %v529
        %v638 = vunpack.c.l.b16 %v530
        %v639 = vunpack.c.l.b16 %v531
        %v640 = vunpack.c.l.b16 %v532
        %v641 = vpack.c.b16 %v626, %v625
        %v642 = vpack.c.b16 %v628, %v627
        %v643 = vpack.c.b16 %v630, %v629
        %v644 = vpack.c.b16 %v632, %v631
        %v645 = vpack.c.b16 %v634, %v633
        %v646 = vpack.c.b16 %v636, %v635
        %v647 = vpack.c.b16 %v638, %v637
        %v648 = vpack.c.b16 %v640, %v639
        %657 = vmatpush.bf16.msra.mxu0 %v648
        %658 = vmatpush.bf16.msra.mxu0 %v647
        %659 = vmatpush.bf16.msra.mxu0 %v646
        %660 = vmatpush.bf16.msra.mxu0 %v645
        %661 = vmatpush.bf16.msra.mxu0 %v644
        %662 = vmatpush.bf16.msra.mxu0 %v643
        %663 = vmatpush.bf16.msra.mxu0 %v642
        %664 = vmatpush.bf16.msra.mxu0 %v641
        %665 = vmatmul.bf16.gmra.mxu0 %v583
        %v666 = vpop.f32.mrf.mxu0
        %v667 = vadd.f32 0.0, %v666
        %v668 = vpop.f32.mrf.mxu0
        %v669 = vadd.f32 0.0, %v668
        %670 = vmatmul.bf16.gmra.mxu0 %v584
        %v671 = vpop.f32.mrf.mxu0
        %v672 = vadd.f32 0.0, %v671
        %v673 = vpop.f32.mrf.mxu0
        %v674 = vadd.f32 0.0, %v673
        %675 = vmatmul.bf16.gmra.mxu0 %v585
        %v676 = vpop.f32.mrf.mxu0
        %v677 = vadd.f32 0.0, %v676
        %v678 = vpop.f32.mrf.mxu0
        %v679 = vadd.f32 0.0, %v678
        %680 = vmatmul.bf16.gmra.mxu0 %v586
        %v681 = vpop.f32.mrf.mxu0
        %v682 = vadd.f32 0.0, %v681
        %v683 = vpop.f32.mrf.mxu0
        %v684 = vadd.f32 0.0, %v683
        %685 = vmatmul.bf16.gmra.mxu0 %v587
        %v686 = vpop.f32.mrf.mxu0
        %v687 = vadd.f32 0.0, %v686
        %v688 = vpop.f32.mrf.mxu0
        %v689 = vadd.f32 0.0, %v688
        %690 = vmatmul.bf16.gmra.mxu0 %v588
        %v691 = vpop.f32.mrf.mxu0
        %v692 = vadd.f32 0.0, %v691
        %v693 = vpop.f32.mrf.mxu0
        %v694 = vadd.f32 0.0, %v693
        %695 = vmatmul.bf16.gmra.mxu0 %v589
        %v696 = vpop.f32.mrf.mxu0
        %v697 = vadd.f32 0.0, %v696
        %v698 = vpop.f32.mrf.mxu0
        %v699 = vadd.f32 0.0, %v698
        %700 = vmatmul.bf16.gmra.mxu0 %v590
        %v701 = vpop.f32.mrf.mxu0
        %v702 = vadd.f32 0.0, %v701
        %v703 = vpop.f32.mrf.mxu0
        %v704 = vadd.f32 0.0, %v703
        %705 = vmatmul.bf16.gmra.mxu0 %v591
        %v706 = vpop.f32.mrf.mxu0
        %v707 = vadd.f32 0.0, %v706
        %v708 = vpop.f32.mrf.mxu0
        %v709 = vadd.f32 0.0, %v708
        %710 = vmatmul.bf16.gmra.mxu0 %v592
        %v711 = vpop.f32.mrf.mxu0
        %v712 = vadd.f32 0.0, %v711
        %v713 = vpop.f32.mrf.mxu0
        %v714 = vadd.f32 0.0, %v713
        %715 = vmatmul.bf16.gmra.mxu0 %v593
        %v716 = vpop.f32.mrf.mxu0
        %v717 = vadd.f32 0.0, %v716
        %v718 = vpop.f32.mrf.mxu0
        %v719 = vadd.f32 0.0, %v718
        %720 = vmatmul.bf16.gmra.mxu0 %v594
        %v721 = vpop.f32.mrf.mxu0
        %v722 = vadd.f32 0.0, %v721
        %v723 = vpop.f32.mrf.mxu0
        %v724 = vadd.f32 0.0, %v723
        %725 = vmatmul.bf16.gmra.mxu0 %v595
        %v726 = vpop.f32.mrf.mxu0
        %v727 = vadd.f32 0.0, %v726
        %v728 = vpop.f32.mrf.mxu0
        %729 = vdwg.mxu0
        %v730 = vadd.f32 %v467, %v667
        %v731 = vadd.f32 %v468, %v669
        %v732 = vadd.f32 %v469, %v672
        %v733 = vadd.f32 %v470, %v674
        %v734 = vadd.f32 %v471, %v677
        %v735 = vadd.f32 %v472, %v679
        %v736 = vadd.f32 %v473, %v682
        %v737 = vadd.f32 %v474, %v684
        %v738 = vadd.f32 %v475, %v687
        %v739 = vadd.f32 %v476, %v689
        %v740 = vadd.f32 %v477, %v692
        %v741 = vadd.f32 %v478, %v694
        %v742 = vadd.f32 %v479, %v697
        %v743 = vadd.f32 %v480, %v699
        %v744 = vadd.f32 %v481, %v702
        %v745 = vadd.f32 %v482, %v704
        %v746 = vadd.f32 %v483, %v707
        %v747 = vadd.f32 %v484, %v709
        %v748 = vadd.f32 %v485, %v712
        %v749 = vadd.f32 %v486, %v714
        %v750 = vadd.f32 %v487, %v717
        %v751 = vadd.f32 %v488, %v719
        %v752 = vadd.f32 %v489, %v722
        %v753 = vadd.f32 %v490, %v724
        %v754 = vadd.f32 %v491, %v727
        %vm755 = vcmask 523264
        %756 = vst.msk [vmem:[#allocation2] sm:$0xff] %vm755, %v730
        %757 = vst.msk [vmem:[#allocation2 + $0x8] sm:$0xff] %vm755, %v731
        %758 = vst.msk [vmem:[#allocation2 + $0x10] sm:$0xff] %vm755, %v732
        %759 = vst.msk [vmem:[#allocation2 + $0x18] sm:$0xff] %vm755, %v733
        %760 = vst.msk [vmem:[#allocation2 + $0x20] sm:$0xff] %vm755, %v734
        %761 = vst.msk [vmem:[#allocation2 + $0x28] sm:$0xff] %vm755, %v735
        %762 = vst.msk [vmem:[#allocation2 + $0x30] sm:$0xff] %vm755, %v736
        %763 = vst.msk [vmem:[#allocation2 + $0x38] sm:$0xff] %vm755, %v737
        %764 = vst.msk [vmem:[#allocation2 + $0x40] sm:$0xff] %vm755, %v738
        %765 = vst.msk [vmem:[#allocation2 + $0x48] sm:$0xff] %vm755, %v739
        %766 = vst.msk [vmem:[#allocation2 + $0x50] sm:$0xff] %vm755, %v740
        %767 = vst.msk [vmem:[#allocation2 + $0x58] sm:$0xff] %vm755, %v741
        %768 = vst.msk [vmem:[#allocation2 + $0x60] sm:$0xff] %vm755, %v742
        %769 = vst.msk [vmem:[#allocation2 + $0x68] sm:$0xff] %vm755, %v743
        %770 = vst.msk [vmem:[#allocation2 + $0x70] sm:$0xff] %vm755, %v744
        %771 = vst.msk [vmem:[#allocation2 + $0x78] sm:$0xff] %vm755, %v745
        %772 = vst.msk [vmem:[#allocation2 + $0x80] sm:$0xff] %vm755, %v746
        %773 = vst.msk [vmem:[#allocation2 + $0x88] sm:$0xff] %vm755, %v747
        %774 = vst.msk [vmem:[#allocation2 + $0x90] sm:$0xff] %vm755, %v748
        %775 = vst.msk [vmem:[#allocation2 + $0x98] sm:$0xff] %vm755, %v749
        %776 = vst.msk [vmem:[#allocation2 + $0xa0] sm:$0xff] %vm755, %v750
        %777 = vst.msk [vmem:[#allocation2 + $0xa8] sm:$0xff] %vm755, %v751
        %778 = vst.msk [vmem:[#allocation2 + $0xb0] sm:$0xff] %vm755, %v752
        %779 = vst.msk [vmem:[#allocation2 + $0xb8] sm:$0xff] %vm755, %v753
        %780 = vst.msk [vmem:[#allocation2 + $0xc0] sm:$0xff] %vm755, %v754
        %p781 = scmp.eq.s32.totalorder %s23, 4
        // Predicated region
        $region78: #{generator_forward.10} parent=68 // pred_check
          %p782 = pneg %p781
        $region79: #{generator_forward.10} parent=68 // pred_check_branch
          %784 = sbr.rel (%p782) target = $region81
        $region80: #{generator_forward.10} parent=68 // pred_region
          %v785 = vld [vmem:[#allocation2] sm:$0xff]
          %v786 = vld [vmem:[#allocation2 + $0x8] sm:$0xff]
          %v787 = vld [vmem:[#allocation2 + $0x10] sm:$0xff]
          %v788 = vld [vmem:[#allocation2 + $0x18] sm:$0xff]
          %v789 = vld [vmem:[#allocation2 + $0x20] sm:$0xff]
          %v790 = vld [vmem:[#allocation2 + $0x28] sm:$0xff]
          %v791 = vld [vmem:[#allocation2 + $0x30] sm:$0xff]
          %v792 = vld [vmem:[#allocation2 + $0x38] sm:$0xff]
          %v793 = vld [vmem:[#allocation2 + $0x40] sm:$0xff]
          %v794 = vld [vmem:[#allocation2 + $0x48] sm:$0xff]
          %v795 = vld [vmem:[#allocation2 + $0x50] sm:$0xff]
          %v796 = vld [vmem:[#allocation2 + $0x58] sm:$0xff]
          %v797 = vld [vmem:[#allocation2 + $0x60] sm:$0xff]
          %v798 = vld [vmem:[#allocation2 + $0x68] sm:$0xff]
          %v799 = vld [vmem:[#allocation2 + $0x70] sm:$0xff]
          %v800 = vld [vmem:[#allocation2 + $0x78] sm:$0xff]
          %v801 = vld [vmem:[#allocation2 + $0x80] sm:$0xff]
          %v802 = vld [vmem:[#allocation2 + $0x88] sm:$0xff]
          %v803 = vld [vmem:[#allocation2 + $0x90] sm:$0xff]
          %v804 = vld [vmem:[#allocation2 + $0x98] sm:$0xff]
          %v805 = vld [vmem:[#allocation2 + $0xa0] sm:$0xff]
          %v806 = vld [vmem:[#allocation2 + $0xa8] sm:$0xff]
          %v807 = vld [vmem:[#allocation2 + $0xb0] sm:$0xff]
          %v808 = vld [vmem:[#allocation2 + $0xb8] sm:$0xff]
          %v809 = vld [vmem:[#allocation2 + $0xc0] sm:$0xff]
          %v810 = vsel %vm755, %v785, 0.0
          %v811 = vsel %vm755, %v786, 0.0
          %v812 = vadd.f32 %v810, %v811
          %v813 = vsel %vm755, %v787, 0.0
          %v814 = vadd.f32 %v812, %v813
          %v815 = vsel %vm755, %v788, 0.0
          %v816 = vadd.f32 %v814, %v815
          %v817 = vsel %vm755, %v789, 0.0
          %v818 = vadd.f32 %v816, %v817
          %v819 = vsel %vm755, %v790, 0.0
          %v820 = vadd.f32 %v818, %v819
          %v821 = vsel %vm755, %v791, 0.0
          %v822 = vadd.f32 %v820, %v821
          %v823 = vsel %vm755, %v792, 0.0
          %v824 = vadd.f32 %v822, %v823
          %v825 = vsel %vm755, %v793, 0.0
          %v826 = vadd.f32 %v824, %v825
          %v827 = vsel %vm755, %v794, 0.0
          %v828 = vadd.f32 %v826, %v827
          %v829 = vsel %vm755, %v795, 0.0
          %v830 = vadd.f32 %v828, %v829
          %v831 = vsel %vm755, %v796, 0.0
          %v832 = vadd.f32 %v830, %v831
          %v833 = vsel %vm755, %v797, 0.0
          %v834 = vadd.f32 %v832, %v833
          %v835 = vsel %vm755, %v798, 0.0
          %v836 = vadd.f32 %v834, %v835
          %v837 = vsel %vm755, %v799, 0.0
          %v838 = vadd.f32 %v836, %v837
          %v839 = vsel %vm755, %v800, 0.0
          %v840 = vadd.f32 %v838, %v839
          %v841 = vsel %vm755, %v801, 0.0
          %v842 = vadd.f32 %v840, %v841
          %v843 = vsel %vm755, %v802, 0.0
          %v844 = vadd.f32 %v842, %v843
          %v845 = vsel %vm755, %v803, 0.0
          %v846 = vadd.f32 %v844, %v845
          %v847 = vsel %vm755, %v804, 0.0
          %v848 = vadd.f32 %v846, %v847
          %v849 = vsel %vm755, %v805, 0.0
          %v850 = vadd.f32 %v848, %v849
          %v851 = vsel %vm755, %v806, 0.0
          %v852 = vadd.f32 %v850, %v851
          %v853 = vsel %vm755, %v807, 0.0
          %v854 = vadd.f32 %v852, %v853
          %v855 = vsel %vm755, %v808, 0.0
          %v856 = vadd.f32 %v854, %v855
          %v857 = vsel %vm755, %v809, 0.0
          %v858 = vadd.f32 %v856, %v857
          %v859 = vrot.slane %v858, 4
          %v860 = vadd.f32 %v858, %v859
          %v861 = vrot.slane %v860, 2
          %v862 = vadd.f32 %v860, %v861
          %v863 = vrot.slane %v862, 1
          %v864 = vadd.f32 %v862, %v863
          %v865 = vmul.f32 %v785, %v785
          %v866 = vmul.f32 %v786, %v786
          %v867 = vmul.f32 %v787, %v787
          %v868 = vmul.f32 %v788, %v788
          %v869 = vmul.f32 %v789, %v789
          %v870 = vmul.f32 %v790, %v790
          %v871 = vmul.f32 %v791, %v791
          %v872 = vmul.f32 %v792, %v792
          %v873 = vmul.f32 %v793, %v793
          %v874 = vmul.f32 %v794, %v794
          %v875 = vmul.f32 %v795, %v795
          %v876 = vmul.f32 %v796, %v796
          %v877 = vmul.f32 %v797, %v797
          %v878 = vmul.f32 %v798, %v798
          %v879 = vmul.f32 %v799, %v799
          %v880 = vmul.f32 %v800, %v800
          %v881 = vmul.f32 %v801, %v801
          %v882 = vmul.f32 %v802, %v802
          %v883 = vmul.f32 %v803, %v803
          %v884 = vmul.f32 %v804, %v804
          %v885 = vmul.f32 %v805, %v805
          %v886 = vmul.f32 %v806, %v806
          %v887 = vmul.f32 %v807, %v807
          %v888 = vmul.f32 %v808, %v808
          %v889 = vmul.f32 %v809, %v809
          %v890 = vsel %vm755, %v865, 0.0
          %v891 = vsel %vm755, %v866, 0.0
          %v892 = vadd.f32 %v890, %v891
          %v893 = vsel %vm755, %v867, 0.0
          %v894 = vadd.f32 %v892, %v893
          %v895 = vsel %vm755, %v868, 0.0
          %v896 = vadd.f32 %v894, %v895
          %v897 = vsel %vm755, %v869, 0.0
          %v898 = vadd.f32 %v896, %v897
          %v899 = vsel %vm755, %v870, 0.0
          %v900 = vadd.f32 %v898, %v899
          %v901 = vsel %vm755, %v871, 0.0
          %v902 = vadd.f32 %v900, %v901
          %v903 = vsel %vm755, %v872, 0.0
          %v904 = vadd.f32 %v902, %v903
          %v905 = vsel %vm755, %v873, 0.0
          %v906 = vadd.f32 %v904, %v905
          %v907 = vsel %vm755, %v874, 0.0
          %v908 = vadd.f32 %v906, %v907
          %v909 = vsel %vm755, %v875, 0.0
          %v910 = vadd.f32 %v908, %v909
          %v911 = vsel %vm755, %v876, 0.0
          %v912 = vadd.f32 %v910, %v911
          %v913 = vsel %vm755, %v877, 0.0
          %v914 = vadd.f32 %v912, %v913
          %v915 = vsel %vm755, %v878, 0.0
          %v916 = vadd.f32 %v914, %v915
          %v917 = vsel %vm755, %v879, 0.0
          %v918 = vadd.f32 %v916, %v917
          %v919 = vsel %vm755, %v880, 0.0
          %v920 = vadd.f32 %v918, %v919
          %v921 = vsel %vm755, %v881, 0.0
          %v922 = vadd.f32 %v920, %v921
          %v923 = vsel %vm755, %v882, 0.0
          %v924 = vadd.f32 %v922, %v923
          %v925 = vsel %vm755, %v883, 0.0
          %v926 = vadd.f32 %v924, %v925
          %v927 = vsel %vm755, %v884, 0.0
          %v928 = vadd.f32 %v926, %v927
          %v929 = vsel %vm755, %v885, 0.0
          %v930 = vadd.f32 %v928, %v929
          %v931 = vsel %vm755, %v886, 0.0
          %v932 = vadd.f32 %v930, %v931
          %v933 = vsel %vm755, %v887, 0.0
          %v934 = vadd.f32 %v932, %v933
          %v935 = vsel %vm755, %v888, 0.0
          %v936 = vadd.f32 %v934, %v935
          %v937 = vsel %vm755, %v889, 0.0
          %v938 = vadd.f32 %v936, %v937
          %v939 = vrot.slane %v938, 4
          %v940 = vadd.f32 %v938, %v939
          %v941 = vrot.slane %v940, 2
          %v942 = vadd.f32 %v940, %v941
          %v943 = vrot.slane %v942, 1
          %v944 = vadd.f32 %v942, %v943
          %vm945 = vcmask 1040384
          %v946 = vsel %vm945, %v864, %v944
          %vm947 = vcmask 517120
          %948 = vst.msk [vmem:[%s436] sm:$0x3] %vm947, %v946
          %v949 = vld [vmem:[%s420] sm:$0x1]
          %v951 = vperm.slane %v949, 0
          %v953 = vadd.f32 %v785, %v951
          %v954 = vadd.f32 %v786, %v951
          %v955 = vadd.f32 %v787, %v951
          %v956 = vadd.f32 %v788, %v951
          %v957 = vadd.f32 %v789, %v951
          %v958 = vadd.f32 %v790, %v951
          %v959 = vadd.f32 %v791, %v951
          %v960 = vadd.f32 %v792, %v951
          %v961 = vadd.f32 %v793, %v951
          %v962 = vadd.f32 %v794, %v951
          %v963 = vadd.f32 %v795, %v951
          %v964 = vadd.f32 %v796, %v951
          %v965 = vadd.f32 %v797, %v951
          %v966 = vadd.f32 %v798, %v951
          %v967 = vadd.f32 %v799, %v951
          %v968 = vadd.f32 %v800, %v951
          %v969 = vadd.f32 %v801, %v951
          %v970 = vadd.f32 %v802, %v951
          %v971 = vadd.f32 %v803, %v951
          %v972 = vadd.f32 %v804, %v951
          %v973 = vadd.f32 %v805, %v951
          %v974 = vadd.f32 %v806, %v951
          %v975 = vadd.f32 %v807, %v951
          %v976 = vadd.f32 %v808, %v951
          %v977 = vadd.f32 %v809, %v951
          %v978 = vpack.c.bf16 %v953, %v953
          %v979 = vpack.c.bf16 %v954, %v954
          %v980 = vpack.c.bf16 %v955, %v955
          %v981 = vpack.c.bf16 %v956, %v956
          %v982 = vpack.c.bf16 %v957, %v957
          %v983 = vpack.c.bf16 %v958, %v958
          %v984 = vpack.c.bf16 %v959, %v959
          %v985 = vpack.c.bf16 %v960, %v960
          %v986 = vpack.c.bf16 %v961, %v961
          %v987 = vpack.c.bf16 %v962, %v962
          %v988 = vpack.c.bf16 %v963, %v963
          %v989 = vpack.c.bf16 %v964, %v964
          %v990 = vpack.c.bf16 %v965, %v965
          %v991 = vpack.c.bf16 %v966, %v966
          %v992 = vpack.c.bf16 %v967, %v967
          %v993 = vpack.c.bf16 %v968, %v968
          %v994 = vpack.c.bf16 %v969, %v969
          %v995 = vpack.c.bf16 %v970, %v970
          %v996 = vpack.c.bf16 %v971, %v971
          %v997 = vpack.c.bf16 %v972, %v972
          %v998 = vpack.c.bf16 %v973, %v973
          %v999 = vpack.c.bf16 %v974, %v974
          %v1000 = vpack.c.bf16 %v975, %v975
          %v1001 = vpack.c.bf16 %v976, %v976
          %v1002 = vpack.c.bf16 %v977, %v977
          %vm1003 = vcmask 519168
          %1004 = vst.msk [vmem:[%s428] sm:$0xf] %vm1003, %v978
          %1005 = vst.msk [vmem:[%s428 + $0x4] sm:$0xf] %vm1003, %v979
          %1006 = vst.msk [vmem:[%s428 + $0x8] sm:$0xf] %vm1003, %v980
          %1007 = vst.msk [vmem:[%s428 + $0xc] sm:$0xf] %vm1003, %v981
          %1008 = vst.msk [vmem:[%s428 + $0x10] sm:$0xf] %vm1003, %v982
          %1009 = vst.msk [vmem:[%s428 + $0x14] sm:$0xf] %vm1003, %v983
          %1010 = vst.msk [vmem:[%s428 + $0x18] sm:$0xf] %vm1003, %v984
          %1011 = vst.msk [vmem:[%s428 + $0x1c] sm:$0xf] %vm1003, %v985
          %1012 = vst.msk [vmem:[%s428 + $0x20] sm:$0xf] %vm1003, %v986
          %1013 = vst.msk [vmem:[%s428 + $0x24] sm:$0xf] %vm1003, %v987
          %1014 = vst.msk [vmem:[%s428 + $0x28] sm:$0xf] %vm1003, %v988
          %1015 = vst.msk [vmem:[%s428 + $0x2c] sm:$0xf] %vm1003, %v989
          %1016 = vst.msk [vmem:[%s428 + $0x30] sm:$0xf] %vm1003, %v990
          %1017 = vst.msk [vmem:[%s428 + $0x34] sm:$0xf] %vm1003, %v991
          %1018 = vst.msk [vmem:[%s428 + $0x38] sm:$0xf] %vm1003, %v992
          %1019 = vst.msk [vmem:[%s428 + $0x3c] sm:$0xf] %vm1003, %v993
          %1020 = vst.msk [vmem:[%s428 + $0x40] sm:$0xf] %vm1003, %v994
          %1021 = vst.msk [vmem:[%s428 + $0x44] sm:$0xf] %vm1003, %v995
          %1022 = vst.msk [vmem:[%s428 + $0x48] sm:$0xf] %vm1003, %v996
          %1023 = vst.msk [vmem:[%s428 + $0x4c] sm:$0xf] %vm1003, %v997
          %1024 = vst.msk [vmem:[%s428 + $0x50] sm:$0xf] %vm1003, %v998
          %1025 = vst.msk [vmem:[%s428 + $0x54] sm:$0xf] %vm1003, %v999
          %1026 = vst.msk [vmem:[%s428 + $0x58] sm:$0xf] %vm1003, %v1000
          %1027 = vst.msk [vmem:[%s428 + $0x5c] sm:$0xf] %vm1003, %v1001
          %1028 = vst.msk [vmem:[%s428 + $0x60] sm:$0xf] %vm1003, %v1002
        $region81: #{generator_forward.10} parent=68 // pred_fallthru
          _
        %s1029 = smul.u32 25, %s21
        %p1030 = scmp.lt.s32.totalorder %s1029, 24
        %s1031 = scalar_select %p1030, %s1029, 24
        %p1032 = scmp.lt.s32.totalorder %s22, 0
        %s1033 = scalar_select %p1032, %s22, 0
        %s1034 = sadd.s32 %s1033, %s1031
        %s1035 = smul.addr %s1034, 4
        %s1036 = scalar_lea.vmem %s3, %s1035
        %p1037 = scmp.lt.s32.totalorder %s21, 0
        %s1038 = scalar_select %p1037, %s21, 0
        %p1039 = scmp.lt.s32.totalorder %s22, 0
        %s1040 = scalar_select %p1039, %s22, 0
        %s1041 = sadd.s32 %s1040, %s1038
        %s1042 = smul.addr %s1041, 2
        %s1043 = scalar_lea.vmem %s4, %s1042
        // Predicated region
        $region82: #{generator_forward.10} parent=68 // pred_check
          %p1044 = pneg %p137
        $region83: #{generator_forward.10} parent=68 // pred_check_branch
          %1046 = sbr.rel (%p1044) target = $region85
        $region84: #{generator_forward.10} parent=68 // pred_region
          %s1047 = smul.u32 25, %s21
        $region85: #{generator_forward.10} parent=68 // pred_fallthru
          _
        // Predicated region
        $region86: #{generator_forward.10} parent=68 // pred_check
          %p1048 = pneg %p165
        $region87: #{generator_forward.10} parent=68 // pred_check_branch
          %1050 = sbr.rel (%p1048) target = $region89
        $region88: #{generator_forward.10} parent=68 // pred_region
          _
        $region89: #{generator_forward.10} parent=68 // pred_fallthru
          _
        // Predicated region
        $region90: #{generator_forward.10} parent=68 // pred_check
          %p1051 = pneg %p137
        $region91: #{generator_forward.10} parent=68 // pred_check_branch
          %1053 = sbr.rel (%p1051) target = $region93
        $region92: #{generator_forward.10} parent=68 // pred_region
          %s1054 = smul.u32 25, %s21
          %p1055 = scmp.lt.s32.totalorder %s1054, 24
          %s1056 = scalar_select %p1055, %s1054, 24
          %p1057 = scmp.lt.s32.totalorder %s22, 0
          %s1058 = scalar_select %p1057, %s22, 0
          %s1059 = sadd.s32 %s1058, %s1056
          %s1060 = smul.addr %s1059, 4
          %s1061 = scalar_lea.vmem %s3, %s1060
        $region93: #{generator_forward.10} parent=68 // pred_fallthru
          _
        // Predicated region
        $region94: #{generator_forward.10} parent=68 // pred_check
          %p1062 = pneg %p165
        $region95: #{generator_forward.10} parent=68 // pred_check_branch
          %1064 = sbr.rel (%p1062) target = $region97
        $region96: #{generator_forward.10} parent=68 // pred_region
          %p1065 = scmp.lt.s32.totalorder %s21, 0
          %s1066 = scalar_select %p1065, %s21, 0
          %p1067 = scmp.lt.s32.totalorder %s22, 0
          %s1068 = scalar_select %p1067, %s22, 0
          %s1069 = sadd.s32 %s1068, %s1066
          %s1070 = smul.addr %s1069, 2
          %s1071 = scalar_lea.vmem %s4, %s1070
        $region97: #{generator_forward.10} parent=68 // pred_fallthru
          _
      $region69: #{generator_forward.10} parent=5 // pred_fallthru
        _
      %p1072 = scmp.le.s32.totalorder 2, %s11
      // Predicated region
      $region98: #{generator_forward.10} parent=5 // pred_check
        %p1073 = pneg %p1072
      $region99: #{generator_forward.10} parent=5 // pred_check_branch
        %1075 = sbr.rel (%p1073) target = $region101
      $region100: #{generator_forward.10} parent=5 // pred_region
        %s1076 = ssub.s32 %s11, 2
      $region101: #{generator_forward.10} parent=5 // pred_fallthru
        _
    $region6: #{generator_forward.10} parent=1 // loop_footer
      %s15 = sadd.s32 1, %s11
    $region7: #{generator_forward.10} parent=1 // loop_footer_branch
      %10 = sbr.rel target = $region3
    $region8: #{generator_forward.10} parent=1 // loop_exit
      _

// kernel: generator_forward.16
$region0: #{generator_forward.16}
  #allocation0 [shape = 'u32[]', space=smem, size = 0x4, offset = 0x4, fixed_abs, tag = 'smem constant byte address 0x4 - core index']
  #allocation1 [shape = 'u32[72,128]{1,0:T(1,128)}', space=vmem, size = 0x9000, scoped, tag = 'internal scratch']
  #allocation2 [shape = 'f32[200,256]{1,0:T(8,128)}', space=vmem, size = 0x32000, scoped, tag = 'scratch operand']
  %s0 = inlined_call_operand.vmem [shape: bf16[200,640], index: 0, kind: input, shape index: {}]
  %s1 = inlined_call_operand.vmem [shape: bf16[640,256], index: 1, kind: input, shape index: {}]
  %s2 = inlined_call_operand.vmem [shape: f32[1,256], index: 2, kind: input, shape index: {}]
  %s3 = inlined_call_operand.vmem [shape: f32[1,256], index: 3, kind: input, shape index: {}]
  %s4 = inlined_call_operand.vmem [shape: bf16[200,256], index: 4, kind: output, shape index: {}]
  %s5 = sld [smem:[#allocation0]]
  $region98: #{generator_forward.16} parent=0
    _
  %s7 = ssub.s32 1, %s5
  %s8 = scalar_select 0, %s7, %s5
  $region1: #{generator_forward.16} parent=0
    #allocation3 [shape = 'u8[102400]{0}', space=vmem, size = 0x19000, scoped, tag = 'input window, operand 0']
    loop: start=0, step=1, limit=7
    $region2: #{generator_forward.16} parent=1 // loop_pre_header
      _
    $region3: #{generator_forward.16} parent=1 // loop_header
      %s10 = sphi 0, %s14
      %p11 = scmp.ge.s32.totalorder %s10, 7
      %s17 = sphi 0, %s36
      %s18 = sphi 0, %s32
      %s19 = sphi 0, %s28
      %s20 = sphi 0, %s17
      %s21 = sphi 0, %s18
      %s22 = sphi 0, %s19
      %s23 = sphi 0, %s20
      %s24 = sphi 0, %s21
      %s25 = sphi 0, %s22
      %s41 = sphi 0, %s43
      %s44 = sphi 0, %s41
      %s45 = sphi 0, %s44
      %s61 = sphi 0, %s45
      %s69 = sphi 0, %s71
      %s72 = sphi 0, %s69
      %s73 = sphi 0, %s72
      %s89 = sphi 0, %s73
      %s95 = sphi 0, %s97
      %s98 = sphi 0, %s95
      %s99 = sphi 0, %s98
      %s115 = sphi 0, %s99
      %s121 = sphi 0, %s123
      %s124 = sphi 0, %s121
      %s125 = sphi 0, %s124
      %s141 = sphi 0, %s125
      %s149 = sphi 0, %s151
      %s152 = sphi 0, %s149
      %s153 = sphi 0, %s152
      %s169 = sphi 0, %s153
    $region4: #{generator_forward.16} parent=1 // loop_header_branch
      %13 = sbr.rel (%p11) target = $region8
    $region5: #{generator_forward.16} parent=1 // loop_body
      %s15 = ssub.s32 %s10, 1
      %s16 = ssub.s32 %s10, 2
      %s26 = sadd.s32 1, %s19
      %p27 = scmp.ge.s32.totalorder %s26, 5
      %s28 = scalar_select %p27, 0, %s26
      %s29 = sadd.s32 1, %s18
      %s30 = scalar_select %p27, %s29, %s18
      %p31 = scmp.ge.s32.totalorder %s30, 1
      %s32 = scalar_select %p31, 0, %s30
      %s33 = sadd.s32 1, %s17
      %s34 = scalar_select %p31, %s33, %s17
      %p35 = scmp.ge.s32.totalorder %s34, 1
      %s36 = scalar_select %p35, 0, %s34
      %s37 = ssub.s32 %s17, %s36
      %s38 = ssub.s32 %s19, %s28
      %s39 = sor.u32 %s37, %s38
      %p40 = scmp.eq.s32.totalorder %s39, 0
      %s42 = sadd.s32 %s41, 1
      %s43 = scalar_select %p40, %s41, %s42
      %p46 = pneg %p40
      %p47 = scmp.eq.s32.totalorder %s10, 4
      %p48 = por %p46, %p47
      %p49 = scmp.ne.s32.totalorder %s41, %s44
      %p50 = scmp.eq.s32.totalorder %s10, 0
      %p51 = por %p49, %p50
      %p52 = scmp.ne.s32.totalorder %s41, %s44
      %p53 = scmp.eq.s32.totalorder %s15, 4
      %p54 = por %p52, %p53
      %p55 = scmp.ne.s32.totalorder %s44, %s45
      %p56 = scmp.eq.s32.totalorder %s15, 0
      %p57 = por %p55, %p56
      %p58 = scmp.ne.s32.totalorder %s44, %s45
      %p59 = scmp.eq.s32.totalorder %s16, 4
      %p60 = por %p58, %p59
      %p62 = scmp.ne.s32.totalorder %s45, %s61
      %p63 = scmp.eq.s32.totalorder %s16, 0
      %p64 = por %p62, %p63
      %s65 = ssub.s32 %s19, %s28
      %s66 = ssub.s32 %s18, %s32
      %s67 = sor.u32 %s65, %s66
      %p68 = scmp.eq.s32.totalorder %s67, 0
      %s70 = sadd.s32 %s69, 1
      %s71 = scalar_select %p68, %s69, %s70
      %p74 = pneg %p68
      %p75 = scmp.eq.s32.totalorder %s10, 4
      %p76 = por %p74, %p75
      %p77 = scmp.ne.s32.totalorder %s69, %s72
      %p78 = scmp.eq.s32.totalorder %s10, 0
      %p79 = por %p77, %p78
      %p80 = scmp.ne.s32.totalorder %s69, %s72
      %p81 = scmp.eq.s32.totalorder %s15, 4
      %p82 = por %p80, %p81
      %p83 = scmp.ne.s32.totalorder %s72, %s73
      %p84 = scmp.eq.s32.totalorder %s15, 0
      %p85 = por %p83, %p84
      %p86 = scmp.ne.s32.totalorder %s72, %s73
      %p87 = scmp.eq.s32.totalorder %s16, 4
      %p88 = por %p86, %p87
      %p90 = scmp.ne.s32.totalorder %s73, %s89
      %p91 = scmp.eq.s32.totalorder %s16, 0
      %p92 = por %p90, %p91
      %s93 = ssub.s32 %s18, %s32
      %p94 = scmp.eq.s32.totalorder %s93, 0
      %s96 = sadd.s32 %s95, 1
      %s97 = scalar_select %p94, %s95, %s96
      %p100 = pneg %p94
      %p101 = scmp.eq.s32.totalorder %s10, 4
      %p102 = por %p100, %p101
      %p103 = scmp.ne.s32.totalorder %s95, %s98
      %p104 = scmp.eq.s32.totalorder %s10, 0
      %p105 = por %p103, %p104
      %p106 = scmp.ne.s32.totalorder %s95, %s98
      %p107 = scmp.eq.s32.totalorder %s15, 4
      %p108 = por %p106, %p107
      %p109 = scmp.ne.s32.totalorder %s98, %s99
      %p110 = scmp.eq.s32.totalorder %s15, 0
      %p111 = por %p109, %p110
      %p112 = scmp.ne.s32.totalorder %s98, %s99
      %p113 = scmp.eq.s32.totalorder %s16, 4
      %p114 = por %p112, %p113
      %p116 = scmp.ne.s32.totalorder %s99, %s115
      %p117 = scmp.eq.s32.totalorder %s16, 0
      %p118 = por %p116, %p117
      %s119 = ssub.s32 %s18, %s32
      %p120 = scmp.eq.s32.totalorder %s119, 0
      %s122 = sadd.s32 %s121, 1
      %s123 = scalar_select %p120, %s121, %s122
      %p126 = pneg %p120
      %p127 = scmp.eq.s32.totalorder %s10, 4
      %p128 = por %p126, %p127
      %p129 = scmp.ne.s32.totalorder %s121, %s124
      %p130 = scmp.eq.s32.totalorder %s10, 0
      %p131 = por %p129, %p130
      %p132 = scmp.ne.s32.totalorder %s121, %s124
      %p133 = scmp.eq.s32.totalorder %s15, 4
      %p134 = por %p132, %p133
      %p135 = scmp.ne.s32.totalorder %s124, %s125
      %p136 = scmp.eq.s32.totalorder %s15, 0
      %p137 = por %p135, %p136
      %p138 = scmp.ne.s32.totalorder %s124, %s125
      %p139 = scmp.eq.s32.totalorder %s16, 4
      %p140 = por %p138, %p139
      %p142 = scmp.ne.s32.totalorder %s125, %s141
      %p143 = scmp.eq.s32.totalorder %s16, 0
      %p144 = por %p142, %p143
      %s145 = ssub.s32 %s17, %s36
      %s146 = ssub.s32 %s18, %s32
      %s147 = sor.u32 %s145, %s146
      %p148 = scmp.eq.s32.totalorder %s147, 0
      %s150 = sadd.s32 %s149, 1
      %s151 = scalar_select %p148, %s149, %s150
      %p154 = pneg %p148
      %p155 = scmp.eq.s32.totalorder %s10, 4
      %p156 = por %p154, %p155
      %p157 = scmp.ne.s32.totalorder %s149, %s152
      %p158 = scmp.eq.s32.totalorder %s10, 0
      %p159 = por %p157, %p158
      %p160 = scmp.ne.s32.totalorder %s149, %s152
      %p161 = scmp.eq.s32.totalorder %s15, 4
      %p162 = por %p160, %p161
      %p163 = scmp.ne.s32.totalorder %s152, %s153
      %p164 = scmp.eq.s32.totalorder %s15, 0
      %p165 = por %p163, %p164
      %p166 = scmp.ne.s32.totalorder %s152, %s153
      %p167 = scmp.eq.s32.totalorder %s16, 4
      %p168 = por %p166, %p167
      %p170 = scmp.ne.s32.totalorder %s153, %s169
      %p171 = scmp.eq.s32.totalorder %s16, 0
      %p172 = por %p170, %p171
      %p173 = scmp.le.s32.totalorder 1, %s10
      %p174 = scmp.lt.s32.totalorder %s10, 6
      %p175 = pnand %p173, %p174
      %p176 = pneg %p175
      // Predicated region
      $region9: #{generator_forward.16} parent=5 // pred_check
        _
      $region10: #{generator_forward.16} parent=5 // pred_check_branch
        %178 = sbr.rel (%p175) target = $region12
      $region11: #{generator_forward.16} parent=5 // pred_region
        %s179 = ssub.s32 %s10, 1
        // Predicated region
        $region13: #{generator_forward.16} parent=11 // pred_check
          %p180 = pneg %p111
        $region14: #{generator_forward.16} parent=11 // pred_check_branch
          %182 = sbr.rel (%p180) target = $region16
        $region15: #{generator_forward.16} parent=11 // pred_region
          %s183 = smul.u32 2, %s21
          %p184 = scmp.lt.s32.totalorder %s183, 1
          %s185 = scalar_select %p184, %s183, 1
          %s186 = scalar_lea.vmem %s2, %s185
          %s187 = smul.u32 2, %s21
        $region16: #{generator_forward.16} parent=11 // pred_fallthru
          _
        // Predicated region
        $region17: #{generator_forward.16} parent=11 // pred_check
          %p188 = pneg %p137
        $region18: #{generator_forward.16} parent=11 // pred_check_branch
          %190 = sbr.rel (%p188) target = $region20
        $region19: #{generator_forward.16} parent=11 // pred_region
          %s191 = smul.u32 2, %s21
          %p192 = scmp.lt.s32.totalorder %s191, 1
          %s193 = scalar_select %p192, %s191, 1
          %s194 = scalar_lea.vmem %s3, %s193
          %s195 = smul.u32 2, %s21
        $region20: #{generator_forward.16} parent=11 // pred_fallthru
          _
      $region12: #{generator_forward.16} parent=5 // pred_fallthru
        _
      %p196 = scmp.lt.s32.totalorder %s10, 5
      // Predicated region
      $region21: #{generator_forward.16} parent=5 // pred_check
        %p197 = pneg %p196
      $region22: #{generator_forward.16} parent=5 // pred_check_branch
        %199 = sbr.rel (%p197) target = $region24
      $region23: #{generator_forward.16} parent=5 // pred_region
        // Predicated region
        $region25: #{generator_forward.16} parent=23 // pred_check
          %p200 = pneg %p51
        $region26: #{generator_forward.16} parent=23 // pred_check_branch
          %202 = sbr.rel (%p200) target = $region28
        $region27: #{generator_forward.16} parent=23 // pred_region
          %s203 = sand.u32 %s41, 1
          %s204 = sand.u32 %s41, 1
          %s205 = smul.addr %s204, 100
          %s206 = scalar_lea.vmem [#allocation3], %s205
          %s207 = smul.u32 25, %s17
          %s208 = smul.addr %s207, 5
          %s209 = sadd.s32 %s19, %s208
          %s210 = smul.addr %s209, 4
          %s211 = scalar_lea.vmem %s0, %s210
          // Predicated region
          $region29: #{generator_forward.16} parent=27 // pred_check
            _
          $region30: #{generator_forward.16} parent=27 // pred_check_branch
            %213 = sbr.rel (0) target = $region32
          $region31: #{generator_forward.16} parent=27 // pred_region
            // Predicated region
            $region33: #{generator_forward.16} parent=31 // pred_check
              _
            $region34: #{generator_forward.16} parent=31 // pred_check_branch
              %215 = sbr.rel target = $region36
            $region35: #{generator_forward.16} parent=31 // pred_region
              // Predicated region
              $region48: #{generator_forward.16} parent=35 // pred_check
                _
              $region49: #{generator_forward.16} parent=35 // pred_check_branch
                %279 = sbr.rel (0) target = $region51
              $region50: #{generator_forward.16} parent=35 // pred_region
                loop: start=0, step=1, limit=1
                $region52: #{generator_forward.16} parent=50 // loop_pre_header
                  _
                $region53: #{generator_forward.16} parent=50 // loop_header
                  %s281 = sphi 0, %s285
                  %p282 = scmp.ge.s32.totalorder %s281, 1
                  %s286 = sphi %s211, %s211
                  %s287 = sphi %s206, %s206
                $region54: #{generator_forward.16} parent=50 // loop_header_branch
                  %284 = sbr.rel (%p282) target = $region58
                $region55: #{generator_forward.16} parent=50 // loop_body
                  _
                $region56: #{generator_forward.16} parent=50 // loop_footer
                  %s285 = sadd.s32 1, %s281
                $region57: #{generator_forward.16} parent=50 // loop_footer_branch
                  %280 = sbr.rel target = $region53
                $region58: #{generator_forward.16} parent=50 // loop_exit
                  _
                %s289 = ssub.s32 16, 1
                loop: start=0, step=1, limit=1
                $region59: #{generator_forward.16} parent=50 // loop_pre_header
                  _
                $region60: #{generator_forward.16} parent=50 // loop_header
                  %s291 = sphi 0, %s295
                  %p292 = scmp.ge.s32.totalorder %s291, 1
                  %s296 = sphi %s211, %s211
                  %s297 = sphi %s206, %s206
                $region61: #{generator_forward.16} parent=50 // loop_header_branch
                  %294 = sbr.rel (%p292) target = $region65
                $region62: #{generator_forward.16} parent=50 // loop_body
                  %v298 = vld [vmem:[%s296] sm:%s289]
                  %299 = vst [vmem:[%s297] sm:%s289] %v298
                  %v300 = vld [vmem:[%s296 + $0x14] sm:%s289]
                  %301 = vst [vmem:[%s297 + $0x4] sm:%s289] %v300
                  %v302 = vld [vmem:[%s296 + $0x28] sm:%s289]
                  %303 = vst [vmem:[%s297 + $0x8] sm:%s289] %v302
                  %v304 = vld [vmem:[%s296 + $0x3c] sm:%s289]
                  %305 = vst [vmem:[%s297 + $0xc] sm:%s289] %v304
                  %v306 = vld [vmem:[%s296 + $0x50] sm:%s289]
                  %307 = vst [vmem:[%s297 + $0x10] sm:%s289] %v306
                  %v308 = vld [vmem:[%s296 + $0x64] sm:%s289]
                  %309 = vst [vmem:[%s297 + $0x14] sm:%s289] %v308
                  %v310 = vld [vmem:[%s296 + $0x78] sm:%s289]
                  %311 = vst [vmem:[%s297 + $0x18] sm:%s289] %v310
                  %v312 = vld [vmem:[%s296 + $0x8c] sm:%s289]
                  %313 = vst [vmem:[%s297 + $0x1c] sm:%s289] %v312
                  %v314 = vld [vmem:[%s296 + $0xa0] sm:%s289]
                  %315 = vst [vmem:[%s297 + $0x20] sm:%s289] %v314
                  %v316 = vld [vmem:[%s296 + $0xb4] sm:%s289]
                  %317 = vst [vmem:[%s297 + $0x24] sm:%s289] %v316
                  %v318 = vld [vmem:[%s296 + $0xc8] sm:%s289]
                  %319 = vst [vmem:[%s297 + $0x28] sm:%s289] %v318
                  %v320 = vld [vmem:[%s296 + $0xdc] sm:%s289]
                  %321 = vst [vmem:[%s297 + $0x2c] sm:%s289] %v320
                  %v322 = vld [vmem:[%s296 + $0xf0] sm:%s289]
                  %323 = vst [vmem:[%s297 + $0x30] sm:%s289] %v322
                  %v324 = vld [vmem:[%s296 + $0x104] sm:%s289]
                  %325 = vst [vmem:[%s297 + $0x34] sm:%s289] %v324
                  %v326 = vld [vmem:[%s296 + $0x118] sm:%s289]
                  %327 = vst [vmem:[%s297 + $0x38] sm:%s289] %v326
                  %v328 = vld [vmem:[%s296 + $0x12c] sm:%s289]
                  %329 = vst [vmem:[%s297 + $0x3c] sm:%s289] %v328
                  %v330 = vld [vmem:[%s296 + $0x140] sm:%s289]
                  %331 = vst [vmem:[%s297 + $0x40] sm:%s289] %v330
                  %v332 = vld [vmem:[%s296 + $0x154] sm:%s289]
                  %333 = vst [vmem:[%s297 + $0x44] sm:%s289] %v332
                  %v334 = vld [vmem:[%s296 + $0x168] sm:%s289]
                  %335 = vst [vmem:[%s297 + $0x48] sm:%s289] %v334
                  %v336 = vld [vmem:[%s296 + $0x17c] sm:%s289]
                  %337 = vst [vmem:[%s297 + $0x4c] sm:%s289] %v336
                  %v338 = vld [vmem:[%s296 + $0x190] sm:%s289]
                  %339 = vst [vmem:[%s297 + $0x50] sm:%s289] %v338
                  %v340 = vld [vmem:[%s296 + $0x1a4] sm:%s289]
                  %341 = vst [vmem:[%s297 + $0x54] sm:%s289] %v340
                  %v342 = vld [vmem:[%s296 + $0x1b8] sm:%s289]
                  %343 = vst [vmem:[%s297 + $0x58] sm:%s289] %v342
                  %v344 = vld [vmem:[%s296 + $0x1cc] sm:%s289]
                  %345 = vst [vmem:[%s297 + $0x5c] sm:%s289] %v344
                  %v346 = vld [vmem:[%s296 + $0x1e0] sm:%s289]
                  %347 = vst [vmem:[%s297 + $0x60] sm:%s289] %v346
                $region63: #{generator_forward.16} parent=50 // loop_footer
                  %s295 = sadd.s32 1, %s291
                $region64: #{generator_forward.16} parent=50 // loop_footer_branch
                  %290 = sbr.rel target = $region60
                $region65: #{generator_forward.16} parent=50 // loop_exit
                  _
              $region51: #{generator_forward.16} parent=35 // pred_fallthru
                _
            $region36: #{generator_forward.16} parent=31 // pred_fallthru
              _
            // Predicated region
            $region37: #{generator_forward.16} parent=31 // pred_check
              _
            $region38: #{generator_forward.16} parent=31 // pred_check_branch
              %217 = sbr.rel (0) target = $region40
            $region39: #{generator_forward.16} parent=31 // pred_region
              %s219 = ssub.s32 16, 1
              loop: start=0, step=1, limit=1
              $region41: #{generator_forward.16} parent=39 // loop_pre_header
                _
              $region42: #{generator_forward.16} parent=39 // loop_header
                %s221 = sphi 0, %s225
                %p222 = scmp.ge.s32.totalorder %s221, 1
                %s226 = sphi %s211, %s211
                %s227 = sphi %s206, %s206
              $region43: #{generator_forward.16} parent=39 // loop_header_branch
                %224 = sbr.rel (%p222) target = $region47
              $region44: #{generator_forward.16} parent=39 // loop_body
                %v228 = vld [vmem:[%s226] sm:%s219]
                %229 = vst [vmem:[%s227] sm:%s219] %v228
                %v230 = vld [vmem:[%s226 + $0x14] sm:%s219]
                %231 = vst [vmem:[%s227 + $0x4] sm:%s219] %v230
                %v232 = vld [vmem:[%s226 + $0x28] sm:%s219]
                %233 = vst [vmem:[%s227 + $0x8] sm:%s219] %v232
                %v234 = vld [vmem:[%s226 + $0x3c] sm:%s219]
                %235 = vst [vmem:[%s227 + $0xc] sm:%s219] %v234
                %v236 = vld [vmem:[%s226 + $0x50] sm:%s219]
                %237 = vst [vmem:[%s227 + $0x10] sm:%s219] %v236
                %v238 = vld [vmem:[%s226 + $0x64] sm:%s219]
                %239 = vst [vmem:[%s227 + $0x14] sm:%s219] %v238
                %v240 = vld [vmem:[%s226 + $0x78] sm:%s219]
                %241 = vst [vmem:[%s227 + $0x18] sm:%s219] %v240
                %v242 = vld [vmem:[%s226 + $0x8c] sm:%s219]
                %243 = vst [vmem:[%s227 + $0x1c] sm:%s219] %v242
                %v244 = vld [vmem:[%s226 + $0xa0] sm:%s219]
                %245 = vst [vmem:[%s227 + $0x20] sm:%s219] %v244
                %v246 = vld [vmem:[%s226 + $0xb4] sm:%s219]
                %247 = vst [vmem:[%s227 + $0x24] sm:%s219] %v246
                %v248 = vld [vmem:[%s226 + $0xc8] sm:%s219]
                %249 = vst [vmem:[%s227 + $0x28] sm:%s219] %v248
                %v250 = vld [vmem:[%s226 + $0xdc] sm:%s219]
                %251 = vst [vmem:[%s227 + $0x2c] sm:%s219] %v250
                %v252 = vld [vmem:[%s226 + $0xf0] sm:%s219]
                %253 = vst [vmem:[%s227 + $0x30] sm:%s219] %v252
                %v254 = vld [vmem:[%s226 + $0x104] sm:%s219]
                %255 = vst [vmem:[%s227 + $0x34] sm:%s219] %v254
                %v256 = vld [vmem:[%s226 + $0x118] sm:%s219]
                %257 = vst [vmem:[%s227 + $0x38] sm:%s219] %v256
                %v258 = vld [vmem:[%s226 + $0x12c] sm:%s219]
                %259 = vst [vmem:[%s227 + $0x3c] sm:%s219] %v258
                %v260 = vld [vmem:[%s226 + $0x140] sm:%s219]
                %261 = vst [vmem:[%s227 + $0x40] sm:%s219] %v260
                %v262 = vld [vmem:[%s226 + $0x154] sm:%s219]
                %263 = vst [vmem:[%s227 + $0x44] sm:%s219] %v262
                %v264 = vld [vmem:[%s226 + $0x168] sm:%s219]
                %265 = vst [vmem:[%s227 + $0x48] sm:%s219] %v264
                %v266 = vld [vmem:[%s226 + $0x17c] sm:%s219]
                %267 = vst [vmem:[%s227 + $0x4c] sm:%s219] %v266
                %v268 = vld [vmem:[%s226 + $0x190] sm:%s219]
                %269 = vst [vmem:[%s227 + $0x50] sm:%s219] %v268
                %v270 = vld [vmem:[%s226 + $0x1a4] sm:%s219]
                %271 = vst [vmem:[%s227 + $0x54] sm:%s219] %v270
                %v272 = vld [vmem:[%s226 + $0x1b8] sm:%s219]
                %273 = vst [vmem:[%s227 + $0x58] sm:%s219] %v272
                %v274 = vld [vmem:[%s226 + $0x1cc] sm:%s219]
                %275 = vst [vmem:[%s227 + $0x5c] sm:%s219] %v274
                %v276 = vld [vmem:[%s226 + $0x1e0] sm:%s219]
                %277 = vst [vmem:[%s227 + $0x60] sm:%s219] %v276
              $region45: #{generator_forward.16} parent=39 // loop_footer
                %s225 = sadd.s32 1, %s221
              $region46: #{generator_forward.16} parent=39 // loop_footer_branch
                %220 = sbr.rel target = $region42
              $region47: #{generator_forward.16} parent=39 // loop_exit
                _
            $region40: #{generator_forward.16} parent=31 // pred_fallthru
              _
          $region32: #{generator_forward.16} parent=27 // pred_fallthru
            _
          %348 = vnop
        $region28: #{generator_forward.16} parent=23 // pred_fallthru
          _
        // Predicated region
        $region66: #{generator_forward.16} parent=23 // pred_check
          %p349 = pneg %p79
        $region67: #{generator_forward.16} parent=23 // pred_check_branch
          %351 = sbr.rel (%p349) target = $region69
        $region68: #{generator_forward.16} parent=23 // pred_region
          %s352 = smul.u32 16, %s19
          %s353 = smul.u32 2, %s18
          %p354 = scmp.lt.s32.totalorder %s352, 79
          %s355 = scalar_select %p354, %s352, 79
          %p356 = scmp.lt.s32.totalorder %s353, 1
          %s357 = scalar_select %p356, %s353, 1
          %s358 = smul.addr %s355, 2
          %s359 = sadd.s32 %s357, %s358
          %s360 = smul.addr %s359, 4
          %s361 = scalar_lea.vmem %s1, %s360
          %s362 = smul.u32 16, %s19
          %s363 = smul.u32 2, %s18
        $region69: #{generator_forward.16} parent=23 // pred_fallthru
          _
      $region24: #{generator_forward.16} parent=5 // pred_fallthru
        _
      %p364 = scmp.le.s32.totalorder 1, %s10
      %p365 = scmp.lt.s32.totalorder %s10, 6
      %p366 = pnand %p364, %p365
      %p367 = pneg %p366
      // Predicated region
      $region70: #{generator_forward.16} parent=5 // pred_check
        _
      $region71: #{generator_forward.16} parent=5 // pred_check_branch
        %369 = sbr.rel (%p366) target = $region73
      $region72: #{generator_forward.16} parent=5 // pred_region
        %s370 = ssub.s32 %s10, 1
        %s371 = sand.u32 %s44, 1
        %s372 = sand.u32 %s44, 1
        %s373 = smul.addr %s372, 100
        %s374 = scalar_lea.vmem [#allocation3], %s373
        // Predicated region
        $region74: #{generator_forward.16} parent=72 // pred_check
          %p375 = pneg %p57
        $region75: #{generator_forward.16} parent=72 // pred_check_branch
          %377 = sbr.rel (%p375) target = $region77
        $region76: #{generator_forward.16} parent=72 // pred_region
          _
        $region77: #{generator_forward.16} parent=72 // pred_fallthru
          _
        %s378 = sand.u32 %s44, 1
        %s379 = sand.u32 %s44, 1
        %s380 = smul.addr %s379, 100
        %s381 = scalar_lea.vmem [#allocation3], %s380
        %p382 = pneg %p57
        %p383 = pneg %p54
        %s384 = smul.u32 16, %s22
        %s385 = smul.u32 2, %s21
        %p386 = scmp.lt.s32.totalorder %s384, 79
        %s387 = scalar_select %p386, %s384, 79
        %p388 = scmp.lt.s32.totalorder %s385, 1
        %s389 = scalar_select %p388, %s385, 1
        %s390 = smul.addr %s387, 2
        %s391 = sadd.s32 %s389, %s390
        %s392 = smul.addr %s391, 4
        %s393 = scalar_lea.vmem %s1, %s392
        %p394 = pneg %p85
        %p395 = pneg %p82
        %s396 = smul.u32 2, %s21
        %p397 = scmp.lt.s32.totalorder %s396, 1
        %s398 = scalar_select %p397, %s396, 1
        %s399 = scalar_lea.vmem %s2, %s398
        %p400 = pneg %p111
        %p401 = pneg %p108
        %s402 = smul.u32 2, %s21
        %p403 = scmp.lt.s32.totalorder %s402, 1
        %s404 = scalar_select %p403, %s402, 1
        %s405 = scalar_lea.vmem %s3, %s404
        %p406 = pneg %p137
        %p407 = pneg %p134
        %p408 = pneg %p165
        %p409 = pneg %p162
        %s410 = smul.u32 25, %s20
        %s411 = smul.u32 2, %s21
        %p412 = scmp.lt.s32.totalorder %s410, 24
        %s413 = scalar_select %p412, %s410, 24
        %p414 = scmp.lt.s32.totalorder %s411, 1
        %s415 = scalar_select %p414, %s411, 1
        %s416 = smul.addr %s413, 2
        %s417 = sadd.s32 %s415, %s416
        %s418 = smul.addr %s417, 4
        %s419 = scalar_lea.vmem %s4, %s418
        %s420 = smul.u32 25, %s20
        %s421 = smul.u32 16, %s22
        %s422 = smul.u32 2, %s21
        %p423 = scmp.lt.s32.totalorder %s421, 79
        %s424 = scalar_select %p423, %s421, 79
        %p425 = scmp.lt.s32.totalorder %s422, 1
        %s426 = scalar_select %p425, %s422, 1
        %s427 = smul.addr %s424, 2
        %s428 = sadd.s32 %s426, %s427
        %s429 = smul.addr %s428, 4
        %s430 = scalar_lea.vmem %s1, %s429
        %s431 = smul.u32 16, %s22
        %s432 = smul.u32 2, %s21
        %s433 = smul.u32 2, %s21
        %p434 = scmp.lt.s32.totalorder %s433, 1
        %s435 = scalar_select %p434, %s433, 1
        %s436 = scalar_lea.vmem %s2, %s435
        %s437 = smul.u32 2, %s21
        %s438 = smul.u32 2, %s21
        %p439 = scmp.lt.s32.totalorder %s438, 1
        %s440 = scalar_select %p439, %s438, 1
        %s441 = scalar_lea.vmem %s3, %s440
        %s442 = smul.u32 2, %s21
        %s443 = smul.u32 25, %s20
        %s444 = smul.u32 2, %s21
        %p445 = scmp.lt.s32.totalorder %s443, 24
        %s446 = scalar_select %p445, %s443, 24
        %p447 = scmp.lt.s32.totalorder %s444, 1
        %s448 = scalar_select %p447, %s444, 1
        %s449 = smul.addr %s446, 2
        %s450 = sadd.s32 %s448, %s449
        %s451 = smul.addr %s450, 4
        %s452 = scalar_lea.vmem %s4, %s451
        %s453 = smul.u32 25, %s20
        %s454 = smul.u32 2, %s21
        %p455 = scmp.eq.s32.totalorder %s22, 0
        // Predicated region
        $region78: #{generator_forward.16} parent=72 // pred_check
          %p456 = pneg %p455
        $region79: #{generator_forward.16} parent=72 // pred_check_branch
          %458 = sbr.rel (%p456) target = $region81
        $region80: #{generator_forward.16} parent=72 // pred_region
          %459 = vst [vmem:[#allocation2] sm:$0xff] 0.0
          %460 = vst [vmem:[#allocation2 + $0x8] sm:$0xff] 0.0
          %461 = vst [vmem:[#allocation2 + $0x10] sm:$0xff] 0.0
          %462 = vst [vmem:[#allocation2 + $0x18] sm:$0xff] 0.0
          %463 = vst [vmem:[#allocation2 + $0x20] sm:$0xff] 0.0
          %464 = vst [vmem:[#allocation2 + $0x28] sm:$0xff] 0.0
          %465 = vst [vmem:[#allocation2 + $0x30] sm:$0xff] 0.0
          %466 = vst [vmem:[#allocation2 + $0x38] sm:$0xff] 0.0
          %467 = vst [vmem:[#allocation2 + $0x40] sm:$0xff] 0.0
          %468 = vst [vmem:[#allocation2 + $0x48] sm:$0xff] 0.0
          %469 = vst [vmem:[#allocation2 + $0x50] sm:$0xff] 0.0
          %470 = vst [vmem:[#allocation2 + $0x58] sm:$0xff] 0.0
          %471 = vst [vmem:[#allocation2 + $0x60] sm:$0xff] 0.0
          %472 = vst [vmem:[#allocation2 + $0x68] sm:$0xff] 0.0
          %473 = vst [vmem:[#allocation2 + $0x70] sm:$0xff] 0.0
          %474 = vst [vmem:[#allocation2 + $0x78] sm:$0xff] 0.0
          %475 = vst [vmem:[#allocation2 + $0x80] sm:$0xff] 0.0
          %476 = vst [vmem:[#allocation2 + $0x88] sm:$0xff] 0.0
          %477 = vst [vmem:[#allocation2 + $0x90] sm:$0xff] 0.0
          %478 = vst [vmem:[#allocation2 + $0x98] sm:$0xff] 0.0
          %479 = vst [vmem:[#allocation2 + $0xa0] sm:$0xff] 0.0
          %480 = vst [vmem:[#allocation2 + $0xa8] sm:$0xff] 0.0
          %481 = vst [vmem:[#allocation2 + $0xb0] sm:$0xff] 0.0
          %482 = vst [vmem:[#allocation2 + $0xb8] sm:$0xff] 0.0
          %483 = vst [vmem:[#allocation2 + $0xc0] sm:$0xff] 0.0
          %484 = vst [vmem:[#allocation2 + $0xc8] sm:$0xff] 0.0
          %485 = vst [vmem:[#allocation2 + $0xd0] sm:$0xff] 0.0
          %486 = vst [vmem:[#allocation2 + $0xd8] sm:$0xff] 0.0
          %487 = vst [vmem:[#allocation2 + $0xe0] sm:$0xff] 0.0
          %488 = vst [vmem:[#allocation2 + $0xe8] sm:$0xff] 0.0
          %489 = vst [vmem:[#allocation2 + $0xf0] sm:$0xff] 0.0
          %490 = vst [vmem:[#allocation2 + $0xf8] sm:$0xff] 0.0
          %491 = vst [vmem:[#allocation2 + $0x100] sm:$0xff] 0.0
          %492 = vst [vmem:[#allocation2 + $0x108] sm:$0xff] 0.0
          %493 = vst [vmem:[#allocation2 + $0x110] sm:$0xff] 0.0
          %494 = vst [vmem:[#allocation2 + $0x118] sm:$0xff] 0.0
          %495 = vst [vmem:[#allocation2 + $0x120] sm:$0xff] 0.0
          %496 = vst [vmem:[#allocation2 + $0x128] sm:$0xff] 0.0
          %497 = vst [vmem:[#allocation2 + $0x130] sm:$0xff] 0.0
          %498 = vst [vmem:[#allocation2 + $0x138] sm:$0xff] 0.0
          %499 = vst [vmem:[#allocation2 + $0x140] sm:$0xff] 0.0
          %500 = vst [vmem:[#allocation2 + $0x148] sm:$0xff] 0.0
          %501 = vst [vmem:[#allocation2 + $0x150] sm:$0xff] 0.0
          %502 = vst [vmem:[#allocation2 + $0x158] sm:$0xff] 0.0
          %503 = vst [vmem:[#allocation2 + $0x160] sm:$0xff] 0.0
          %504 = vst [vmem:[#allocation2 + $0x168] sm:$0xff] 0.0
          %505 = vst [vmem:[#allocation2 + $0x170] sm:$0xff] 0.0
          %506 = vst [vmem:[#allocation2 + $0x178] sm:$0xff] 0.0
          %507 = vst [vmem:[#allocation2 + $0x180] sm:$0xff] 0.0
          %508 = vst [vmem:[#allocation2 + $0x188] sm:$0xff] 0.0
        $region81: #{generator_forward.16} parent=72 // pred_fallthru
          _
        %v509 = vld [vmem:[#allocation2] sm:$0xff]
        %v510 = vld [vmem:[#allocation2 + $0x8] sm:$0xff]
        %v511 = vld [vmem:[#allocation2 + $0x10] sm:$0xff]
        %v512 = vld [vmem:[#allocation2 + $0x18] sm:$0xff]
        %v513 = vld [vmem:[#allocation2 + $0x20] sm:$0xff]
        %v514 = vld [vmem:[#allocation2 + $0x28] sm:$0xff]
        %v515 = vld [vmem:[#allocation2 + $0x30] sm:$0xff]
        %v516 = vld [vmem:[#allocation2 + $0x38] sm:$0xff]
        %v517 = vld [vmem:[#allocation2 + $0x40] sm:$0xff]
        %v518 = vld [vmem:[#allocation2 + $0x48] sm:$0xff]
        %v519 = vld [vmem:[#allocation2 + $0x50] sm:$0xff]
        %v520 = vld [vmem:[#allocation2 + $0x58] sm:$0xff]
        %v521 = vld [vmem:[#allocation2 + $0x60] sm:$0xff]
        %v522 = vld [vmem:[#allocation2 + $0x68] sm:$0xff]
        %v523 = vld [vmem:[#allocation2 + $0x70] sm:$0xff]
        %v524 = vld [vmem:[#allocation2 + $0x78] sm:$0xff]
        %v525 = vld [vmem:[#allocation2 + $0x80] sm:$0xff]
        %v526 = vld [vmem:[#allocation2 + $0x88] sm:$0xff]
        %v527 = vld [vmem:[#allocation2 + $0x90] sm:$0xff]
        %v528 = vld [vmem:[#allocation2 + $0x98] sm:$0xff]
        %v529 = vld [vmem:[#allocation2 + $0xa0] sm:$0xff]
        %v530 = vld [vmem:[#allocation2 + $0xa8] sm:$0xff]
        %v531 = vld [vmem:[#allocation2 + $0xb0] sm:$0xff]
        %v532 = vld [vmem:[#allocation2 + $0xb8] sm:$0xff]
        %v533 = vld [vmem:[#allocation2 + $0xc0] sm:$0xff]
        %v534 = vld [vmem:[#allocation2 + $0xc8] sm:$0xff]
        %v535 = vld [vmem:[#allocation2 + $0xd0] sm:$0xff]
        %v536 = vld [vmem:[#allocation2 + $0xd8] sm:$0xff]
        %v537 = vld [vmem:[#allocation2 + $0xe0] sm:$0xff]
        %v538 = vld [vmem:[#allocation2 + $0xe8] sm:$0xff]
        %v539 = vld [vmem:[#allocation2 + $0xf0] sm:$0xff]
        %v540 = vld [vmem:[#allocation2 + $0xf8] sm:$0xff]
        %v541 = vld [vmem:[#allocation2 + $0x100] sm:$0xff]
        %v542 = vld [vmem:[#allocation2 + $0x108] sm:$0xff]
        %v543 = vld [vmem:[#allocation2 + $0x110] sm:$0xff]
        %v544 = vld [vmem:[#allocation2 + $0x118] sm:$0xff]
        %v545 = vld [vmem:[#allocation2 + $0x120] sm:$0xff]
        %v546 = vld [vmem:[#allocation2 + $0x128] sm:$0xff]
        %v547 = vld [vmem:[#allocation2 + $0x130] sm:$0xff]
        %v548 = vld [vmem:[#allocation2 + $0x138] sm:$0xff]
        %v549 = vld [vmem:[#allocation2 + $0x140] sm:$0xff]
        %v550 = vld [vmem:[#allocation2 + $0x148] sm:$0xff]
        %v551 = vld [vmem:[#allocation2 + $0x150] sm:$0xff]
        %v552 = vld [vmem:[#allocation2 + $0x158] sm:$0xff]
        %v553 = vld [vmem:[#allocation2 + $0x160] sm:$0xff]
        %v554 = vld [vmem:[#allocation2 + $0x168] sm:$0xff]
        %v555 = vld [vmem:[#allocation2 + $0x170] sm:$0xff]
        %v556 = vld [vmem:[#allocation2 + $0x178] sm:$0xff]
        %v557 = vld [vmem:[#allocation2 + $0x180] sm:$0xff]
        %v558 = vld [vmem:[#allocation2 + $0x188] sm:$0xff]
        %v559 = vld [vmem:[%s374] sm:$0xf]
        %v560 = vld [vmem:[%s374 + $0x4] sm:$0xf]
        %v561 = vld [vmem:[%s374 + $0x8] sm:$0xf]
        %v562 = vld [vmem:[%s374 + $0xc] sm:$0xf]
        %v563 = vld [vmem:[%s374 + $0x10] sm:$0xf]
        %v564 = vld [vmem:[%s374 + $0x14] sm:$0xf]
        %v565 = vld [vmem:[%s374 + $0x18] sm:$0xf]
        %v566 = vld [vmem:[%s374 + $0x1c] sm:$0xf]
        %v567 = vld [vmem:[%s374 + $0x20] sm:$0xf]
        %v568 = vld [vmem:[%s374 + $0x24] sm:$0xf]
        %v569 = vld [vmem:[%s374 + $0x28] sm:$0xf]
        %v570 = vld [vmem:[%s374 + $0x2c] sm:$0xf]
        %v571 = vld [vmem:[%s374 + $0x30] sm:$0xf]
        %v572 = vld [vmem:[%s374 + $0x34] sm:$0xf]
        %v573 = vld [vmem:[%s374 + $0x38] sm:$0xf]
        %v574 = vld [vmem:[%s374 + $0x3c] sm:$0xf]
        %v575 = vld [vmem:[%s374 + $0x40] sm:$0xf]
        %v576 = vld [vmem:[%s374 + $0x44] sm:$0xf]
        %v577 = vld [vmem:[%s374 + $0x48] sm:$0xf]
        %v578 = vld [vmem:[%s374 + $0x4c] sm:$0xf]
        %v579 = vld [vmem:[%s374 + $0x50] sm:$0xf]
        %v580 = vld [vmem:[%s374 + $0x54] sm:$0xf]
        %v581 = vld [vmem:[%s374 + $0x58] sm:$0xf]
        %v582 = vld [vmem:[%s374 + $0x5c] sm:$0xf]
        %v583 = vld [vmem:[%s374 + $0x60] sm:$0xf]
        %v584 = vld [vmem:[%s430] sm:$0xff]
        %v585 = vld [vmem:[%s430 + $0x8] sm:$0xff]
        %v586 = vld [vmem:[%s430 + $0x10] sm:$0xff]
        %v587 = vld [vmem:[%s430 + $0x18] sm:$0xff]
        %v588 = vld [vmem:[%s430 + $0x20] sm:$0xff]
        %v589 = vld [vmem:[%s430 + $0x28] sm:$0xff]
        %v590 = vld [vmem:[%s430 + $0x30] sm:$0xff]
        %v591 = vld [vmem:[%s430 + $0x38] sm:$0xff]
        %v592 = vld [vmem:[%s430 + $0x40] sm:$0xff]
        %v593 = vld [vmem:[%s430 + $0x48] sm:$0xff]
        %v594 = vld [vmem:[%s430 + $0x50] sm:$0xff]
        %v595 = vld [vmem:[%s430 + $0x58] sm:$0xff]
        %v596 = vld [vmem:[%s430 + $0x60] sm:$0xff]
        %v597 = vld [vmem:[%s430 + $0x68] sm:$0xff]
        %v598 = vld [vmem:[%s430 + $0x70] sm:$0xff]
        %v599 = vld [vmem:[%s430 + $0x78] sm:$0xff]
        %v625 = vunpack.c.l.b16 %v559
        %v626 = vunpack.c.l.b16 %v560
        %v627 = vunpack.c.l.b16 %v561
        %v628 = vunpack.c.l.b16 %v562
        %v629 = vunpack.c.l.b16 %v563
        %v630 = vunpack.c.l.b16 %v564
        %v631 = vunpack.c.l.b16 %v565
        %v632 = vunpack.c.l.b16 %v566
        %v633 = vunpack.c.l.b16 %v567
        %v634 = vunpack.c.l.b16 %v568
        %v635 = vunpack.c.l.b16 %v569
        %v636 = vunpack.c.l.b16 %v570
        %v637 = vunpack.c.l.b16 %v571
        %v638 = vunpack.c.l.b16 %v572
        %v639 = vunpack.c.l.b16 %v573
        %v640 = vunpack.c.l.b16 %v574
        %v641 = vunpack.c.l.b16 %v575
        %v642 = vunpack.c.l.b16 %v576
        %v643 = vunpack.c.l.b16 %v577
        %v644 = vunpack.c.l.b16 %v578
        %v645 = vunpack.c.l.b16 %v579
        %v646 = vunpack.c.l.b16 %v580
        %v647 = vunpack.c.l.b16 %v581
        %v648 = vunpack.c.l.b16 %v582
        %v649 = vunpack.c.l.b16 %v583
        %v650 = vpack.c.b16 %v626, %v625
        %v651 = vpack.c.b16 %v628, %v627
        %v652 = vpack.c.b16 %v630, %v629
        %v653 = vpack.c.b16 %v632, %v631
        %v654 = vpack.c.b16 %v634, %v633
        %v655 = vpack.c.b16 %v636, %v635
        %v656 = vpack.c.b16 %v638, %v637
        %v657 = vpack.c.b16 %v640, %v639
        %v658 = vpack.c.b16 %v642, %v641
        %v659 = vpack.c.b16 %v644, %v643
        %v660 = vpack.c.b16 %v646, %v645
        %v661 = vpack.c.b16 %v648, %v647
        %v662 = vpack.c.b16 %v649, %v649
        %v692 = vunpack.c.l.b16 %v584
        %v693 = vunpack.c.h.b16 %v584
        %v694 = vunpack.c.l.b16 %v585
        %v695 = vunpack.c.h.b16 %v585
        %v696 = vunpack.c.l.b16 %v586
        %v697 = vunpack.c.h.b16 %v586
        %v698 = vunpack.c.l.b16 %v587
        %v699 = vunpack.c.h.b16 %v587
        %v700 = vunpack.c.l.b16 %v588
        %v701 = vunpack.c.h.b16 %v588
        %v702 = vunpack.c.l.b16 %v589
        %v703 = vunpack.c.h.b16 %v589
        %v704 = vunpack.c.l.b16 %v590
        %v705 = vunpack.c.h.b16 %v590
        %v706 = vunpack.c.l.b16 %v591
        %v707 = vunpack.c.h.b16 %v591
        %v708 = vunpack.c.l.b16 %v592
        %v709 = vunpack.c.h.b16 %v592
        %v710 = vunpack.c.l.b16 %v593
        %v711 = vunpack.c.h.b16 %v593
        %v712 = vunpack.c.l.b16 %v594
        %v713 = vunpack.c.h.b16 %v594
        %v714 = vunpack.c.l.b16 %v595
        %v715 = vunpack.c.h.b16 %v595
        %v716 = vunpack.c.l.b16 %v596
        %v717 = vunpack.c.h.b16 %v596
        %v718 = vunpack.c.l.b16 %v597
        %v719 = vunpack.c.h.b16 %v597
        %v720 = vunpack.c.l.b16 %v598
        %v721 = vunpack.c.h.b16 %v598
        %v722 = vunpack.c.l.b16 %v599
        %v723 = vunpack.c.h.b16 %v599
        %v724 = vpack.c.b16 %v694, %v692
        %v725 = vpack.c.b16 %v695, %v693
        %v726 = vpack.c.b16 %v698, %v696
        %v727 = vpack.c.b16 %v699, %v697
        %v728 = vpack.c.b16 %v702, %v700
        %v729 = vpack.c.b16 %v703, %v701
        %v730 = vpack.c.b16 %v706, %v704
        %v731 = vpack.c.b16 %v707, %v705
        %v732 = vpack.c.b16 %v710, %v708
        %v733 = vpack.c.b16 %v711, %v709
        %v734 = vpack.c.b16 %v714, %v712
        %v735 = vpack.c.b16 %v715, %v713
        %v736 = vpack.c.b16 %v718, %v716
        %v737 = vpack.c.b16 %v719, %v717
        %v738 = vpack.c.b16 %v722, %v720
        %v739 = vpack.c.b16 %v723, %v721
        %756 = vmatpush.bf16.msra.mxu0 %v738
        %757 = vmatpush.bf16.msra.mxu0 %v736
        %758 = vmatpush.bf16.msra.mxu0 %v734
        %759 = vmatpush.bf16.msra.mxu0 %v732
        %760 = vmatpush.bf16.msra.mxu0 %v730
        %761 = vmatpush.bf16.msra.mxu0 %v728
        %762 = vmatpush.bf16.msra.mxu0 %v726
        %763 = vmatpush.bf16.msra.mxu0 %v724
        %764 = vmatmul.bf16.gmra.mxu0 %v650
        %v765 = vpop.f32.mrf.mxu0
        %v766 = vadd.f32 0.0, %v765
        %v767 = vpop.f32.mrf.mxu0
        %v768 = vadd.f32 0.0, %v767
        %769 = vmatmul.bf16.gmra.mxu0 %v651
        %v770 = vpop.f32.mrf.mxu0
        %v771 = vadd.f32 0.0, %v770
        %v772 = vpop.f32.mrf.mxu0
        %v773 = vadd.f32 0.0, %v772
        %774 = vmatmul.bf16.gmra.mxu0 %v652
        %v775 = vpop.f32.mrf.mxu0
        %v776 = vadd.f32 0.0, %v775
        %v777 = vpop.f32.mrf.mxu0
        %v778 = vadd.f32 0.0, %v777
        %779 = vmatmul.bf16.gmra.mxu0 %v653
        %v780 = vpop.f32.mrf.mxu0
        %v781 = vadd.f32 0.0, %v780
        %v782 = vpop.f32.mrf.mxu0
        %v783 = vadd.f32 0.0, %v782
        %784 = vmatmul.bf16.gmra.mxu0 %v654
        %v785 = vpop.f32.mrf.mxu0
        %v786 = vadd.f32 0.0, %v785
        %v787 = vpop.f32.mrf.mxu0
        %v788 = vadd.f32 0.0, %v787
        %789 = vmatmul.bf16.gmra.mxu0 %v655
        %v790 = vpop.f32.mrf.mxu0
        %v791 = vadd.f32 0.0, %v790
        %v792 = vpop.f32.mrf.mxu0
        %v793 = vadd.f32 0.0, %v792
        %794 = vmatmul.bf16.gmra.mxu0 %v656
        %v795 = vpop.f32.mrf.mxu0
        %v796 = vadd.f32 0.0, %v795
        %v797 = vpop.f32.mrf.mxu0
        %v798 = vadd.f32 0.0, %v797
        %799 = vmatmul.bf16.gmra.mxu0 %v657
        %v800 = vpop.f32.mrf.mxu0
        %v801 = vadd.f32 0.0, %v800
        %v802 = vpop.f32.mrf.mxu0
        %v803 = vadd.f32 0.0, %v802
        %804 = vmatmul.bf16.gmra.mxu0 %v658
        %v805 = vpop.f32.mrf.mxu0
        %v806 = vadd.f32 0.0, %v805
        %v807 = vpop.f32.mrf.mxu0
        %v808 = vadd.f32 0.0, %v807
        %809 = vmatmul.bf16.gmra.mxu0 %v659
        %v810 = vpop.f32.mrf.mxu0
        %v811 = vadd.f32 0.0, %v810
        %v812 = vpop.f32.mrf.mxu0
        %v813 = vadd.f32 0.0, %v812
        %814 = vmatmul.bf16.gmra.mxu0 %v660
        %v815 = vpop.f32.mrf.mxu0
        %v816 = vadd.f32 0.0, %v815
        %v817 = vpop.f32.mrf.mxu0
        %v818 = vadd.f32 0.0, %v817
        %819 = vmatmul.bf16.gmra.mxu0 %v661
        %v820 = vpop.f32.mrf.mxu0
        %v821 = vadd.f32 0.0, %v820
        %v822 = vpop.f32.mrf.mxu0
        %v823 = vadd.f32 0.0, %v822
        %824 = vmatmul.bf16.gmra.mxu0 %v662
        %v825 = vpop.f32.mrf.mxu0
        %v826 = vadd.f32 0.0, %v825
        %v827 = vpop.f32.mrf.mxu0
        %828 = vdwg.mxu0
        %829 = vmatpush.bf16.msra.mxu0 %v739
        %830 = vmatpush.bf16.msra.mxu0 %v737
        %831 = vmatpush.bf16.msra.mxu0 %v735
        %832 = vmatpush.bf16.msra.mxu0 %v733
        %833 = vmatpush.bf16.msra.mxu0 %v731
        %834 = vmatpush.bf16.msra.mxu0 %v729
        %835 = vmatpush.bf16.msra.mxu0 %v727
        %836 = vmatpush.bf16.msra.mxu0 %v725
        %837 = vmatmul.bf16.gmra.mxu0 %v650
        %v838 = vpop.f32.mrf.mxu0
        %v839 = vadd.f32 0.0, %v838
        %v840 = vpop.f32.mrf.mxu0
        %v841 = vadd.f32 0.0, %v840
        %842 = vmatmul.bf16.gmra.mxu0 %v651
        %v843 = vpop.f32.mrf.mxu0
        %v844 = vadd.f32 0.0, %v843
        %v845 = vpop.f32.mrf.mxu0
        %v846 = vadd.f32 0.0, %v845
        %847 = vmatmul.bf16.gmra.mxu0 %v652
        %v848 = vpop.f32.mrf.mxu0
        %v849 = vadd.f32 0.0, %v848
        %v850 = vpop.f32.mrf.mxu0
        %v851 = vadd.f32 0.0, %v850
        %852 = vmatmul.bf16.gmra.mxu0 %v653
        %v853 = vpop.f32.mrf.mxu0
        %v854 = vadd.f32 0.0, %v853
        %v855 = vpop.f32.mrf.mxu0
        %v856 = vadd.f32 0.0, %v855
        %857 = vmatmul.bf16.gmra.mxu0 %v654
        %v858 = vpop.f32.mrf.mxu0
        %v859 = vadd.f32 0.0, %v858
        %v860 = vpop.f32.mrf.mxu0
        %v861 = vadd.f32 0.0, %v860
        %862 = vmatmul.bf16.gmra.mxu0 %v655
        %v863 = vpop.f32.mrf.mxu0
        %v864 = vadd.f32 0.0, %v863
        %v865 = vpop.f32.mrf.mxu0
        %v866 = vadd.f32 0.0, %v865
        %867 = vmatmul.bf16.gmra.mxu0 %v656
        %v868 = vpop.f32.mrf.mxu0
        %v869 = vadd.f32 0.0, %v868
        %v870 = vpop.f32.mrf.mxu0
        %v871 = vadd.f32 0.0, %v870
        %872 = vmatmul.bf16.gmra.mxu0 %v657
        %v873 = vpop.f32.mrf.mxu0
        %v874 = vadd.f32 0.0, %v873
        %v875 = vpop.f32.mrf.mxu0
        %v876 = vadd.f32 0.0, %v875
        %877 = vmatmul.bf16.gmra.mxu0 %v658
        %v878 = vpop.f32.mrf.mxu0
        %v879 = vadd.f32 0.0, %v878
        %v880 = vpop.f32.mrf.mxu0
        %v881 = vadd.f32 0.0, %v880
        %882 = vmatmul.bf16.gmra.mxu0 %v659
        %v883 = vpop.f32.mrf.mxu0
        %v884 = vadd.f32 0.0, %v883
        %v885 = vpop.f32.mrf.mxu0
        %v886 = vadd.f32 0.0, %v885
        %887 = vmatmul.bf16.gmra.mxu0 %v660
        %v888 = vpop.f32.mrf.mxu0
        %v889 = vadd.f32 0.0, %v888
        %v890 = vpop.f32.mrf.mxu0
        %v891 = vadd.f32 0.0, %v890
        %892 = vmatmul.bf16.gmra.mxu0 %v661
        %v893 = vpop.f32.mrf.mxu0
        %v894 = vadd.f32 0.0, %v893
        %v895 = vpop.f32.mrf.mxu0
        %v896 = vadd.f32 0.0, %v895
        %897 = vmatmul.bf16.gmra.mxu0 %v662
        %v898 = vpop.f32.mrf.mxu0
        %v899 = vadd.f32 0.0, %v898
        %v900 = vpop.f32.mrf.mxu0
        %901 = vdwg.mxu0
        %v902 = vadd.f32 %v509, %v766
        %v903 = vadd.f32 %v510, %v839
        %v904 = vadd.f32 %v511, %v768
        %v905 = vadd.f32 %v512, %v841
        %v906 = vadd.f32 %v513, %v771
        %v907 = vadd.f32 %v514, %v844
        %v908 = vadd.f32 %v515, %v773
        %v909 = vadd.f32 %v516, %v846
        %v910 = vadd.f32 %v517, %v776
        %v911 = vadd.f32 %v518, %v849
        %v912 = vadd.f32 %v519, %v778
        %v913 = vadd.f32 %v520, %v851
        %v914 = vadd.f32 %v521, %v781
        %v915 = vadd.f32 %v522, %v854
        %v916 = vadd.f32 %v523, %v783
        %v917 = vadd.f32 %v524, %v856
        %v918 = vadd.f32 %v525, %v786
        %v919 = vadd.f32 %v526, %v859
        %v920 = vadd.f32 %v527, %v788
        %v921 = vadd.f32 %v528, %v861
        %v922 = vadd.f32 %v529, %v791
        %v923 = vadd.f32 %v530, %v864
        %v924 = vadd.f32 %v531, %v793
        %v925 = vadd.f32 %v532, %v866
        %v926 = vadd.f32 %v533, %v796
        %v927 = vadd.f32 %v534, %v869
        %v928 = vadd.f32 %v535, %v798
        %v929 = vadd.f32 %v536, %v871
        %v930 = vadd.f32 %v537, %v801
        %v931 = vadd.f32 %v538, %v874
        %v932 = vadd.f32 %v539, %v803
        %v933 = vadd.f32 %v540, %v876
        %v934 = vadd.f32 %v541, %v806
        %v935 = vadd.f32 %v542, %v879
        %v936 = vadd.f32 %v543, %v808
        %v937 = vadd.f32 %v544, %v881
        %v938 = vadd.f32 %v545, %v811
        %v939 = vadd.f32 %v546, %v884
        %v940 = vadd.f32 %v547, %v813
        %v941 = vadd.f32 %v548, %v886
        %v942 = vadd.f32 %v549, %v816
        %v943 = vadd.f32 %v550, %v889
        %v944 = vadd.f32 %v551, %v818
        %v945 = vadd.f32 %v552, %v891
        %v946 = vadd.f32 %v553, %v821
        %v947 = vadd.f32 %v554, %v894
        %v948 = vadd.f32 %v555, %v823
        %v949 = vadd.f32 %v556, %v896
        %v950 = vadd.f32 %v557, %v826
        %v951 = vadd.f32 %v558, %v899
        %952 = vst [vmem:[#allocation2] sm:$0xff] %v902
        %953 = vst [vmem:[#allocation2 + $0x8] sm:$0xff] %v903
        %954 = vst [vmem:[#allocation2 + $0x10] sm:$0xff] %v904
        %955 = vst [vmem:[#allocation2 + $0x18] sm:$0xff] %v905
        %956 = vst [vmem:[#allocation2 + $0x20] sm:$0xff] %v906
        %957 = vst [vmem:[#allocation2 + $0x28] sm:$0xff] %v907
        %958 = vst [vmem:[#allocation2 + $0x30] sm:$0xff] %v908
        %959 = vst [vmem:[#allocation2 + $0x38] sm:$0xff] %v909
        %960 = vst [vmem:[#allocation2 + $0x40] sm:$0xff] %v910
        %961 = vst [vmem:[#allocation2 + $0x48] sm:$0xff] %v911
        %962 = vst [vmem:[#allocation2 + $0x50] sm:$0xff] %v912
        %963 = vst [vmem:[#allocation2 + $0x58] sm:$0xff] %v913
        %964 = vst [vmem:[#allocation2 + $0x60] sm:$0xff] %v914
        %965 = vst [vmem:[#allocation2 + $0x68] sm:$0xff] %v915
        %966 = vst [vmem:[#allocation2 + $0x70] sm:$0xff] %v916
        %967 = vst [vmem:[#allocation2 + $0x78] sm:$0xff] %v917
        %968 = vst [vmem:[#allocation2 + $0x80] sm:$0xff] %v918
        %969 = vst [vmem:[#allocation2 + $0x88] sm:$0xff] %v919
        %970 = vst [vmem:[#allocation2 + $0x90] sm:$0xff] %v920
        %971 = vst [vmem:[#allocation2 + $0x98] sm:$0xff] %v921
        %972 = vst [vmem:[#allocation2 + $0xa0] sm:$0xff] %v922
        %973 = vst [vmem:[#allocation2 + $0xa8] sm:$0xff] %v923
        %974 = vst [vmem:[#allocation2 + $0xb0] sm:$0xff] %v924
        %975 = vst [vmem:[#allocation2 + $0xb8] sm:$0xff] %v925
        %976 = vst [vmem:[#allocation2 + $0xc0] sm:$0xff] %v926
        %977 = vst [vmem:[#allocation2 + $0xc8] sm:$0xff] %v927
        %978 = vst [vmem:[#allocation2 + $0xd0] sm:$0xff] %v928
        %979 = vst [vmem:[#allocation2 + $0xd8] sm:$0xff] %v929
        %980 = vst [vmem:[#allocation2 + $0xe0] sm:$0xff] %v930
        %981 = vst [vmem:[#allocation2 + $0xe8] sm:$0xff] %v931
        %982 = vst [vmem:[#allocation2 + $0xf0] sm:$0xff] %v932
        %983 = vst [vmem:[#allocation2 + $0xf8] sm:$0xff] %v933
        %984 = vst [vmem:[#allocation2 + $0x100] sm:$0xff] %v934
        %985 = vst [vmem:[#allocation2 + $0x108] sm:$0xff] %v935
        %986 = vst [vmem:[#allocation2 + $0x110] sm:$0xff] %v936
        %987 = vst [vmem:[#allocation2 + $0x118] sm:$0xff] %v937
        %988 = vst [vmem:[#allocation2 + $0x120] sm:$0xff] %v938
        %989 = vst [vmem:[#allocation2 + $0x128] sm:$0xff] %v939
        %990 = vst [vmem:[#allocation2 + $0x130] sm:$0xff] %v940
        %991 = vst [vmem:[#allocation2 + $0x138] sm:$0xff] %v941
        %992 = vst [vmem:[#allocation2 + $0x140] sm:$0xff] %v942
        %993 = vst [vmem:[#allocation2 + $0x148] sm:$0xff] %v943
        %994 = vst [vmem:[#allocation2 + $0x150] sm:$0xff] %v944
        %995 = vst [vmem:[#allocation2 + $0x158] sm:$0xff] %v945
        %996 = vst [vmem:[#allocation2 + $0x160] sm:$0xff] %v946
        %997 = vst [vmem:[#allocation2 + $0x168] sm:$0xff] %v947
        %998 = vst [vmem:[#allocation2 + $0x170] sm:$0xff] %v948
        %999 = vst [vmem:[#allocation2 + $0x178] sm:$0xff] %v949
        %1000 = vst [vmem:[#allocation2 + $0x180] sm:$0xff] %v950
        %1001 = vst [vmem:[#allocation2 + $0x188] sm:$0xff] %v951
        %p1002 = scmp.eq.s32.totalorder %s22, 4
        // Predicated region
        $region82: #{generator_forward.16} parent=72 // pred_check
          %p1003 = pneg %p1002
        $region83: #{generator_forward.16} parent=72 // pred_check_branch
          %1005 = sbr.rel (%p1003) target = $region85
        $region84: #{generator_forward.16} parent=72 // pred_region
          %v1006 = vld [vmem:[#allocation2] sm:$0xff]
          %v1007 = vld [vmem:[#allocation2 + $0x8] sm:$0xff]
          %v1008 = vld [vmem:[#allocation2 + $0x10] sm:$0xff]
          %v1009 = vld [vmem:[#allocation2 + $0x18] sm:$0xff]
          %v1010 = vld [vmem:[#allocation2 + $0x20] sm:$0xff]
          %v1011 = vld [vmem:[#allocation2 + $0x28] sm:$0xff]
          %v1012 = vld [vmem:[#allocation2 + $0x30] sm:$0xff]
          %v1013 = vld [vmem:[#allocation2 + $0x38] sm:$0xff]
          %v1014 = vld [vmem:[#allocation2 + $0x40] sm:$0xff]
          %v1015 = vld [vmem:[#allocation2 + $0x48] sm:$0xff]
          %v1016 = vld [vmem:[#allocation2 + $0x50] sm:$0xff]
          %v1017 = vld [vmem:[#allocation2 + $0x58] sm:$0xff]
          %v1018 = vld [vmem:[#allocation2 + $0x60] sm:$0xff]
          %v1019 = vld [vmem:[#allocation2 + $0x68] sm:$0xff]
          %v1020 = vld [vmem:[#allocation2 + $0x70] sm:$0xff]
          %v1021 = vld [vmem:[#allocation2 + $0x78] sm:$0xff]
          %v1022 = vld [vmem:[#allocation2 + $0x80] sm:$0xff]
          %v1023 = vld [vmem:[#allocation2 + $0x88] sm:$0xff]
          %v1024 = vld [vmem:[#allocation2 + $0x90] sm:$0xff]
          %v1025 = vld [vmem:[#allocation2 + $0x98] sm:$0xff]
          %v1026 = vld [vmem:[#allocation2 + $0xa0] sm:$0xff]
          %v1027 = vld [vmem:[#allocation2 + $0xa8] sm:$0xff]
          %v1028 = vld [vmem:[#allocation2 + $0xb0] sm:$0xff]
          %v1029 = vld [vmem:[#allocation2 + $0xb8] sm:$0xff]
          %v1030 = vld [vmem:[#allocation2 + $0xc0] sm:$0xff]
          %v1031 = vld [vmem:[#allocation2 + $0xc8] sm:$0xff]
          %v1032 = vld [vmem:[#allocation2 + $0xd0] sm:$0xff]
          %v1033 = vld [vmem:[#allocation2 + $0xd8] sm:$0xff]
          %v1034 = vld [vmem:[#allocation2 + $0xe0] sm:$0xff]
          %v1035 = vld [vmem:[#allocation2 + $0xe8] sm:$0xff]
          %v1036 = vld [vmem:[#allocation2 + $0xf0] sm:$0xff]
          %v1037 = vld [vmem:[#allocation2 + $0xf8] sm:$0xff]
          %v1038 = vld [vmem:[#allocation2 + $0x100] sm:$0xff]
          %v1039 = vld [vmem:[#allocation2 + $0x108] sm:$0xff]
          %v1040 = vld [vmem:[#allocation2 + $0x110] sm:$0xff]
          %v1041 = vld [vmem:[#allocation2 + $0x118] sm:$0xff]
          %v1042 = vld [vmem:[#allocation2 + $0x120] sm:$0xff]
          %v1043 = vld [vmem:[#allocation2 + $0x128] sm:$0xff]
          %v1044 = vld [vmem:[#allocation2 + $0x130] sm:$0xff]
          %v1045 = vld [vmem:[#allocation2 + $0x138] sm:$0xff]
          %v1046 = vld [vmem:[#allocation2 + $0x140] sm:$0xff]
          %v1047 = vld [vmem:[#allocation2 + $0x148] sm:$0xff]
          %v1048 = vld [vmem:[#allocation2 + $0x150] sm:$0xff]
          %v1049 = vld [vmem:[#allocation2 + $0x158] sm:$0xff]
          %v1050 = vld [vmem:[#allocation2 + $0x160] sm:$0xff]
          %v1051 = vld [vmem:[#allocation2 + $0x168] sm:$0xff]
          %v1052 = vld [vmem:[#allocation2 + $0x170] sm:$0xff]
          %v1053 = vld [vmem:[#allocation2 + $0x178] sm:$0xff]
          %v1054 = vld [vmem:[#allocation2 + $0x180] sm:$0xff]
          %v1055 = vld [vmem:[#allocation2 + $0x188] sm:$0xff]
          %v1056 = vld [vmem:[%s436] sm:$0x3]
          %v1058 = vperm.slane %v1056, 0
          %v1059 = vperm.slane %v1056, 1
          %v1062 = vadd.f32 %v1006, %v1058
          %v1063 = vadd.f32 %v1007, %v1059
          %v1064 = vadd.f32 %v1008, %v1058
          %v1065 = vadd.f32 %v1009, %v1059
          %v1066 = vadd.f32 %v1010, %v1058
          %v1067 = vadd.f32 %v1011, %v1059
          %v1068 = vadd.f32 %v1012, %v1058
          %v1069 = vadd.f32 %v1013, %v1059
          %v1070 = vadd.f32 %v1014, %v1058
          %v1071 = vadd.f32 %v1015, %v1059
          %v1072 = vadd.f32 %v1016, %v1058
          %v1073 = vadd.f32 %v1017, %v1059
          %v1074 = vadd.f32 %v1018, %v1058
          %v1075 = vadd.f32 %v1019, %v1059
          %v1076 = vadd.f32 %v1020, %v1058
          %v1077 = vadd.f32 %v1021, %v1059
          %v1078 = vadd.f32 %v1022, %v1058
          %v1079 = vadd.f32 %v1023, %v1059
          %v1080 = vadd.f32 %v1024, %v1058
          %v1081 = vadd.f32 %v1025, %v1059
          %v1082 = vadd.f32 %v1026, %v1058
          %v1083 = vadd.f32 %v1027, %v1059
          %v1084 = vadd.f32 %v1028, %v1058
          %v1085 = vadd.f32 %v1029, %v1059
          %v1086 = vadd.f32 %v1030, %v1058
          %v1087 = vadd.f32 %v1031, %v1059
          %v1088 = vadd.f32 %v1032, %v1058
          %v1089 = vadd.f32 %v1033, %v1059
          %v1090 = vadd.f32 %v1034, %v1058
          %v1091 = vadd.f32 %v1035, %v1059
          %v1092 = vadd.f32 %v1036, %v1058
          %v1093 = vadd.f32 %v1037, %v1059
          %v1094 = vadd.f32 %v1038, %v1058
          %v1095 = vadd.f32 %v1039, %v1059
          %v1096 = vadd.f32 %v1040, %v1058
          %v1097 = vadd.f32 %v1041, %v1059
          %v1098 = vadd.f32 %v1042, %v1058
          %v1099 = vadd.f32 %v1043, %v1059
          %v1100 = vadd.f32 %v1044, %v1058
          %v1101 = vadd.f32 %v1045, %v1059
          %v1102 = vadd.f32 %v1046, %v1058
          %v1103 = vadd.f32 %v1047, %v1059
          %v1104 = vadd.f32 %v1048, %v1058
          %v1105 = vadd.f32 %v1049, %v1059
          %v1106 = vadd.f32 %v1050, %v1058
          %v1107 = vadd.f32 %v1051, %v1059
          %v1108 = vadd.f32 %v1052, %v1058
          %v1109 = vadd.f32 %v1053, %v1059
          %v1110 = vadd.f32 %v1054, %v1058
          %v1111 = vadd.f32 %v1055, %v1059
          %vm1112 = vcmp.ge.f32.partialorder %v1062, 0.0
          %vm1113 = vcmp.ge.f32.partialorder %v1063, 0.0
          %vm1114 = vcmp.ge.f32.partialorder %v1064, 0.0
          %vm1115 = vcmp.ge.f32.partialorder %v1065, 0.0
          %vm1116 = vcmp.ge.f32.partialorder %v1066, 0.0
          %vm1117 = vcmp.ge.f32.partialorder %v1067, 0.0
          %vm1118 = vcmp.ge.f32.partialorder %v1068, 0.0
          %vm1119 = vcmp.ge.f32.partialorder %v1069, 0.0
          %vm1120 = vcmp.ge.f32.partialorder %v1070, 0.0
          %vm1121 = vcmp.ge.f32.partialorder %v1071, 0.0
          %vm1122 = vcmp.ge.f32.partialorder %v1072, 0.0
          %vm1123 = vcmp.ge.f32.partialorder %v1073, 0.0
          %vm1124 = vcmp.ge.f32.partialorder %v1074, 0.0
          %vm1125 = vcmp.ge.f32.partialorder %v1075, 0.0
          %vm1126 = vcmp.ge.f32.partialorder %v1076, 0.0
          %vm1127 = vcmp.ge.f32.partialorder %v1077, 0.0
          %vm1128 = vcmp.ge.f32.partialorder %v1078, 0.0
          %vm1129 = vcmp.ge.f32.partialorder %v1079, 0.0
          %vm1130 = vcmp.ge.f32.partialorder %v1080, 0.0
          %vm1131 = vcmp.ge.f32.partialorder %v1081, 0.0
          %vm1132 = vcmp.ge.f32.partialorder %v1082, 0.0
          %vm1133 = vcmp.ge.f32.partialorder %v1083, 0.0
          %vm1134 = vcmp.ge.f32.partialorder %v1084, 0.0
          %vm1135 = vcmp.ge.f32.partialorder %v1085, 0.0
          %vm1136 = vcmp.ge.f32.partialorder %v1086, 0.0
          %vm1137 = vcmp.ge.f32.partialorder %v1087, 0.0
          %vm1138 = vcmp.ge.f32.partialorder %v1088, 0.0
          %vm1139 = vcmp.ge.f32.partialorder %v1089, 0.0
          %vm1140 = vcmp.ge.f32.partialorder %v1090, 0.0
          %vm1141 = vcmp.ge.f32.partialorder %v1091, 0.0
          %vm1142 = vcmp.ge.f32.partialorder %v1092, 0.0
          %vm1143 = vcmp.ge.f32.partialorder %v1093, 0.0
          %vm1144 = vcmp.ge.f32.partialorder %v1094, 0.0
          %vm1145 = vcmp.ge.f32.partialorder %v1095, 0.0
          %vm1146 = vcmp.ge.f32.partialorder %v1096, 0.0
          %vm1147 = vcmp.ge.f32.partialorder %v1097, 0.0
          %vm1148 = vcmp.ge.f32.partialorder %v1098, 0.0
          %vm1149 = vcmp.ge.f32.partialorder %v1099, 0.0
          %vm1150 = vcmp.ge.f32.partialorder %v1100, 0.0
          %vm1151 = vcmp.ge.f32.partialorder %v1101, 0.0
          %vm1152 = vcmp.ge.f32.partialorder %v1102, 0.0
          %vm1153 = vcmp.ge.f32.partialorder %v1103, 0.0
          %vm1154 = vcmp.ge.f32.partialorder %v1104, 0.0
          %vm1155 = vcmp.ge.f32.partialorder %v1105, 0.0
          %vm1156 = vcmp.ge.f32.partialorder %v1106, 0.0
          %vm1157 = vcmp.ge.f32.partialorder %v1107, 0.0
          %vm1158 = vcmp.ge.f32.partialorder %v1108, 0.0
          %vm1159 = vcmp.ge.f32.partialorder %v1109, 0.0
          %vm1160 = vcmp.ge.f32.partialorder %v1110, 0.0
          %vm1161 = vcmp.ge.f32.partialorder %v1111, 0.0
          %v1162 = vld [vmem:[%s441] sm:$0x3]
          %v1164 = vperm.slane %v1162, 0
          %v1165 = vperm.slane %v1162, 1
          %v1168 = vmul.f32 %v1062, %v1164
          %v1169 = vmul.f32 %v1063, %v1165
          %v1170 = vmul.f32 %v1064, %v1164
          %v1171 = vmul.f32 %v1065, %v1165
          %v1172 = vmul.f32 %v1066, %v1164
          %v1173 = vmul.f32 %v1067, %v1165
          %v1174 = vmul.f32 %v1068, %v1164
          %v1175 = vmul.f32 %v1069, %v1165
          %v1176 = vmul.f32 %v1070, %v1164
          %v1177 = vmul.f32 %v1071, %v1165
          %v1178 = vmul.f32 %v1072, %v1164
          %v1179 = vmul.f32 %v1073, %v1165
          %v1180 = vmul.f32 %v1074, %v1164
          %v1181 = vmul.f32 %v1075, %v1165
          %v1182 = vmul.f32 %v1076, %v1164
          %v1183 = vmul.f32 %v1077, %v1165
          %v1184 = vmul.f32 %v1078, %v1164
          %v1185 = vmul.f32 %v1079, %v1165
          %v1186 = vmul.f32 %v1080, %v1164
          %v1187 = vmul.f32 %v1081, %v1165
          %v1188 = vmul.f32 %v1082, %v1164
          %v1189 = vmul.f32 %v1083, %v1165
          %v1190 = vmul.f32 %v1084, %v1164
          %v1191 = vmul.f32 %v1085, %v1165
          %v1192 = vmul.f32 %v1086, %v1164
          %v1193 = vmul.f32 %v1087, %v1165
          %v1194 = vmul.f32 %v1088, %v1164
          %v1195 = vmul.f32 %v1089, %v1165
          %v1196 = vmul.f32 %v1090, %v1164
          %v1197 = vmul.f32 %v1091, %v1165
          %v1198 = vmul.f32 %v1092, %v1164
          %v1199 = vmul.f32 %v1093, %v1165
          %v1200 = vmul.f32 %v1094, %v1164
          %v1201 = vmul.f32 %v1095, %v1165
          %v1202 = vmul.f32 %v1096, %v1164
          %v1203 = vmul.f32 %v1097, %v1165
          %v1204 = vmul.f32 %v1098, %v1164
          %v1205 = vmul.f32 %v1099, %v1165
          %v1206 = vmul.f32 %v1100, %v1164
          %v1207 = vmul.f32 %v1101, %v1165
          %v1208 = vmul.f32 %v1102, %v1164
          %v1209 = vmul.f32 %v1103, %v1165
          %v1210 = vmul.f32 %v1104, %v1164
          %v1211 = vmul.f32 %v1105, %v1165
          %v1212 = vmul.f32 %v1106, %v1164
          %v1213 = vmul.f32 %v1107, %v1165
          %v1214 = vmul.f32 %v1108, %v1164
          %v1215 = vmul.f32 %v1109, %v1165
          %v1216 = vmul.f32 %v1110, %v1164
          %v1217 = vmul.f32 %v1111, %v1165
          %v1218 = vsel %vm1112, %v1062, %v1168
          %v1219 = vsel %vm1113, %v1063, %v1169
          %v1220 = vsel %vm1114, %v1064, %v1170
          %v1221 = vsel %vm1115, %v1065, %v1171
          %v1222 = vsel %vm1116, %v1066, %v1172
          %v1223 = vsel %vm1117, %v1067, %v1173
          %v1224 = vsel %vm1118, %v1068, %v1174
          %v1225 = vsel %vm1119, %v1069, %v1175
          %v1226 = vsel %vm1120, %v1070, %v1176
          %v1227 = vsel %vm1121, %v1071, %v1177
          %v1228 = vsel %vm1122, %v1072, %v1178
          %v1229 = vsel %vm1123, %v1073, %v1179
          %v1230 = vsel %vm1124, %v1074, %v1180
          %v1231 = vsel %vm1125, %v1075, %v1181
          %v1232 = vsel %vm1126, %v1076, %v1182
          %v1233 = vsel %vm1127, %v1077, %v1183
          %v1234 = vsel %vm1128, %v1078, %v1184
          %v1235 = vsel %vm1129, %v1079, %v1185
          %v1236 = vsel %vm1130, %v1080, %v1186
          %v1237 = vsel %vm1131, %v1081, %v1187
          %v1238 = vsel %vm1132, %v1082, %v1188
          %v1239 = vsel %vm1133, %v1083, %v1189
          %v1240 = vsel %vm1134, %v1084, %v1190
          %v1241 = vsel %vm1135, %v1085, %v1191
          %v1242 = vsel %vm1136, %v1086, %v1192
          %v1243 = vsel %vm1137, %v1087, %v1193
          %v1244 = vsel %vm1138, %v1088, %v1194
          %v1245 = vsel %vm1139, %v1089, %v1195
          %v1246 = vsel %vm1140, %v1090, %v1196
          %v1247 = vsel %vm1141, %v1091, %v1197
          %v1248 = vsel %vm1142, %v1092, %v1198
          %v1249 = vsel %vm1143, %v1093, %v1199
          %v1250 = vsel %vm1144, %v1094, %v1200
          %v1251 = vsel %vm1145, %v1095, %v1201
          %v1252 = vsel %vm1146, %v1096, %v1202
          %v1253 = vsel %vm1147, %v1097, %v1203
          %v1254 = vsel %vm1148, %v1098, %v1204
          %v1255 = vsel %vm1149, %v1099, %v1205
          %v1256 = vsel %vm1150, %v1100, %v1206
          %v1257 = vsel %vm1151, %v1101, %v1207
          %v1258 = vsel %vm1152, %v1102, %v1208
          %v1259 = vsel %vm1153, %v1103, %v1209
          %v1260 = vsel %vm1154, %v1104, %v1210
          %v1261 = vsel %vm1155, %v1105, %v1211
          %v1262 = vsel %vm1156, %v1106, %v1212
          %v1263 = vsel %vm1157, %v1107, %v1213
          %v1264 = vsel %vm1158, %v1108, %v1214
          %v1265 = vsel %vm1159, %v1109, %v1215
          %v1266 = vsel %vm1160, %v1110, %v1216
          %v1267 = vsel %vm1161, %v1111, %v1217
          %v1268 = vpack.c.bf16 %v1219, %v1218
          %v1269 = vpack.c.bf16 %v1221, %v1220
          %v1270 = vpack.c.bf16 %v1223, %v1222
          %v1271 = vpack.c.bf16 %v1225, %v1224
          %v1272 = vpack.c.bf16 %v1227, %v1226
          %v1273 = vpack.c.bf16 %v1229, %v1228
          %v1274 = vpack.c.bf16 %v1231, %v1230
          %v1275 = vpack.c.bf16 %v1233, %v1232
          %v1276 = vpack.c.bf16 %v1235, %v1234
          %v1277 = vpack.c.bf16 %v1237, %v1236
          %v1278 = vpack.c.bf16 %v1239, %v1238
          %v1279 = vpack.c.bf16 %v1241, %v1240
          %v1280 = vpack.c.bf16 %v1243, %v1242
          %v1281 = vpack.c.bf16 %v1245, %v1244
          %v1282 = vpack.c.bf16 %v1247, %v1246
          %v1283 = vpack.c.bf16 %v1249, %v1248
          %v1284 = vpack.c.bf16 %v1251, %v1250
          %v1285 = vpack.c.bf16 %v1253, %v1252
          %v1286 = vpack.c.bf16 %v1255, %v1254
          %v1287 = vpack.c.bf16 %v1257, %v1256
          %v1288 = vpack.c.bf16 %v1259, %v1258
          %v1289 = vpack.c.bf16 %v1261, %v1260
          %v1290 = vpack.c.bf16 %v1263, %v1262
          %v1291 = vpack.c.bf16 %v1265, %v1264
          %v1292 = vpack.c.bf16 %v1267, %v1266
          %1293 = vst [vmem:[%s452] sm:$0xff] %v1268
          %1294 = vst [vmem:[%s452 + $0x8] sm:$0xff] %v1269
          %1295 = vst [vmem:[%s452 + $0x10] sm:$0xff] %v1270
          %1296 = vst [vmem:[%s452 + $0x18] sm:$0xff] %v1271
          %1297 = vst [vmem:[%s452 + $0x20] sm:$0xff] %v1272
          %1298 = vst [vmem:[%s452 + $0x28] sm:$0xff] %v1273
          %1299 = vst [vmem:[%s452 + $0x30] sm:$0xff] %v1274
          %1300 = vst [vmem:[%s452 + $0x38] sm:$0xff] %v1275
          %1301 = vst [vmem:[%s452 + $0x40] sm:$0xff] %v1276
          %1302 = vst [vmem:[%s452 + $0x48] sm:$0xff] %v1277
          %1303 = vst [vmem:[%s452 + $0x50] sm:$0xff] %v1278
          %1304 = vst [vmem:[%s452 + $0x58] sm:$0xff] %v1279
          %1305 = vst [vmem:[%s452 + $0x60] sm:$0xff] %v1280
          %1306 = vst [vmem:[%s452 + $0x68] sm:$0xff] %v1281
          %1307 = vst [vmem:[%s452 + $0x70] sm:$0xff] %v1282
          %1308 = vst [vmem:[%s452 + $0x78] sm:$0xff] %v1283
          %1309 = vst [vmem:[%s452 + $0x80] sm:$0xff] %v1284
          %1310 = vst [vmem:[%s452 + $0x88] sm:$0xff] %v1285
          %1311 = vst [vmem:[%s452 + $0x90] sm:$0xff] %v1286
          %1312 = vst [vmem:[%s452 + $0x98] sm:$0xff] %v1287
          %1313 = vst [vmem:[%s452 + $0xa0] sm:$0xff] %v1288
          %1314 = vst [vmem:[%s452 + $0xa8] sm:$0xff] %v1289
          %1315 = vst [vmem:[%s452 + $0xb0] sm:$0xff] %v1290
          %1316 = vst [vmem:[%s452 + $0xb8] sm:$0xff] %v1291
          %1317 = vst [vmem:[%s452 + $0xc0] sm:$0xff] %v1292
        $region85: #{generator_forward.16} parent=72 // pred_fallthru
          _
        %s1318 = smul.u32 25, %s20
        %s1319 = smul.u32 2, %s21
        %p1320 = scmp.lt.s32.totalorder %s1318, 24
        %s1321 = scalar_select %p1320, %s1318, 24
        %p1322 = scmp.lt.s32.totalorder %s1319, 1
        %s1323 = scalar_select %p1322, %s1319, 1
        %s1324 = smul.addr %s1321, 2
        %s1325 = sadd.s32 %s1323, %s1324
        %s1326 = smul.addr %s1325, 4
        %s1327 = scalar_lea.vmem %s4, %s1326
        // Predicated region
        $region86: #{generator_forward.16} parent=72 // pred_check
          %p1328 = pneg %p162
        $region87: #{generator_forward.16} parent=72 // pred_check_branch
          %1330 = sbr.rel (%p1328) target = $region89
        $region88: #{generator_forward.16} parent=72 // pred_region
          %s1331 = smul.u32 25, %s20
          %s1332 = smul.u32 2, %s21
        $region89: #{generator_forward.16} parent=72 // pred_fallthru
          _
        // Predicated region
        $region90: #{generator_forward.16} parent=72 // pred_check
          %p1333 = pneg %p162
        $region91: #{generator_forward.16} parent=72 // pred_check_branch
          %1335 = sbr.rel (%p1333) target = $region93
        $region92: #{generator_forward.16} parent=72 // pred_region
          %s1336 = smul.u32 25, %s20
          %s1337 = smul.u32 2, %s21
          %p1338 = scmp.lt.s32.totalorder %s1336, 24
          %s1339 = scalar_select %p1338, %s1336, 24
          %p1340 = scmp.lt.s32.totalorder %s1337, 1
          %s1341 = scalar_select %p1340, %s1337, 1
          %s1342 = smul.addr %s1339, 2
          %s1343 = sadd.s32 %s1341, %s1342
          %s1344 = smul.addr %s1343, 4
          %s1345 = scalar_lea.vmem %s4, %s1344
        $region93: #{generator_forward.16} parent=72 // pred_fallthru
          _
      $region73: #{generator_forward.16} parent=5 // pred_fallthru
        _
      %p1346 = scmp.le.s32.totalorder 2, %s10
      // Predicated region
      $region94: #{generator_forward.16} parent=5 // pred_check
        %p1347 = pneg %p1346
      $region95: #{generator_forward.16} parent=5 // pred_check_branch
        %1349 = sbr.rel (%p1347) target = $region97
      $region96: #{generator_forward.16} parent=5 // pred_region
        %s1350 = ssub.s32 %s10, 2
      $region97: #{generator_forward.16} parent=5 // pred_fallthru
        _
    $region6: #{generator_forward.16} parent=1 // loop_footer
      %s14 = sadd.s32 1, %s10
    $region7: #{generator_forward.16} parent=1 // loop_footer_branch
      %9 = sbr.rel target = $region3
    $region8: #{generator_forward.16} parent=1 // loop_exit
      _

// kernel: generator_forward.17
$region0: #{generator_forward.17}
  #allocation0 [shape = 'u32[]', space=smem, size = 0x4, offset = 0x4, fixed_abs, tag = 'smem constant byte address 0x4 - core index']
  #allocation1 [shape = 'u32[72,128]{1,0:T(1,128)}', space=vmem, size = 0x9000, scoped, tag = 'internal scratch']
  #allocation2 [shape = 'f32[8,256]{1,0:T(8,128)}', space=vmem, size = 0x2000, scoped, tag = 'scratch operand']
  %s0 = inlined_call_operand.vmem [shape: bf16[8,2304], index: 0, kind: input, shape index: {}]
  %s1 = inlined_call_operand.vmem [shape: bf16[2304,256], index: 1, kind: input, shape index: {}]
  %s2 = inlined_call_operand.vmem [shape: f32[1,256], index: 2, kind: input, shape index: {}]
  %s3 = inlined_call_operand.vmem [shape: f32[1,256], index: 3, kind: input, shape index: {}]
  %s4 = inlined_call_operand.vmem [shape: bf16[8,256], index: 4, kind: output, shape index: {}]
  %s5 = sld [smem:[#allocation0]]
  $region57: #{generator_forward.17} parent=0
    _
  %s7 = ssub.s32 1, %s5
  %s8 = scalar_select 0, %s7, %s5
  loop: start=0, step=1, limit=8
  $region2: #{generator_forward.17} parent=0 // loop_pre_header
    _
  $region3: #{generator_forward.17} parent=0 // loop_header
    %s10 = sphi 0, %s14
    %p11 = scmp.ge.s32.totalorder %s10, 8
    %s17 = sphi 0, %s36
    %s18 = sphi 0, %s32
    %s19 = sphi 0, %s28
    %s20 = sphi 0, %s17
    %s21 = sphi 0, %s18
    %s22 = sphi 0, %s19
    %s23 = sphi 0, %s20
    %s24 = sphi 0, %s21
    %s25 = sphi 0, %s22
    %s41 = sphi 0, %s43
    %s44 = sphi 0, %s41
    %s45 = sphi 0, %s44
    %s61 = sphi 0, %s45
    %s69 = sphi 0, %s71
    %s72 = sphi 0, %s69
    %s73 = sphi 0, %s72
    %s89 = sphi 0, %s73
    %s95 = sphi 0, %s97
    %s98 = sphi 0, %s95
    %s99 = sphi 0, %s98
    %s115 = sphi 0, %s99
    %s121 = sphi 0, %s123
    %s124 = sphi 0, %s121
    %s125 = sphi 0, %s124
    %s141 = sphi 0, %s125
    %s149 = sphi 0, %s151
    %s152 = sphi 0, %s149
    %s153 = sphi 0, %s152
    %s169 = sphi 0, %s153
  $region4: #{generator_forward.17} parent=0 // loop_header_branch
    %13 = sbr.rel (%p11) target = $region8
  $region5: #{generator_forward.17} parent=0 // loop_body
    %s15 = ssub.s32 %s10, 1
    %s16 = ssub.s32 %s10, 2
    %s26 = sadd.s32 1, %s19
    %p27 = scmp.ge.s32.totalorder %s26, 6
    %s28 = scalar_select %p27, 0, %s26
    %s29 = sadd.s32 1, %s18
    %s30 = scalar_select %p27, %s29, %s18
    %p31 = scmp.ge.s32.totalorder %s30, 1
    %s32 = scalar_select %p31, 0, %s30
    %s33 = sadd.s32 1, %s17
    %s34 = scalar_select %p31, %s33, %s17
    %p35 = scmp.ge.s32.totalorder %s34, 1
    %s36 = scalar_select %p35, 0, %s34
    %s37 = ssub.s32 %s17, %s36
    %s38 = ssub.s32 %s19, %s28
    %s39 = sor.u32 %s37, %s38
    %p40 = scmp.eq.s32.totalorder %s39, 0
    %s42 = sadd.s32 %s41, 1
    %s43 = scalar_select %p40, %s41, %s42
    %p46 = pneg %p40
    %p47 = scmp.eq.s32.totalorder %s10, 5
    %p48 = por %p46, %p47
    %p49 = scmp.ne.s32.totalorder %s41, %s44
    %p50 = scmp.eq.s32.totalorder %s10, 0
    %p51 = por %p49, %p50
    %p52 = scmp.ne.s32.totalorder %s41, %s44
    %p53 = scmp.eq.s32.totalorder %s15, 5
    %p54 = por %p52, %p53
    %p55 = scmp.ne.s32.totalorder %s44, %s45
    %p56 = scmp.eq.s32.totalorder %s15, 0
    %p57 = por %p55, %p56
    %p58 = scmp.ne.s32.totalorder %s44, %s45
    %p59 = scmp.eq.s32.totalorder %s16, 5
    %p60 = por %p58, %p59
    %p62 = scmp.ne.s32.totalorder %s45, %s61
    %p63 = scmp.eq.s32.totalorder %s16, 0
    %p64 = por %p62, %p63
    %s65 = ssub.s32 %s19, %s28
    %s66 = ssub.s32 %s18, %s32
    %s67 = sor.u32 %s65, %s66
    %p68 = scmp.eq.s32.totalorder %s67, 0
    %s70 = sadd.s32 %s69, 1
    %s71 = scalar_select %p68, %s69, %s70
    %p74 = pneg %p68
    %p75 = scmp.eq.s32.totalorder %s10, 5
    %p76 = por %p74, %p75
    %p77 = scmp.ne.s32.totalorder %s69, %s72
    %p78 = scmp.eq.s32.totalorder %s10, 0
    %p79 = por %p77, %p78
    %p80 = scmp.ne.s32.totalorder %s69, %s72
    %p81 = scmp.eq.s32.totalorder %s15, 5
    %p82 = por %p80, %p81
    %p83 = scmp.ne.s32.totalorder %s72, %s73
    %p84 = scmp.eq.s32.totalorder %s15, 0
    %p85 = por %p83, %p84
    %p86 = scmp.ne.s32.totalorder %s72, %s73
    %p87 = scmp.eq.s32.totalorder %s16, 5
    %p88 = por %p86, %p87
    %p90 = scmp.ne.s32.totalorder %s73, %s89
    %p91 = scmp.eq.s32.totalorder %s16, 0
    %p92 = por %p90, %p91
    %s93 = ssub.s32 %s18, %s32
    %p94 = scmp.eq.s32.totalorder %s93, 0
    %s96 = sadd.s32 %s95, 1
    %s97 = scalar_select %p94, %s95, %s96
    %p100 = pneg %p94
    %p101 = scmp.eq.s32.totalorder %s10, 5
    %p102 = por %p100, %p101
    %p103 = scmp.ne.s32.totalorder %s95, %s98
    %p104 = scmp.eq.s32.totalorder %s10, 0
    %p105 = por %p103, %p104
    %p106 = scmp.ne.s32.totalorder %s95, %s98
    %p107 = scmp.eq.s32.totalorder %s15, 5
    %p108 = por %p106, %p107
    %p109 = scmp.ne.s32.totalorder %s98, %s99
    %p110 = scmp.eq.s32.totalorder %s15, 0
    %p111 = por %p109, %p110
    %p112 = scmp.ne.s32.totalorder %s98, %s99
    %p113 = scmp.eq.s32.totalorder %s16, 5
    %p114 = por %p112, %p113
    %p116 = scmp.ne.s32.totalorder %s99, %s115
    %p117 = scmp.eq.s32.totalorder %s16, 0
    %p118 = por %p116, %p117
    %s119 = ssub.s32 %s18, %s32
    %p120 = scmp.eq.s32.totalorder %s119, 0
    %s122 = sadd.s32 %s121, 1
    %s123 = scalar_select %p120, %s121, %s122
    %p126 = pneg %p120
    %p127 = scmp.eq.s32.totalorder %s10, 5
    %p128 = por %p126, %p127
    %p129 = scmp.ne.s32.totalorder %s121, %s124
    %p130 = scmp.eq.s32.totalorder %s10, 0
    %p131 = por %p129, %p130
    %p132 = scmp.ne.s32.totalorder %s121, %s124
    %p133 = scmp.eq.s32.totalorder %s15, 5
    %p134 = por %p132, %p133
    %p135 = scmp.ne.s32.totalorder %s124, %s125
    %p136 = scmp.eq.s32.totalorder %s15, 0
    %p137 = por %p135, %p136
    %p138 = scmp.ne.s32.totalorder %s124, %s125
    %p139 = scmp.eq.s32.totalorder %s16, 5
    %p140 = por %p138, %p139
    %p142 = scmp.ne.s32.totalorder %s125, %s141
    %p143 = scmp.eq.s32.totalorder %s16, 0
    %p144 = por %p142, %p143
    %s145 = ssub.s32 %s17, %s36
    %s146 = ssub.s32 %s18, %s32
    %s147 = sor.u32 %s145, %s146
    %p148 = scmp.eq.s32.totalorder %s147, 0
    %s150 = sadd.s32 %s149, 1
    %s151 = scalar_select %p148, %s149, %s150
    %p154 = pneg %p148
    %p155 = scmp.eq.s32.totalorder %s10, 5
    %p156 = por %p154, %p155
    %p157 = scmp.ne.s32.totalorder %s149, %s152
    %p158 = scmp.eq.s32.totalorder %s10, 0
    %p159 = por %p157, %p158
    %p160 = scmp.ne.s32.totalorder %s149, %s152
    %p161 = scmp.eq.s32.totalorder %s15, 5
    %p162 = por %p160, %p161
    %p163 = scmp.ne.s32.totalorder %s152, %s153
    %p164 = scmp.eq.s32.totalorder %s15, 0
    %p165 = por %p163, %p164
    %p166 = scmp.ne.s32.totalorder %s152, %s153
    %p167 = scmp.eq.s32.totalorder %s16, 5
    %p168 = por %p166, %p167
    %p170 = scmp.ne.s32.totalorder %s153, %s169
    %p171 = scmp.eq.s32.totalorder %s16, 0
    %p172 = por %p170, %p171
    %p173 = scmp.le.s32.totalorder 1, %s10
    %p174 = scmp.lt.s32.totalorder %s10, 7
    %p175 = pnand %p173, %p174
    %p176 = pneg %p175
    // Predicated region
    $region9: #{generator_forward.17} parent=5 // pred_check
      _
    $region10: #{generator_forward.17} parent=5 // pred_check_branch
      %178 = sbr.rel (%p175) target = $region12
    $region11: #{generator_forward.17} parent=5 // pred_region
      %s179 = ssub.s32 %s10, 1
      // Predicated region
      $region13: #{generator_forward.17} parent=11 // pred_check
        %p180 = pneg %p111
      $region14: #{generator_forward.17} parent=11 // pred_check_branch
        %182 = sbr.rel (%p180) target = $region16
      $region15: #{generator_forward.17} parent=11 // pred_region
        %s183 = smul.u32 2, %s21
        %p184 = scmp.lt.s32.totalorder %s183, 1
        %s185 = scalar_select %p184, %s183, 1
        %s186 = scalar_lea.vmem %s2, %s185
        %s187 = smul.u32 2, %s21
      $region16: #{generator_forward.17} parent=11 // pred_fallthru
        _
      // Predicated region
      $region17: #{generator_forward.17} parent=11 // pred_check
        %p188 = pneg %p137
      $region18: #{generator_forward.17} parent=11 // pred_check_branch
        %190 = sbr.rel (%p188) target = $region20
      $region19: #{generator_forward.17} parent=11 // pred_region
        %s191 = smul.u32 2, %s21
        %p192 = scmp.lt.s32.totalorder %s191, 1
        %s193 = scalar_select %p192, %s191, 1
        %s194 = scalar_lea.vmem %s3, %s193
        %s195 = smul.u32 2, %s21
      $region20: #{generator_forward.17} parent=11 // pred_fallthru
        _
    $region12: #{generator_forward.17} parent=5 // pred_fallthru
      _
    %p196 = scmp.lt.s32.totalorder %s10, 6
    // Predicated region
    $region21: #{generator_forward.17} parent=5 // pred_check
      %p197 = pneg %p196
    $region22: #{generator_forward.17} parent=5 // pred_check_branch
      %199 = sbr.rel (%p197) target = $region24
    $region23: #{generator_forward.17} parent=5 // pred_region
      // Predicated region
      $region25: #{generator_forward.17} parent=23 // pred_check
        %p200 = pneg %p51
      $region26: #{generator_forward.17} parent=23 // pred_check_branch
        %202 = sbr.rel (%p200) target = $region28
      $region27: #{generator_forward.17} parent=23 // pred_region
        %s203 = smul.u32 3, %s19
        %p204 = scmp.lt.s32.totalorder %s17, 0
        %s205 = scalar_select %p204, %s17, 0
        %p206 = scmp.lt.s32.totalorder %s203, 17
        %s207 = scalar_select %p206, %s203, 17
        %s208 = smul.addr %s205, 18
        %s209 = sadd.s32 %s207, %s208
        %s210 = smul.addr %s209, 4
        %s211 = scalar_lea.vmem %s0, %s210
        %s212 = smul.u32 3, %s19
      $region28: #{generator_forward.17} parent=23 // pred_fallthru
        _
      // Predicated region
      $region29: #{generator_forward.17} parent=23 // pred_check
        %p213 = pneg %p79
      $region30: #{generator_forward.17} parent=23 // pred_check_branch
        %215 = sbr.rel (%p213) target = $region32
      $region31: #{generator_forward.17} parent=23 // pred_region
        %s216 = smul.u32 48, %s19
        %s217 = smul.u32 2, %s18
        %p218 = scmp.lt.s32.totalorder %s216, 287
        %s219 = scalar_select %p218, %s216, 287
        %p220 = scmp.lt.s32.totalorder %s217, 1
        %s221 = scalar_select %p220, %s217, 1
        %s222 = smul.addr %s219, 2
        %s223 = sadd.s32 %s221, %s222
        %s224 = smul.addr %s223, 4
        %s225 = scalar_lea.vmem %s1, %s224
        %s226 = smul.u32 48, %s19
        %s227 = smul.u32 2, %s18
      $region32: #{generator_forward.17} parent=23 // pred_fallthru
        _
    $region24: #{generator_forward.17} parent=5 // pred_fallthru
      _
    %p228 = scmp.le.s32.totalorder 1, %s10
    %p229 = scmp.lt.s32.totalorder %s10, 7
    %p230 = pnand %p228, %p229
    %p231 = pneg %p230
    // Predicated region
    $region33: #{generator_forward.17} parent=5 // pred_check
      _
    $region34: #{generator_forward.17} parent=5 // pred_check_branch
      %233 = sbr.rel (%p230) target = $region36
    $region35: #{generator_forward.17} parent=5 // pred_region
      %s234 = ssub.s32 %s10, 1
      %s235 = smul.u32 3, %s22
      %p236 = scmp.lt.s32.totalorder %s20, 0
      %s237 = scalar_select %p236, %s20, 0
      %p238 = scmp.lt.s32.totalorder %s235, 17
      %s239 = scalar_select %p238, %s235, 17
      %s240 = smul.addr %s237, 18
      %s241 = sadd.s32 %s239, %s240
      %s242 = smul.addr %s241, 4
      %s243 = scalar_lea.vmem %s0, %s242
      %p244 = pneg %p57
      %p245 = pneg %p54
      %s246 = smul.u32 48, %s22
      %s247 = smul.u32 2, %s21
      %p248 = scmp.lt.s32.totalorder %s246, 287
      %s249 = scalar_select %p248, %s246, 287
      %p250 = scmp.lt.s32.totalorder %s247, 1
      %s251 = scalar_select %p250, %s247, 1
      %s252 = smul.addr %s249, 2
      %s253 = sadd.s32 %s251, %s252
      %s254 = smul.addr %s253, 4
      %s255 = scalar_lea.vmem %s1, %s254
      %p256 = pneg %p85
      %p257 = pneg %p82
      %s258 = smul.u32 2, %s21
      %p259 = scmp.lt.s32.totalorder %s258, 1
      %s260 = scalar_select %p259, %s258, 1
      %s261 = scalar_lea.vmem %s2, %s260
      %p262 = pneg %p111
      %p263 = pneg %p108
      %s264 = smul.u32 2, %s21
      %p265 = scmp.lt.s32.totalorder %s264, 1
      %s266 = scalar_select %p265, %s264, 1
      %s267 = scalar_lea.vmem %s3, %s266
      %p268 = pneg %p137
      %p269 = pneg %p134
      %p270 = pneg %p165
      %p271 = pneg %p162
      %s272 = smul.u32 2, %s21
      %p273 = scmp.lt.s32.totalorder %s20, 0
      %s274 = scalar_select %p273, %s20, 0
      %p275 = scmp.lt.s32.totalorder %s272, 1
      %s276 = scalar_select %p275, %s272, 1
      %s277 = smul.addr %s274, 2
      %s278 = sadd.s32 %s276, %s277
      %s279 = smul.addr %s278, 4
      %s280 = scalar_lea.vmem %s4, %s279
      %s281 = smul.u32 3, %s22
      %p282 = scmp.lt.s32.totalorder %s20, 0
      %s283 = scalar_select %p282, %s20, 0
      %p284 = scmp.lt.s32.totalorder %s281, 17
      %s285 = scalar_select %p284, %s281, 17
      %s286 = smul.addr %s283, 18
      %s287 = sadd.s32 %s285, %s286
      %s288 = smul.addr %s287, 4
      %s289 = scalar_lea.vmem %s0, %s288
      %s290 = smul.u32 3, %s22
      %s291 = smul.u32 48, %s22
      %s292 = smul.u32 2, %s21
      %p293 = scmp.lt.s32.totalorder %s291, 287
      %s294 = scalar_select %p293, %s291, 287
      %p295 = scmp.lt.s32.totalorder %s292, 1
      %s296 = scalar_select %p295, %s292, 1
      %s297 = smul.addr %s294, 2
      %s298 = sadd.s32 %s296, %s297
      %s299 = smul.addr %s298, 4
      %s300 = scalar_lea.vmem %s1, %s299
      %s301 = smul.u32 48, %s22
      %s302 = smul.u32 2, %s21
      %s303 = smul.u32 2, %s21
      %p304 = scmp.lt.s32.totalorder %s303, 1
      %s305 = scalar_select %p304, %s303, 1
      %s306 = scalar_lea.vmem %s2, %s305
      %s307 = smul.u32 2, %s21
      %s308 = smul.u32 2, %s21
      %p309 = scmp.lt.s32.totalorder %s308, 1
      %s310 = scalar_select %p309, %s308, 1
      %s311 = scalar_lea.vmem %s3, %s310
      %s312 = smul.u32 2, %s21
      %s313 = smul.u32 2, %s21
      %p314 = scmp.lt.s32.totalorder %s20, 0
      %s315 = scalar_select %p314, %s20, 0
      %p316 = scmp.lt.s32.totalorder %s313, 1
      %s317 = scalar_select %p316, %s313, 1
      %s318 = smul.addr %s315, 2
      %s319 = sadd.s32 %s317, %s318
      %s320 = smul.addr %s319, 4
      %s321 = scalar_lea.vmem %s4, %s320
      %s322 = smul.u32 2, %s21
      %p323 = scmp.eq.s32.totalorder %s22, 0
      // Predicated region
      $region37: #{generator_forward.17} parent=35 // pred_check
        %p324 = pneg %p323
      $region38: #{generator_forward.17} parent=35 // pred_check_branch
        %326 = sbr.rel (%p324) target = $region40
      $region39: #{generator_forward.17} parent=35 // pred_region
        %327 = vst [vmem:[#allocation2] sm:$0xff] 0.0
        %328 = vst [vmem:[#allocation2 + $0x8] sm:$0xff] 0.0
      $region40: #{generator_forward.17} parent=35 // pred_fallthru
        _
      %v329 = vld [vmem:[#allocation2] sm:$0xff]
      %v330 = vld [vmem:[#allocation2 + $0x8] sm:$0xff]
      %v331 = vld [vmem:[%s289] sm:$0xff]
      %v332 = vld [vmem:[%s289 + $0x8] sm:$0xf]
      %v333 = vld [vmem:[%s300] sm:$0xff]
      %v334 = vld [vmem:[%s300 + $0x8] sm:$0xff]
      %v335 = vld [vmem:[%s300 + $0x10] sm:$0xff]
      %v336 = vld [vmem:[%s300 + $0x18] sm:$0xff]
      %v337 = vld [vmem:[%s300 + $0x20] sm:$0xff]
      %v338 = vld [vmem:[%s300 + $0x28] sm:$0xff]
      %v339 = vld [vmem:[%s300 + $0x30] sm:$0xff]
      %v340 = vld [vmem:[%s300 + $0x38] sm:$0xff]
      %v341 = vld [vmem:[%s300 + $0x40] sm:$0xff]
      %v342 = vld [vmem:[%s300 + $0x48] sm:$0xff]
      %v343 = vld [vmem:[%s300 + $0x50] sm:$0xff]
      %v344 = vld [vmem:[%s300 + $0x58] sm:$0xff]
      %v345 = vld [vmem:[%s300 + $0x60] sm:$0xff]
      %v346 = vld [vmem:[%s300 + $0x68] sm:$0xff]
      %v347 = vld [vmem:[%s300 + $0x70] sm:$0xff]
      %v348 = vld [vmem:[%s300 + $0x78] sm:$0xff]
      %v349 = vld [vmem:[%s300 + $0x80] sm:$0xff]
      %v350 = vld [vmem:[%s300 + $0x88] sm:$0xff]
      %v351 = vld [vmem:[%s300 + $0x90] sm:$0xff]
      %v352 = vld [vmem:[%s300 + $0x98] sm:$0xff]
      %v353 = vld [vmem:[%s300 + $0xa0] sm:$0xff]
      %v354 = vld [vmem:[%s300 + $0xa8] sm:$0xff]
      %v355 = vld [vmem:[%s300 + $0xb0] sm:$0xff]
      %v356 = vld [vmem:[%s300 + $0xb8] sm:$0xff]
      %v357 = vld [vmem:[%s300 + $0xc0] sm:$0xff]
      %v358 = vld [vmem:[%s300 + $0xc8] sm:$0xff]
      %v359 = vld [vmem:[%s300 + $0xd0] sm:$0xff]
      %v360 = vld [vmem:[%s300 + $0xd8] sm:$0xff]
      %v361 = vld [vmem:[%s300 + $0xe0] sm:$0xff]
      %v362 = vld [vmem:[%s300 + $0xe8] sm:$0xff]
      %v363 = vld [vmem:[%s300 + $0xf0] sm:$0xff]
      %v364 = vld [vmem:[%s300 + $0xf8] sm:$0xff]
      %v365 = vld [vmem:[%s300 + $0x100] sm:$0xff]
      %v366 = vld [vmem:[%s300 + $0x108] sm:$0xff]
      %v367 = vld [vmem:[%s300 + $0x110] sm:$0xff]
      %v368 = vld [vmem:[%s300 + $0x118] sm:$0xff]
      %v369 = vld [vmem:[%s300 + $0x120] sm:$0xff]
      %v370 = vld [vmem:[%s300 + $0x128] sm:$0xff]
      %v371 = vld [vmem:[%s300 + $0x130] sm:$0xff]
      %v372 = vld [vmem:[%s300 + $0x138] sm:$0xff]
      %v373 = vld [vmem:[%s300 + $0x140] sm:$0xff]
      %v374 = vld [vmem:[%s300 + $0x148] sm:$0xff]
      %v375 = vld [vmem:[%s300 + $0x150] sm:$0xff]
      %v376 = vld [vmem:[%s300 + $0x158] sm:$0xff]
      %v377 = vld [vmem:[%s300 + $0x160] sm:$0xff]
      %v378 = vld [vmem:[%s300 + $0x168] sm:$0xff]
      %v379 = vld [vmem:[%s300 + $0x170] sm:$0xff]
      %v380 = vld [vmem:[%s300 + $0x178] sm:$0xff]
      %v383 = vunpack.c.l.b16 %v331
      %v384 = vunpack.c.h.b16 %v331
      %v385 = vunpack.c.l.b16 %v332
      %v386 = vpack.c.b16 %v383, %v383
      %v387 = vpack.c.b16 %v384, %v384
      %v388 = vpack.c.b16 %v385, %v385
      %v440 = vunpack.c.l.b16 %v333
      %v441 = vunpack.c.h.b16 %v333
      %v442 = vunpack.c.l.b16 %v334
      %v443 = vunpack.c.h.b16 %v334
      %v444 = vunpack.c.l.b16 %v335
      %v445 = vunpack.c.h.b16 %v335
      %v446 = vunpack.c.l.b16 %v336
      %v447 = vunpack.c.h.b16 %v336
      %v448 = vunpack.c.l.b16 %v337
      %v449 = vunpack.c.h.b16 %v337
      %v450 = vunpack.c.l.b16 %v338
      %v451 = vunpack.c.h.b16 %v338
      %v452 = vunpack.c.l.b16 %v339
      %v453 = vunpack.c.h.b16 %v339
      %v454 = vunpack.c.l.b16 %v340
      %v455 = vunpack.c.h.b16 %v340
      %v456 = vunpack.c.l.b16 %v341
      %v457 = vunpack.c.h.b16 %v341
      %v458 = vunpack.c.l.b16 %v342
      %v459 = vunpack.c.h.b16 %v342
      %v460 = vunpack.c.l.b16 %v343
      %v461 = vunpack.c.h.b16 %v343
      %v462 = vunpack.c.l.b16 %v344
      %v463 = vunpack.c.h.b16 %v344
      %v464 = vunpack.c.l.b16 %v345
      %v465 = vunpack.c.h.b16 %v345
      %v466 = vunpack.c.l.b16 %v346
      %v467 = vunpack.c.h.b16 %v346
      %v468 = vunpack.c.l.b16 %v347
      %v469 = vunpack.c.h.b16 %v347
      %v470 = vunpack.c.l.b16 %v348
      %v471 = vunpack.c.h.b16 %v348
      %v472 = vunpack.c.l.b16 %v349
      %v473 = vunpack.c.h.b16 %v349
      %v474 = vunpack.c.l.b16 %v350
      %v475 = vunpack.c.h.b16 %v350
      %v476 = vunpack.c.l.b16 %v351
      %v477 = vunpack.c.h.b16 %v351
      %v478 = vunpack.c.l.b16 %v352
      %v479 = vunpack.c.h.b16 %v352
      %v480 = vunpack.c.l.b16 %v353
      %v481 = vunpack.c.h.b16 %v353
      %v482 = vunpack.c.l.b16 %v354
      %v483 = vunpack.c.h.b16 %v354
      %v484 = vunpack.c.l.b16 %v355
      %v485 = vunpack.c.h.b16 %v355
      %v486 = vunpack.c.l.b16 %v356
      %v487 = vunpack.c.h.b16 %v356
      %v488 = vunpack.c.l.b16 %v357
      %v489 = vunpack.c.h.b16 %v357
      %v490 = vunpack.c.l.b16 %v358
      %v491 = vunpack.c.h.b16 %v358
      %v492 = vunpack.c.l.b16 %v359
      %v493 = vunpack.c.h.b16 %v359
      %v494 = vunpack.c.l.b16 %v360
      %v495 = vunpack.c.h.b16 %v360
      %v496 = vunpack.c.l.b16 %v361
      %v497 = vunpack.c.h.b16 %v361
      %v498 = vunpack.c.l.b16 %v362
      %v499 = vunpack.c.h.b16 %v362
      %v500 = vunpack.c.l.b16 %v363
      %v501 = vunpack.c.h.b16 %v363
      %v502 = vunpack.c.l.b16 %v364
      %v503 = vunpack.c.h.b16 %v364
      %v504 = vunpack.c.l.b16 %v365
      %v505 = vunpack.c.h.b16 %v365
      %v506 = vunpack.c.l.b16 %v366
      %v507 = vunpack.c.h.b16 %v366
      %v508 = vunpack.c.l.b16 %v367
      %v509 = vunpack.c.h.b16 %v367
      %v510 = vunpack.c.l.b16 %v368
      %v511 = vunpack.c.h.b16 %v368
      %v512 = vunpack.c.l.b16 %v369
      %v513 = vunpack.c.h.b16 %v369
      %v514 = vunpack.c.l.b16 %v370
      %v515 = vunpack.c.h.b16 %v370
      %v516 = vunpack.c.l.b16 %v371
      %v517 = vunpack.c.h.b16 %v371
      %v518 = vunpack.c.l.b16 %v372
      %v519 = vunpack.c.h.b16 %v372
      %v520 = vunpack.c.l.b16 %v373
      %v521 = vunpack.c.h.b16 %v373
      %v522 = vunpack.c.l.b16 %v374
      %v523 = vunpack.c.h.b16 %v374
      %v524 = vunpack.c.l.b16 %v375
      %v525 = vunpack.c.h.b16 %v375
      %v526 = vunpack.c.l.b16 %v376
      %v527 = vunpack.c.h.b16 %v376
      %v528 = vunpack.c.l.b16 %v377
      %v529 = vunpack.c.h.b16 %v377
      %v530 = vunpack.c.l.b16 %v378
      %v531 = vunpack.c.h.b16 %v378
      %v532 = vunpack.c.l.b16 %v379
      %v533 = vunpack.c.h.b16 %v379
      %v534 = vunpack.c.l.b16 %v380
      %v535 = vunpack.c.h.b16 %v380
      %v536 = vpack.c.b16 %v442, %v440
      %v537 = vpack.c.b16 %v443, %v441
      %v538 = vpack.c.b16 %v446, %v444
      %v539 = vpack.c.b16 %v447, %v445
      %v540 = vpack.c.b16 %v450, %v448
      %v541 = vpack.c.b16 %v451, %v449
      %v542 = vpack.c.b16 %v454, %v452
      %v543 = vpack.c.b16 %v455, %v453
      %v544 = vpack.c.b16 %v458, %v456
      %v545 = vpack.c.b16 %v459, %v457
      %v546 = vpack.c.b16 %v462, %v460
      %v547 = vpack.c.b16 %v463, %v461
      %v548 = vpack.c.b16 %v466, %v464
      %v549 = vpack.c.b16 %v467, %v465
      %v550 = vpack.c.b16 %v470, %v468
      %v551 = vpack.c.b16 %v471, %v469
      %v552 = vpack.c.b16 %v474, %v472
      %v553 = vpack.c.b16 %v475, %v473
      %v554 = vpack.c.b16 %v478, %v476
      %v555 = vpack.c.b16 %v479, %v477
      %v556 = vpack.c.b16 %v482, %v480
      %v557 = vpack.c.b16 %v483, %v481
      %v558 = vpack.c.b16 %v486, %v484
      %v559 = vpack.c.b16 %v487, %v485
      %v560 = vpack.c.b16 %v490, %v488
      %v561 = vpack.c.b16 %v491, %v489
      %v562 = vpack.c.b16 %v494, %v492
      %v563 = vpack.c.b16 %v495, %v493
      %v564 = vpack.c.b16 %v498, %v496
      %v565 = vpack.c.b16 %v499, %v497
      %v566 = vpack.c.b16 %v502, %v500
      %v567 = vpack.c.b16 %v503, %v501
      %v568 = vpack.c.b16 %v506, %v504
      %v569 = vpack.c.b16 %v507, %v505
      %v570 = vpack.c.b16 %v510, %v508
      %v571 = vpack.c.b16 %v511, %v509
      %v572 = vpack.c.b16 %v514, %v512
      %v573 = vpack.c.b16 %v515, %v513
      %v574 = vpack.c.b16 %v518, %v516
      %v575 = vpack.c.b16 %v519, %v517
      %v576 = vpack.c.b16 %v522, %v520
      %v577 = vpack.c.b16 %v523, %v521
      %v578 = vpack.c.b16 %v526, %v524
      %v579 = vpack.c.b16 %v527, %v525
      %v580 = vpack.c.b16 %v530, %v528
      %v581 = vpack.c.b16 %v531, %v529
      %v582 = vpack.c.b16 %v534, %v532
      %v583 = vpack.c.b16 %v535, %v533
      %632 = vmatpush.bf16.msra.mxu0 %v550
      %633 = vmatpush.bf16.msra.mxu0 %v548
      %634 = vmatpush.bf16.msra.mxu0 %v546
      %635 = vmatpush.bf16.msra.mxu0 %v544
      %636 = vmatpush.bf16.msra.mxu0 %v542
      %637 = vmatpush.bf16.msra.mxu0 %v540
      %638 = vmatpush.bf16.msra.mxu0 %v538
      %639 = vmatpush.bf16.msra.mxu0 %v536
      %640 = vmatmul.bf16.gmra.mxu0 %v386
      %v641 = vpop.f32.mrf.mxu0
      %v642 = vadd.f32 0.0, %v641
      %v643 = vpop.f32.mrf.mxu0
      %644 = vdwg.mxu0
      %645 = vmatpush.bf16.msra.mxu0 %v566
      %646 = vmatpush.bf16.msra.mxu0 %v564
      %647 = vmatpush.bf16.msra.mxu0 %v562
      %648 = vmatpush.bf16.msra.mxu0 %v560
      %649 = vmatpush.bf16.msra.mxu0 %v558
      %650 = vmatpush.bf16.msra.mxu0 %v556
      %651 = vmatpush.bf16.msra.mxu0 %v554
      %652 = vmatpush.bf16.msra.mxu0 %v552
      %653 = vmatmul.bf16.gmra.mxu0 %v387
      %v654 = vpop.f32.mrf.mxu0
      %v655 = vadd.f32 %v642, %v654
      %v656 = vpop.f32.mrf.mxu0
      %657 = vdwg.mxu0
      %658 = vmatpush.bf16.msra.mxu0 %v582
      %659 = vmatpush.bf16.msra.mxu0 %v580
      %660 = vmatpush.bf16.msra.mxu0 %v578
      %661 = vmatpush.bf16.msra.mxu0 %v576
      %662 = vmatpush.bf16.msra.mxu0 %v574
      %663 = vmatpush.bf16.msra.mxu0 %v572
      %664 = vmatpush.bf16.msra.mxu0 %v570
      %665 = vmatpush.bf16.msra.mxu0 %v568
      %666 = vmatmul.bf16.gmra.mxu0 %v388
      %v667 = vpop.f32.mrf.mxu0
      %v668 = vadd.f32 %v655, %v667
      %v669 = vpop.f32.mrf.mxu0
      %670 = vdwg.mxu0
      %671 = vmatpush.bf16.msra.mxu0 %v551
      %672 = vmatpush.bf16.msra.mxu0 %v549
      %673 = vmatpush.bf16.msra.mxu0 %v547
      %674 = vmatpush.bf16.msra.mxu0 %v545
      %675 = vmatpush.bf16.msra.mxu0 %v543
      %676 = vmatpush.bf16.msra.mxu0 %v541
      %677 = vmatpush.bf16.msra.mxu0 %v539
      %678 = vmatpush.bf16.msra.mxu0 %v537
      %679 = vmatmul.bf16.gmra.mxu0 %v386
      %v680 = vpop.f32.mrf.mxu0
      %v681 = vadd.f32 0.0, %v680
      %v682 = vpop.f32.mrf.mxu0
      %683 = vdwg.mxu0
      %684 = vmatpush.bf16.msra.mxu0 %v567
      %685 = vmatpush.bf16.msra.mxu0 %v565
      %686 = vmatpush.bf16.msra.mxu0 %v563
      %687 = vmatpush.bf16.msra.mxu0 %v561
      %688 = vmatpush.bf16.msra.mxu0 %v559
      %689 = vmatpush.bf16.msra.mxu0 %v557
      %690 = vmatpush.bf16.msra.mxu0 %v555
      %691 = vmatpush.bf16.msra.mxu0 %v553
      %692 = vmatmul.bf16.gmra.mxu0 %v387
      %v693 = vpop.f32.mrf.mxu0
      %v694 = vadd.f32 %v681, %v693
      %v695 = vpop.f32.mrf.mxu0
      %696 = vdwg.mxu0
      %697 = vmatpush.bf16.msra.mxu0 %v583
      %698 = vmatpush.bf16.msra.mxu0 %v581
      %699 = vmatpush.bf16.msra.mxu0 %v579
      %700 = vmatpush.bf16.msra.mxu0 %v577
      %701 = vmatpush.bf16.msra.mxu0 %v575
      %702 = vmatpush.bf16.msra.mxu0 %v573
      %703 = vmatpush.bf16.msra.mxu0 %v571
      %704 = vmatpush.bf16.msra.mxu0 %v569
      %705 = vmatmul.bf16.gmra.mxu0 %v388
      %v706 = vpop.f32.mrf.mxu0
      %v707 = vadd.f32 %v694, %v706
      %v708 = vpop.f32.mrf.mxu0
      %709 = vdwg.mxu0
      %v710 = vadd.f32 %v329, %v668
      %v711 = vadd.f32 %v330, %v707
      %712 = vst [vmem:[#allocation2] sm:$0xff] %v710
      %713 = vst [vmem:[#allocation2 + $0x8] sm:$0xff] %v711
      %p714 = scmp.eq.s32.totalorder %s22, 5
      // Predicated region
      $region41: #{generator_forward.17} parent=35 // pred_check
        %p715 = pneg %p714
      $region42: #{generator_forward.17} parent=35 // pred_check_branch
        %717 = sbr.rel (%p715) target = $region44
      $region43: #{generator_forward.17} parent=35 // pred_region
        %v718 = vld [vmem:[#allocation2] sm:$0xff]
        %v719 = vld [vmem:[#allocation2 + $0x8] sm:$0xff]
        %v720 = vld [vmem:[%s306] sm:$0x3]
        %v722 = vperm.slane %v720, 0
        %v723 = vperm.slane %v720, 1
        %v726 = vadd.f32 %v718, %v722
        %v727 = vadd.f32 %v719, %v723
        %vm728 = vcmp.ge.f32.partialorder %v726, 0.0
        %vm729 = vcmp.ge.f32.partialorder %v727, 0.0
        %v730 = vld [vmem:[%s311] sm:$0x3]
        %v732 = vperm.slane %v730, 0
        %v733 = vperm.slane %v730, 1
        %v736 = vmul.f32 %v726, %v732
        %v737 = vmul.f32 %v727, %v733
        %v738 = vsel %vm728, %v726, %v736
        %v739 = vsel %vm729, %v727, %v737
        %v740 = vpack.c.bf16 %v739, %v738
        %741 = vst [vmem:[%s321] sm:$0xff] %v740
      $region44: #{generator_forward.17} parent=35 // pred_fallthru
        _
      %s742 = smul.u32 2, %s21
      %p743 = scmp.lt.s32.totalorder %s20, 0
      %s744 = scalar_select %p743, %s20, 0
      %p745 = scmp.lt.s32.totalorder %s742, 1
      %s746 = scalar_select %p745, %s742, 1
      %s747 = smul.addr %s744, 2
      %s748 = sadd.s32 %s746, %s747
      %s749 = smul.addr %s748, 4
      %s750 = scalar_lea.vmem %s4, %s749
      // Predicated region
      $region45: #{generator_forward.17} parent=35 // pred_check
        %p751 = pneg %p162
      $region46: #{generator_forward.17} parent=35 // pred_check_branch
        %753 = sbr.rel (%p751) target = $region48
      $region47: #{generator_forward.17} parent=35 // pred_region
        %s754 = smul.u32 2, %s21
      $region48: #{generator_forward.17} parent=35 // pred_fallthru
        _
      // Predicated region
      $region49: #{generator_forward.17} parent=35 // pred_check
        %p755 = pneg %p162
      $region50: #{generator_forward.17} parent=35 // pred_check_branch
        %757 = sbr.rel (%p755) target = $region52
      $region51: #{generator_forward.17} parent=35 // pred_region
        %s758 = smul.u32 2, %s21
        %p759 = scmp.lt.s32.totalorder %s20, 0
        %s760 = scalar_select %p759, %s20, 0
        %p761 = scmp.lt.s32.totalorder %s758, 1
        %s762 = scalar_select %p761, %s758, 1
        %s763 = smul.addr %s760, 2
        %s764 = sadd.s32 %s762, %s763
        %s765 = smul.addr %s764, 4
        %s766 = scalar_lea.vmem %s4, %s765
      $region52: #{generator_forward.17} parent=35 // pred_fallthru
        _
    $region36: #{generator_forward.17} parent=5 // pred_fallthru
      _
    %p767 = scmp.le.s32.totalorder 2, %s10
    // Predicated region
    $region53: #{generator_forward.17} parent=5 // pred_check
      %p768 = pneg %p767
    $region54: #{generator_forward.17} parent=5 // pred_check_branch
      %770 = sbr.rel (%p768) target = $region56
    $region55: #{generator_forward.17} parent=5 // pred_region
      %s771 = ssub.s32 %s10, 2
    $region56: #{generator_forward.17} parent=5 // pred_fallthru
      _
  $region6: #{generator_forward.17} parent=0 // loop_footer
    %s14 = sadd.s32 1, %s10
  $region7: #{generator_forward.17} parent=0 // loop_footer_branch
    %9 = sbr.rel target = $region3
  $region8: #{generator_forward.17} parent=0 // loop_exit
    _

</llo_original>
